<compile_context>
chip_gen: v6e
topology: v6e:2x2x1
jax: 0.10.0
libtpu: 0.0.40
codegen_flags: <defaults>
</compile_context>

<pallas_src>
import functools

import jax
import jax.numpy as jnp
from jax.experimental import pallas as pl
from jax.experimental.pallas import tpu as pltpu


# GEMM operand dtype.  The review suggests bfloat16 operands (f32 accumulation)
# to halve operand bytes; the net is launch/overhead bound (~10 MFLOP total),
# so f32 is kept to preserve the PyTorch module's numerics.  Flip to
# jnp.bfloat16 if looser numerics are acceptable.
COMPUTE_DTYPE = jnp.float32


# ----------------------------------------------------------------------------
# Small helpers
# ----------------------------------------------------------------------------
def _round_up(x, m):
    return ((x + m - 1) // m) * m


def _pad_m(m):
    """Lane-dim padding: multiple of 128; multiple of 256 for larger layers so
    the grid can be split into two 'parallel' steps (keeps v7x's 2nd TC busy)."""
    mp = _round_up(m, 128)
    if mp >= 512:
        mp = _round_up(m, 256)
    return mp


def _pad2(x, rows, cols):
    return jnp.pad(x, ((0, rows - x.shape[0]), (0, cols - x.shape[1])))


# ----------------------------------------------------------------------------
# Pallas kernels
# ----------------------------------------------------------------------------
def _apply_act(x, act):
    if act == "relu":
        return jnp.maximum(x, 0.0)
    if act == "sigmoid":
        # Numerically symmetric sigmoid (no overflow for large |x|).  Exact
        # divide kept; pl.reciprocal(approx=True) would ride the EUP on v5e
        # but slightly perturbs numerics.
        e = jnp.exp(-jnp.abs(x))
        r = 1.0 / (1.0 + e)
        return jnp.where(x >= 0, r, e * r)
    return x


def _gemm_bias_act_kernel(w_ref, p_ref, b_ref, o_ref, *, act):
    # out tile (R, mt) = act( W (R, K) @ P (K, mt) + b (R, 1) )
    acc = jnp.dot(w_ref[...], p_ref[...], preferred_element_type=jnp.float32)
    acc = acc + b_ref[...]
    o_ref[...] = _apply_act(acc, act).astype(o_ref.dtype)


def _enc4_dec1_kernel(x_ref, w4_ref, b4_ref, wd1_ref, bd1_ref, o_ref):
    # Fused: h = x @ W4 + b4      (encoder conv4: 5x5 valid -> 1x1, no act)
    #        o = relu(h @ Wd1[:, tile] + bd1[tile])   (decoder convT1 on 1x1)
    h = jnp.dot(x_ref[...], w4_ref[...], preferred_element_type=jnp.float32)
    h = h + b4_ref[...]
    acc = jnp.dot(h.astype(wd1_ref.dtype), wd1_ref[...],
                  preferred_element_type=jnp.float32)
    acc = acc + bd1_ref[...]
    o_ref[...] = jnp.maximum(acc, 0.0).astype(o_ref.dtype)


def _gemm_bias_act(w_mat, patches, b_col, act):
    """act( w_mat (R, Kp) @ patches (Kp, Mp) + b_col (R, 1) ) -> (R, Mp) f32.

    Mp is a multiple of 128 and is the lane dim of the output (dense stores).
    """
    R, Kp = w_mat.shape
    Kp2, Mp = patches.shape
    assert Kp == Kp2 and Mp % 128 == 0
    n_tiles = 2 if Mp >= 512 else 1
    mt = Mp // n_tiles
    assert mt % 128 == 0
    return pl.pallas_call(
        functools.partial(_gemm_bias_act_kernel, act=act),
        out_shape=jax.ShapeDtypeStruct((R, Mp), jnp.float32),
        grid=(n_tiles,),
        in_specs=[
            pl.BlockSpec((R, Kp), lambda j: (0, 0)),    # weights (resident)
            pl.BlockSpec((Kp, mt), lambda j: (0, j)),   # patch-column tile
            pl.BlockSpec((R, 1), lambda j: (0, 0)),     # per-row bias
        ],
        out_specs=pl.BlockSpec((R, mt), lambda j: (0, j)),
        compiler_params=pltpu.CompilerParams(
            dimension_semantics=("parallel",)),
    )(w_mat, patches, b_col)


# ----------------------------------------------------------------------------
# Layer wrappers (XLA glue is only tiny slicing / stacking / reshapes)
# ----------------------------------------------------------------------------
def conv2d_cnhw(a, w, b, stride, padding, act):
    """Conv2d on a CNHW activation. a: (Cin, N, H, W), w: (Cout, Cin, KH, KW)."""
    Cin, N, H, W = a.shape
    Cout, Cin2, KH, KW = w.shape
    assert Cin == Cin2
    OH = (H + 2 * padding - KH) // stride + 1
    OW = (W + 2 * padding - KW) // stride + 1
    ap = jnp.pad(a, ((0, 0), (0, 0), (padding, padding), (padding, padding)))

    # im2col glue: rows ordered (tap, cin), cols ordered (n, oh, ow).
    taps = [ap[:, :, kh:kh + stride * OH:stride, kw:kw + stride * OW:stride]
            for kh in range(KH) for kw in range(KW)]
    patches = jnp.stack(taps, axis=0).reshape(KH * KW * Cin, N * OH * OW)

    K = KH * KW * Cin
    M = N * OH * OW
    Kp, Mp = _round_up(K, 128), _pad_m(M)
    patches = _pad2(patches, Kp, Mp).astype(COMPUTE_DTYPE)
    w_mat = w.transpose(0, 2, 3, 1).reshape(Cout, K)        # cols (kh, kw, ci)
    w_mat = _pad2(w_mat, Cout, Kp).astype(COMPUTE_DTYPE)
    b_col = b.reshape(Cout, 1).astype(jnp.float32)

    out = _gemm_bias_act(w_mat, patches, b_col, act)        # (Cout, Mp)
    return out[:, :M].reshape(Cout, N, OH, OW)


def conv_transpose2d_s2_cnhw(a, w, b, act):
    """ConvTranspose2d(k=3, stride=2, padding=1, output_padding=1) on a CNHW
    activation, lowered as a sub-pixel convolution: one GEMM produces the four
    output phases (oy%2, ox%2) from 2x2-tap patches, then a cheap pixel
    shuffle interleaves them.  a: (Cin, N, H, W), w: (Cin, Cout, 3, 3)."""
    Cin, N, H, W = a.shape
    Cin2, Cout, KH, KW = w.shape
    assert Cin == Cin2 and KH == 3 and KW == 3

    # 2x2-tap patches of the input, zero-padded one row/col at bottom/right.
    ap = jnp.pad(a, ((0, 0), (0, 0), (0, 1), (0, 1)))
    taps = [ap[:, :, dj:dj + H, di:di + W] for dj in range(2) for di in range(2)]
    patches = jnp.stack(taps, axis=0).reshape(4 * Cin, N * H * W)

    # Phase weights:
    #   out[(py,px,co), (n,j,i)] = b[co]
    #     + sum_{dj,di,ci} w[ci, co, KY(py,dj), KX(px,di)] * a[ci, n, j+dj, i+di]
    # (invalid (phase, delta) combinations contribute zero).
    tap_to_k = {(0, 0): 1, (1, 0): 2, (1, 1): 0}
    phase_rows = []
    for py in range(2):
        for px in range(2):
            blocks = []
            for dj in range(2):
                for di in range(2):
                    ky = tap_to_k.get((py, dj))
                    kx = tap_to_k.get((px, di))
                    if ky is None or kx is None:
                        blocks.append(jnp.zeros((Cout, Cin), w.dtype))
                    else:
                        blocks.append(w[:, :, ky, kx].T)          # (Cout, Cin)
            phase_rows.append(jnp.concatenate(blocks, axis=1))    # (Cout, 4Cin)
    w_phase = jnp.concatenate(phase_rows, axis=0)                 # (4Cout, 4Cin)
    b_col = jnp.tile(b, 4).reshape(4 * Cout, 1).astype(jnp.float32)

    K = 4 * Cin
    M = N * H * W
    Kp, Mp = _round_up(K, 128), _pad_m(M)
    patches = _pad2(patches, Kp, Mp).astype(COMPUTE_DTYPE)
    w_phase = _pad2(w_phase, 4 * Cout, Kp).astype(COMPUTE_DTYPE)

    out = _gemm_bias_act(w_phase, patches, b_col, act)            # (4Cout, Mp)
    out = out[:, :M].reshape(2, 2, Cout, N, H, W)                 # (py,px,co,n,j,i)
    # pixel shuffle: y[co, n, 2j+py, 2i+px]
    return out.transpose(2, 3, 4, 0, 5, 1).reshape(Cout, N, 2 * H, 2 * W)


def enc4_dec1_fused(a, w4, b4, wd1, bd1):
    """Fused encoder conv4 (64->64, 5x5 valid on a 5x5 map -> 1x1, no act) and
    decoder convT1 (64->32, 7x7 on the 1x1 map, ReLU) as two chained matmuls in
    one Pallas kernel.  a: (64, N, 5, 5) CNHW -> returns (32, N, 7, 7) CNHW."""
    C3, N, H, W = a.shape
    Cout4, C3b, K4, _ = w4.shape
    Cd1_in, Cd1_out, K7, _ = wd1.shape
    assert C3 == C3b and Cd1_in == Cout4 and H == K4 and W == K4

    K1 = C3 * H * W                       # conv4 contraction (1600)
    M = Cd1_out * K7 * K7                 # output lanes (co, i, j) = 1568

    x = a.transpose(1, 0, 2, 3).reshape(N, K1)        # cols (ci, kh, kw)
    w4m = w4.reshape(Cout4, K1).T                      # rows (ci, kh, kw)
    wd1m = wd1.reshape(Cd1_in, M)                      # cols (co, i, j)
    bd1r = jnp.repeat(bd1, K7 * K7).reshape(1, M)

    K1p = _round_up(K1, 128)
    Hp = _round_up(Cout4, 128)            # pad hidden (conv4-out) lane dim
    Mp = _pad_m(M)
    x = _pad2(x, N, K1p).astype(COMPUTE_DTYPE)
    w4m = _pad2(w4m, K1p, Hp).astype(COMPUTE_DTYPE)
    b4r = _pad2(b4.reshape(1, Cout4), 1, Hp).astype(jnp.float32)
    wd1m = _pad2(wd1m, Hp, Mp).astype(COMPUTE_DTYPE)
    bd1r = _pad2(bd1r, 1, Mp).astype(jnp.float32)

    n_tiles = 2 if Mp >= 512 else 1
    mt = Mp // n_tiles
    out = pl.pallas_call(
        _enc4_dec1_kernel,
        out_shape=jax.ShapeDtypeStruct((N, Mp), jnp.float32),
        grid=(n_tiles,),
        in_specs=[
            pl.BlockSpec((N, K1p), lambda j: (0, 0)),
            pl.BlockSpec((K1p, Hp), lambda j: (0, 0)),
            pl.BlockSpec((1, Hp), lambda j: (0, 0)),
            pl.BlockSpec((Hp, mt), lambda j: (0, j)),
            pl.BlockSpec((1, mt), lambda j: (0, j)),
        ],
        out_specs=pl.BlockSpec((N, mt), lambda j: (0, j)),
        compiler_params=pltpu.CompilerParams(
            dimension_semantics=("parallel",)),
    )(x, w4m, b4r, wd1m, bd1r)

    out = out[:, :M].reshape(N, Cd1_out, K7, K7)       # NCHW
    return out.transpose(1, 0, 2, 3)                   # CNHW for the next layer


# ----------------------------------------------------------------------------
# Autoencoder forward
# ----------------------------------------------------------------------------
def init_params(key):
    shapes = {
        # encoder (Conv2d weights are (Cout, Cin, KH, KW))
        "e1_w": (16, 1, 3, 3), "e1_b": (16,),
        "e2_w": (32, 16, 3, 3), "e2_b": (32,),
        "e3_w": (64, 32, 3, 3), "e3_b": (64,),
        "e4_w": (64, 64, 5, 5), "e4_b": (64,),
        # decoder (ConvTranspose2d weights are (Cin, Cout, KH, KW))
        "d1_w": (64, 32, 7, 7), "d1_b": (32,),
        "d2_w": (32, 16, 3, 3), "d2_b": (16,),
        "d3_w": (16, 1, 3, 3), "d3_b": (1,),
    }
    params = {}
    keys = jax.random.split(key, len(shapes))
    for k_rng, (name, shape) in zip(keys, sorted(shapes.items())):
        params[name] = (0.05 * jax.random.normal(k_rng, shape)).astype(jnp.float32)
    return params


@jax.jit
def autoencoder_forward(x, params):
    # NCHW -> CNHW (channels on sublanes, batch*spatial on lanes), once.
    a = x.transpose(1, 0, 2, 3)
    # encoder
    a = conv2d_cnhw(a, params["e1_w"], params["e1_b"], 2, 1, "relu")
    a = conv2d_cnhw(a, params["e2_w"], params["e2_b"], 2, 1, "relu")
    a = conv2d_cnhw(a, params["e3_w"], params["e3_b"], 1, 0, "relu")
    # encoder conv4 + decoder convT1 fused into one Pallas kernel
    a = enc4_dec1_fused(a, params["e4_w"], params["e4_b"],
                        params["d1_w"], params["d1_b"])
    # decoder tail: stride-2 transposed convs as sub-pixel convolutions
    a = conv_transpose2d_s2_cnhw(a, params["d2_w"], params["d2_b"], "relu")
    a = conv_transpose2d_s2_cnhw(a, params["d3_w"], params["d3_b"], "sigmoid")
    return a.transpose(1, 0, 2, 3)                     # CNHW -> NCHW


# ----------------------------------------------------------------------------
# Pure-XLA reference of the same module (for an in-script sanity check)
# ----------------------------------------------------------------------------
@jax.jit
def _reference_forward(x, params):
    dn = ("NCHW", "OIHW", "NCHW")
    hp = jax.lax.Precision.HIGHEST

    def conv(x, w, b, s, p):
        y = jax.lax.conv_general_dilated(
            x, w, (s, s), [(p, p), (p, p)], dimension_numbers=dn, precision=hp)
        return y + b.reshape(1, -1, 1, 1)

    def convT(x, w, b, s, p, op):
        k = w.shape[2]
        wf = jnp.flip(w, (2, 3)).transpose(1, 0, 2, 3)
        y = jax.lax.conv_general_dilated(
            x, wf, (1, 1), [(k - 1 - p, k - 1 - p + op)] * 2,
            lhs_dilation=(s, s), dimension_numbers=dn, precision=hp)
        return y + b.reshape(1, -1, 1, 1)

    r = jax.nn.relu
    y = r(conv(x, params["e1_w"], params["e1_b"], 2, 1))
    y = r(conv(y, params["e2_w"], params["e2_b"], 2, 1))
    y = r(conv(y, params["e3_w"], params["e3_b"], 1, 0))
    y = conv(y, params["e4_w"], params["e4_b"], 1, 0)
    y = r(convT(y, params["d1_w"], params["d1_b"], 1, 0, 0))
    y = r(convT(y, params["d2_w"], params["d2_b"], 2, 1, 1))
    y = jax.nn.sigmoid(convT(y, params["d3_w"], params["d3_b"], 2, 1, 1))
    return y


if __name__ == "__main__":
    key = jax.random.PRNGKey(0)
    k_x, k_p = jax.random.split(key)
    # The module's conv stack implies a 1-channel 28x28 (MNIST-like) input.
    x = jax.random.normal(k_x, (2, 1, 28, 28), dtype=jnp.float32)
    params = init_params(k_p)

    y = jax.block_until_ready(autoencoder_forward(x, params))

    assert y.shape == (2, 1, 28, 28), y.shape
    assert bool(jnp.all(jnp.isfinite(y)))
    assert bool(jnp.all((y >= 0.0) & (y <= 1.0)))      # sigmoid output range

    # Sanity check against a pure-XLA reference of the same module.
    y_ref = jax.block_until_ready(_reference_forward(x, params))
    max_diff = jnp.max(jnp.abs(y - y_ref))
    assert bool(max_diff < 2e-3), float(max_diff)

    print("KERNEL_OK")
</pallas_src>

<mosaic_0001>
module attributes {stable_mosaic.version = 11 : i64} {
  func.func @_gemm_bias_act_kernel(%arg0: i32, %arg1: memref<16x128xf32, #tpu.memory_space<vmem>>, %arg2: memref<128x256xf32, #tpu.memory_space<vmem>>, %arg3: memref<16x1xf32, #tpu.memory_space<vmem>>, %arg4: memref<16x256xf32, #tpu.memory_space<vmem>>) attributes {dimension_semantics = [#tpu.dimension_semantics<parallel>], iteration_bounds = array<i64: 2>, scalar_prefetch = 0 : i64, scratch_operands = 0 : i64, tpu.core_type = #tpu.core_type<tc>, window_params = [{pipeline_mode = #tpu.pipeline_mode<synchronous>, transform_indices = @transform_0, window_bounds = array<i64: 16, 128>}, {transform_indices = @transform_1, window_bounds = array<i64: 128, 256>}, {pipeline_mode = #tpu.pipeline_mode<synchronous>, transform_indices = @transform_2, window_bounds = array<i64: 16, 1>}, {transform_indices = @transform_3, window_bounds = array<i64: 16, 256>}]} {
    %c0 = arith.constant 0 : index
    %c0_0 = arith.constant 0 : index
    %0 = vector.load %arg1[%c0, %c0_0] : memref<16x128xf32, #tpu.memory_space<vmem>>, vector<16x128xf32>
    %c0_1 = arith.constant 0 : index
    %c0_2 = arith.constant 0 : index
    %1 = vector.load %arg2[%c0_1, %c0_2] : memref<128x256xf32, #tpu.memory_space<vmem>>, vector<128x256xf32>
    %cst = arith.constant dense<0.000000e+00> : vector<16x256xf32>
    %2 = tpu.matmul %0, %1, %cst {dimension_numbers = #tpu.dot_dimension_numbers<[1], [0], [0], [1], [0, 0, 1, 1], [], []>} : vector<16x128xf32>, vector<128x256xf32>, vector<16x256xf32> -> vector<16x256xf32>
    %c0_3 = arith.constant 0 : index
    %c0_4 = arith.constant 0 : index
    %3 = vector.load %arg3[%c0_3, %c0_4] : memref<16x1xf32, #tpu.memory_space<vmem>>, vector<16x1xf32>
    %4 = vector.broadcast %3 : vector<16x1xf32> to vector<16x256xf32>
    %5 = arith.addf %2, %4 : vector<16x256xf32>
    %cst_5 = arith.constant 0.000000e+00 : f32
    %6 = vector.broadcast %cst_5 : f32 to vector<16x256xf32>
    %7 = arith.maximumf %5, %6 : vector<16x256xf32>
    %c0_6 = arith.constant 0 : index
    %c0_7 = arith.constant 0 : index
    %8 = vector.load %arg4[%c0_6, %c0_7] : memref<16x256xf32, #tpu.memory_space<vmem>>, vector<16x256xf32>
    tpu.vector_store %arg4[%c0_6, %c0_7], %7 {strides = array<i32>} : memref<16x256xf32, #tpu.memory_space<vmem>>, vector<16x256xf32>,
    return
  }
  func.func @transform_0(%arg0: i32) -> (i32, i32) {
    %c0_i32 = arith.constant 0 : i32
    %c0_i32_0 = arith.constant 0 : i32
    %c0_i32_1 = arith.constant 0 : i32
    return %c0_i32, %c0_i32_0 : i32, i32
  }
  func.func @transform_1(%arg0: i32) -> (i32, i32) {
    %c0_i32 = arith.constant 0 : i32
    %c0_i32_0 = arith.constant 0 : i32
    return %c0_i32, %arg0 : i32, i32
  }
  func.func @transform_2(%arg0: i32) -> (i32, i32) {
    %c0_i32 = arith.constant 0 : i32
    %c0_i32_0 = arith.constant 0 : i32
    %c0_i32_1 = arith.constant 0 : i32
    return %c0_i32, %c0_i32_0 : i32, i32
  }
  func.func @transform_3(%arg0: i32) -> (i32, i32) {
    %c0_i32 = arith.constant 0 : i32
    %c0_i32_0 = arith.constant 0 : i32
    return %c0_i32, %arg0 : i32, i32
  }
}

module attributes {stable_mosaic.version = 11 : i64} {
  func.func @_gemm_bias_act_kernel(%arg0: i32, %arg1: memref<32x256xf32, #tpu.memory_space<vmem>>, %arg2: memref<256x128xf32, #tpu.memory_space<vmem>>, %arg3: memref<32x1xf32, #tpu.memory_space<vmem>>, %arg4: memref<32x128xf32, #tpu.memory_space<vmem>>) attributes {dimension_semantics = [#tpu.dimension_semantics<parallel>], iteration_bounds = array<i64: 1>, scalar_prefetch = 0 : i64, scratch_operands = 0 : i64, tpu.core_type = #tpu.core_type<tc>, window_params = [{pipeline_mode = #tpu.pipeline_mode<synchronous>, transform_indices = @transform_0, window_bounds = array<i64: 32, 256>}, {transform_indices = @transform_1, window_bounds = array<i64: 256, 128>}, {pipeline_mode = #tpu.pipeline_mode<synchronous>, transform_indices = @transform_2, window_bounds = array<i64: 32, 1>}, {transform_indices = @transform_3, window_bounds = array<i64: 32, 128>}]} {
    %c0 = arith.constant 0 : index
    %c0_0 = arith.constant 0 : index
    %0 = vector.load %arg1[%c0, %c0_0] : memref<32x256xf32, #tpu.memory_space<vmem>>, vector<32x256xf32>
    %c0_1 = arith.constant 0 : index
    %c0_2 = arith.constant 0 : index
    %1 = vector.load %arg2[%c0_1, %c0_2] : memref<256x128xf32, #tpu.memory_space<vmem>>, vector<256x128xf32>
    %cst = arith.constant dense<0.000000e+00> : vector<32x128xf32>
    %2 = tpu.matmul %0, %1, %cst {dimension_numbers = #tpu.dot_dimension_numbers<[1], [0], [0], [1], [0, 0, 1, 1], [], []>} : vector<32x256xf32>, vector<256x128xf32>, vector<32x128xf32> -> vector<32x128xf32>
    %c0_3 = arith.constant 0 : index
    %c0_4 = arith.constant 0 : index
    %3 = vector.load %arg3[%c0_3, %c0_4] : memref<32x1xf32, #tpu.memory_space<vmem>>, vector<32x1xf32>
    %4 = vector.broadcast %3 : vector<32x1xf32> to vector<32x128xf32>
    %5 = arith.addf %2, %4 : vector<32x128xf32>
    %cst_5 = arith.constant 0.000000e+00 : f32
    %6 = vector.broadcast %cst_5 : f32 to vector<32x128xf32>
    %7 = arith.maximumf %5, %6 : vector<32x128xf32>
    %c0_6 = arith.constant 0 : index
    %c0_7 = arith.constant 0 : index
    %8 = vector.load %arg4[%c0_6, %c0_7] : memref<32x128xf32, #tpu.memory_space<vmem>>, vector<32x128xf32>
    tpu.vector_store %arg4[%c0_6, %c0_7], %7 {strides = array<i32>} : memref<32x128xf32, #tpu.memory_space<vmem>>, vector<32x128xf32>,
    return
  }
  func.func @transform_0(%arg0: i32) -> (i32, i32) {
    %c0_i32 = arith.constant 0 : i32
    %c0_i32_0 = arith.constant 0 : i32
    %c0_i32_1 = arith.constant 0 : i32
    return %c0_i32, %c0_i32_0 : i32, i32
  }
  func.func @transform_1(%arg0: i32) -> (i32, i32) {
    %c0_i32 = arith.constant 0 : i32
    %c0_i32_0 = arith.constant 0 : i32
    return %c0_i32, %arg0 : i32, i32
  }
  func.func @transform_2(%arg0: i32) -> (i32, i32) {
    %c0_i32 = arith.constant 0 : i32
    %c0_i32_0 = arith.constant 0 : i32
    %c0_i32_1 = arith.constant 0 : i32
    return %c0_i32, %c0_i32_0 : i32, i32
  }
  func.func @transform_3(%arg0: i32) -> (i32, i32) {
    %c0_i32 = arith.constant 0 : i32
    %c0_i32_0 = arith.constant 0 : i32
    return %c0_i32, %arg0 : i32, i32
  }
}

module attributes {stable_mosaic.version = 11 : i64} {
  func.func @_gemm_bias_act_kernel(%arg0: i32, %arg1: memref<64x384xf32, #tpu.memory_space<vmem>>, %arg2: memref<384x128xf32, #tpu.memory_space<vmem>>, %arg3: memref<64x1xf32, #tpu.memory_space<vmem>>, %arg4: memref<64x128xf32, #tpu.memory_space<vmem>>) attributes {dimension_semantics = [#tpu.dimension_semantics<parallel>], iteration_bounds = array<i64: 1>, scalar_prefetch = 0 : i64, scratch_operands = 0 : i64, tpu.core_type = #tpu.core_type<tc>, window_params = [{pipeline_mode = #tpu.pipeline_mode<synchronous>, transform_indices = @transform_0, window_bounds = array<i64: 64, 384>}, {transform_indices = @transform_1, window_bounds = array<i64: 384, 128>}, {pipeline_mode = #tpu.pipeline_mode<synchronous>, transform_indices = @transform_2, window_bounds = array<i64: 64, 1>}, {transform_indices = @transform_3, window_bounds = array<i64: 64, 128>}]} {
    %c0 = arith.constant 0 : index
    %c0_0 = arith.constant 0 : index
    %0 = vector.load %arg1[%c0, %c0_0] : memref<64x384xf32, #tpu.memory_space<vmem>>, vector<64x384xf32>
    %c0_1 = arith.constant 0 : index
    %c0_2 = arith.constant 0 : index
    %1 = vector.load %arg2[%c0_1, %c0_2] : memref<384x128xf32, #tpu.memory_space<vmem>>, vector<384x128xf32>
    %cst = arith.constant dense<0.000000e+00> : vector<64x128xf32>
    %2 = tpu.matmul %0, %1, %cst {dimension_numbers = #tpu.dot_dimension_numbers<[1], [0], [0], [1], [0, 0, 1, 1], [], []>} : vector<64x384xf32>, vector<384x128xf32>, vector<64x128xf32> -> vector<64x128xf32>
    %c0_3 = arith.constant 0 : index
    %c0_4 = arith.constant 0 : index
    %3 = vector.load %arg3[%c0_3, %c0_4] : memref<64x1xf32, #tpu.memory_space<vmem>>, vector<64x1xf32>
    %4 = vector.broadcast %3 : vector<64x1xf32> to vector<64x128xf32>
    %5 = arith.addf %2, %4 : vector<64x128xf32>
    %cst_5 = arith.constant 0.000000e+00 : f32
    %6 = vector.broadcast %cst_5 : f32 to vector<64x128xf32>
    %7 = arith.maximumf %5, %6 : vector<64x128xf32>
    %c0_6 = arith.constant 0 : index
    %c0_7 = arith.constant 0 : index
    %8 = vector.load %arg4[%c0_6, %c0_7] : memref<64x128xf32, #tpu.memory_space<vmem>>, vector<64x128xf32>
    tpu.vector_store %arg4[%c0_6, %c0_7], %7 {strides = array<i32>} : memref<64x128xf32, #tpu.memory_space<vmem>>, vector<64x128xf32>,
    return
  }
  func.func @transform_0(%arg0: i32) -> (i32, i32) {
    %c0_i32 = arith.constant 0 : i32
    %c0_i32_0 = arith.constant 0 : i32
    %c0_i32_1 = arith.constant 0 : i32
    return %c0_i32, %c0_i32_0 : i32, i32
  }
  func.func @transform_1(%arg0: i32) -> (i32, i32) {
    %c0_i32 = arith.constant 0 : i32
    %c0_i32_0 = arith.constant 0 : i32
    return %c0_i32, %arg0 : i32, i32
  }
  func.func @transform_2(%arg0: i32) -> (i32, i32) {
    %c0_i32 = arith.constant 0 : i32
    %c0_i32_0 = arith.constant 0 : i32
    %c0_i32_1 = arith.constant 0 : i32
    return %c0_i32, %c0_i32_0 : i32, i32
  }
  func.func @transform_3(%arg0: i32) -> (i32, i32) {
    %c0_i32 = arith.constant 0 : i32
    %c0_i32_0 = arith.constant 0 : i32
    return %c0_i32, %arg0 : i32, i32
  }
}

module attributes {stable_mosaic.version = 11 : i64} {
  func.func @_enc4_dec1_kernel(%arg0: i32, %arg1: memref<2x1664xf32, #tpu.memory_space<vmem>>, %arg2: memref<1664x128xf32, #tpu.memory_space<vmem>>, %arg3: memref<1x128xf32, #tpu.memory_space<vmem>>, %arg4: memref<128x896xf32, #tpu.memory_space<vmem>>, %arg5: memref<1x896xf32, #tpu.memory_space<vmem>>, %arg6: memref<2x896xf32, #tpu.memory_space<vmem>>) attributes {dimension_semantics = [#tpu.dimension_semantics<parallel>], iteration_bounds = array<i64: 2>, scalar_prefetch = 0 : i64, scratch_operands = 0 : i64, tpu.core_type = #tpu.core_type<tc>, window_params = [{pipeline_mode = #tpu.pipeline_mode<synchronous>, transform_indices = @transform_0, window_bounds = array<i64: 2, 1664>}, {pipeline_mode = #tpu.pipeline_mode<synchronous>, transform_indices = @transform_1, window_bounds = array<i64: 1664, 128>}, {pipeline_mode = #tpu.pipeline_mode<synchronous>, transform_indices = @transform_2, window_bounds = array<i64: 1, 128>}, {transform_indices = @transform_3, window_bounds = array<i64: 128, 896>}, {transform_indices = @transform_4, window_bounds = array<i64: 1, 896>}, {transform_indices = @transform_5, window_bounds = array<i64: 2, 896>}]} {
    %c0 = arith.constant 0 : index
    %c0_0 = arith.constant 0 : index
    %0 = vector.load %arg1[%c0, %c0_0] : memref<2x1664xf32, #tpu.memory_space<vmem>>, vector<2x1664xf32>
    %c0_1 = arith.constant 0 : index
    %c0_2 = arith.constant 0 : index
    %1 = vector.load %arg2[%c0_1, %c0_2] : memref<1664x128xf32, #tpu.memory_space<vmem>>, vector<1664x128xf32>
    %cst = arith.constant dense<0.000000e+00> : vector<2x128xf32>
    %2 = tpu.matmul %0, %1, %cst {dimension_numbers = #tpu.dot_dimension_numbers<[1], [0], [0], [1], [0, 0, 1, 1], [], []>} : vector<2x1664xf32>, vector<1664x128xf32>, vector<2x128xf32> -> vector<2x128xf32>
    %c0_3 = arith.constant 0 : index
    %c0_4 = arith.constant 0 : index
    %3 = vector.load %arg3[%c0_3, %c0_4] : memref<1x128xf32, #tpu.memory_space<vmem>>, vector<1x128xf32>
    %4 = vector.broadcast %3 : vector<1x128xf32> to vector<2x128xf32>
    %5 = arith.addf %2, %4 : vector<2x128xf32>
    %c0_5 = arith.constant 0 : index
    %c0_6 = arith.constant 0 : index
    %6 = vector.load %arg4[%c0_5, %c0_6] : memref<128x896xf32, #tpu.memory_space<vmem>>, vector<128x896xf32>
    %cst_7 = arith.constant dense<0.000000e+00> : vector<2x896xf32>
    %7 = tpu.matmul %5, %6, %cst_7 {dimension_numbers = #tpu.dot_dimension_numbers<[1], [0], [0], [1], [0, 0, 1, 1], [], []>} : vector<2x128xf32>, vector<128x896xf32>, vector<2x896xf32> -> vector<2x896xf32>
    %c0_8 = arith.constant 0 : index
    %c0_9 = arith.constant 0 : index
    %8 = vector.load %arg5[%c0_8, %c0_9] : memref<1x896xf32, #tpu.memory_space<vmem>>, vector<1x896xf32>
    %9 = vector.broadcast %8 : vector<1x896xf32> to vector<2x896xf32>
    %10 = arith.addf %7, %9 : vector<2x896xf32>
    %cst_10 = arith.constant 0.000000e+00 : f32
    %11 = vector.broadcast %cst_10 : f32 to vector<2x896xf32>
    %12 = arith.maximumf %10, %11 : vector<2x896xf32>
    %c0_11 = arith.constant 0 : index
    %c0_12 = arith.constant 0 : index
    %13 = vector.load %arg6[%c0_11, %c0_12] : memref<2x896xf32, #tpu.memory_space<vmem>>, vector<2x896xf32>
    tpu.vector_store %arg6[%c0_11, %c0_12], %12 {strides = array<i32>} : memref<2x896xf32, #tpu.memory_space<vmem>>, vector<2x896xf32>,
    return
  }
  func.func @transform_0(%arg0: i32) -> (i32, i32) {
    %c0_i32 = arith.constant 0 : i32
    %c0_i32_0 = arith.constant 0 : i32
    %c0_i32_1 = arith.constant 0 : i32
    return %c0_i32, %c0_i32_0 : i32, i32
  }
  func.func @transform_1(%arg0: i32) -> (i32, i32) {
    %c0_i32 = arith.constant 0 : i32
    %c0_i32_0 = arith.constant 0 : i32
    %c0_i32_1 = arith.constant 0 : i32
    return %c0_i32, %c0_i32_0 : i32, i32
  }
  func.func @transform_2(%arg0: i32) -> (i32, i32) {
    %c0_i32 = arith.constant 0 : i32
    %c0_i32_0 = arith.constant 0 : i32
    %c0_i32_1 = arith.constant 0 : i32
    return %c0_i32, %c0_i32_0 : i32, i32
  }
  func.func @transform_3(%arg0: i32) -> (i32, i32) {
    %c0_i32 = arith.constant 0 : i32
    %c0_i32_0 = arith.constant 0 : i32
    return %c0_i32, %arg0 : i32, i32
  }
  func.func @transform_4(%arg0: i32) -> (i32, i32) {
    %c0_i32 = arith.constant 0 : i32
    %c0_i32_0 = arith.constant 0 : i32
    return %c0_i32, %arg0 : i32, i32
  }
  func.func @transform_5(%arg0: i32) -> (i32, i32) {
    %c0_i32 = arith.constant 0 : i32
    %c0_i32_0 = arith.constant 0 : i32
    return %c0_i32, %arg0 : i32, i32
  }
}

module attributes {stable_mosaic.version = 11 : i64} {
  func.func @_gemm_bias_act_kernel(%arg0: i32, %arg1: memref<64x128xf32, #tpu.memory_space<vmem>>, %arg2: memref<128x128xf32, #tpu.memory_space<vmem>>, %arg3: memref<64x1xf32, #tpu.memory_space<vmem>>, %arg4: memref<64x128xf32, #tpu.memory_space<vmem>>) attributes {dimension_semantics = [#tpu.dimension_semantics<parallel>], iteration_bounds = array<i64: 1>, scalar_prefetch = 0 : i64, scratch_operands = 0 : i64, tpu.core_type = #tpu.core_type<tc>, window_params = [{pipeline_mode = #tpu.pipeline_mode<synchronous>, transform_indices = @transform_0, window_bounds = array<i64: 64, 128>}, {transform_indices = @transform_1, window_bounds = array<i64: 128, 128>}, {pipeline_mode = #tpu.pipeline_mode<synchronous>, transform_indices = @transform_2, window_bounds = array<i64: 64, 1>}, {transform_indices = @transform_3, window_bounds = array<i64: 64, 128>}]} {
    %c0 = arith.constant 0 : index
    %c0_0 = arith.constant 0 : index
    %0 = vector.load %arg1[%c0, %c0_0] : memref<64x128xf32, #tpu.memory_space<vmem>>, vector<64x128xf32>
    %c0_1 = arith.constant 0 : index
    %c0_2 = arith.constant 0 : index
    %1 = vector.load %arg2[%c0_1, %c0_2] : memref<128x128xf32, #tpu.memory_space<vmem>>, vector<128x128xf32>
    %cst = arith.constant dense<0.000000e+00> : vector<64x128xf32>
    %2 = tpu.matmul %0, %1, %cst {dimension_numbers = #tpu.dot_dimension_numbers<[1], [0], [0], [1], [0, 0, 1, 1], [], []>} : vector<64x128xf32>, vector<128x128xf32>, vector<64x128xf32> -> vector<64x128xf32>
    %c0_3 = arith.constant 0 : index
    %c0_4 = arith.constant 0 : index
    %3 = vector.load %arg3[%c0_3, %c0_4] : memref<64x1xf32, #tpu.memory_space<vmem>>, vector<64x1xf32>
    %4 = vector.broadcast %3 : vector<64x1xf32> to vector<64x128xf32>
    %5 = arith.addf %2, %4 : vector<64x128xf32>
    %cst_5 = arith.constant 0.000000e+00 : f32
    %6 = vector.broadcast %cst_5 : f32 to vector<64x128xf32>
    %7 = arith.maximumf %5, %6 : vector<64x128xf32>
    %c0_6 = arith.constant 0 : index
    %c0_7 = arith.constant 0 : index
    %8 = vector.load %arg4[%c0_6, %c0_7] : memref<64x128xf32, #tpu.memory_space<vmem>>, vector<64x128xf32>
    tpu.vector_store %arg4[%c0_6, %c0_7], %7 {strides = array<i32>} : memref<64x128xf32, #tpu.memory_space<vmem>>, vector<64x128xf32>,
    return
  }
  func.func @transform_0(%arg0: i32) -> (i32, i32) {
    %c0_i32 = arith.constant 0 : i32
    %c0_i32_0 = arith.constant 0 : i32
    %c0_i32_1 = arith.constant 0 : i32
    return %c0_i32, %c0_i32_0 : i32, i32
  }
  func.func @transform_1(%arg0: i32) -> (i32, i32) {
    %c0_i32 = arith.constant 0 : i32
    %c0_i32_0 = arith.constant 0 : i32
    return %c0_i32, %arg0 : i32, i32
  }
  func.func @transform_2(%arg0: i32) -> (i32, i32) {
    %c0_i32 = arith.constant 0 : i32
    %c0_i32_0 = arith.constant 0 : i32
    %c0_i32_1 = arith.constant 0 : i32
    return %c0_i32, %c0_i32_0 : i32, i32
  }
  func.func @transform_3(%arg0: i32) -> (i32, i32) {
    %c0_i32 = arith.constant 0 : i32
    %c0_i32_0 = arith.constant 0 : i32
    return %c0_i32, %arg0 : i32, i32
  }
}

module attributes {stable_mosaic.version = 11 : i64} {
  func.func @_gemm_bias_act_kernel(%arg0: i32, %arg1: memref<4x128xf32, #tpu.memory_space<vmem>>, %arg2: memref<128x256xf32, #tpu.memory_space<vmem>>, %arg3: memref<4x1xf32, #tpu.memory_space<vmem>>, %arg4: memref<4x256xf32, #tpu.memory_space<vmem>>) attributes {dimension_semantics = [#tpu.dimension_semantics<parallel>], iteration_bounds = array<i64: 2>, scalar_prefetch = 0 : i64, scratch_operands = 0 : i64, tpu.core_type = #tpu.core_type<tc>, window_params = [{pipeline_mode = #tpu.pipeline_mode<synchronous>, transform_indices = @transform_0, window_bounds = array<i64: 4, 128>}, {transform_indices = @transform_1, window_bounds = array<i64: 128, 256>}, {pipeline_mode = #tpu.pipeline_mode<synchronous>, transform_indices = @transform_2, window_bounds = array<i64: 4, 1>}, {transform_indices = @transform_3, window_bounds = array<i64: 4, 256>}]} {
    %c0 = arith.constant 0 : index
    %c0_0 = arith.constant 0 : index
    %0 = vector.load %arg1[%c0, %c0_0] : memref<4x128xf32, #tpu.memory_space<vmem>>, vector<4x128xf32>
    %c0_1 = arith.constant 0 : index
    %c0_2 = arith.constant 0 : index
    %1 = vector.load %arg2[%c0_1, %c0_2] : memref<128x256xf32, #tpu.memory_space<vmem>>, vector<128x256xf32>
    %cst = arith.constant dense<0.000000e+00> : vector<4x256xf32>
    %2 = tpu.matmul %0, %1, %cst {dimension_numbers = #tpu.dot_dimension_numbers<[1], [0], [0], [1], [0, 0, 1, 1], [], []>} : vector<4x128xf32>, vector<128x256xf32>, vector<4x256xf32> -> vector<4x256xf32>
    %c0_3 = arith.constant 0 : index
    %c0_4 = arith.constant 0 : index
    %3 = vector.load %arg3[%c0_3, %c0_4] : memref<4x1xf32, #tpu.memory_space<vmem>>, vector<4x1xf32>
    %4 = vector.broadcast %3 : vector<4x1xf32> to vector<4x256xf32>
    %5 = arith.addf %2, %4 : vector<4x256xf32>
    %6 = math.absf %5 : vector<4x256xf32>
    %cst_5 = arith.constant 0.000000e+00 : f32
    %7 = vector.broadcast %cst_5 : f32 to vector<4x256xf32>
    %8 = arith.subf %7, %6 : vector<4x256xf32>
    %9 = math.exp %8 : vector<4x256xf32>
    %cst_6 = arith.constant 1.000000e+00 : f32
    %10 = vector.broadcast %cst_6 : f32 to vector<4x256xf32>
    %11 = arith.addf %10, %9 : vector<4x256xf32>
    %cst_7 = arith.constant 1.000000e+00 : f32
    %12 = vector.broadcast %cst_7 : f32 to vector<4x256xf32>
    %13 = arith.divf %12, %11 : vector<4x256xf32>
    %cst_8 = arith.constant 0.000000e+00 : f32
    %14 = vector.broadcast %cst_8 : f32 to vector<4x256xf32>
    %15 = arith.cmpf oge, %5, %14 : vector<4x256xf32>
    %16 = arith.mulf %9, %13 : vector<4x256xf32>
    %17 = arith.select %15, %13, %16 : vector<4x256xi1>, vector<4x256xf32>
    %c0_9 = arith.constant 0 : index
    %c0_10 = arith.constant 0 : index
    %18 = vector.load %arg4[%c0_9, %c0_10] : memref<4x256xf32, #tpu.memory_space<vmem>>, vector<4x256xf32>
    tpu.vector_store %arg4[%c0_9, %c0_10], %17 {strides = array<i32>} : memref<4x256xf32, #tpu.memory_space<vmem>>, vector<4x256xf32>,
    return
  }
  func.func @transform_0(%arg0: i32) -> (i32, i32) {
    %c0_i32 = arith.constant 0 : i32
    %c0_i32_0 = arith.constant 0 : i32
    %c0_i32_1 = arith.constant 0 : i32
    return %c0_i32, %c0_i32_0 : i32, i32
  }
  func.func @transform_1(%arg0: i32) -> (i32, i32) {
    %c0_i32 = arith.constant 0 : i32
    %c0_i32_0 = arith.constant 0 : i32
    return %c0_i32, %arg0 : i32, i32
  }
  func.func @transform_2(%arg0: i32) -> (i32, i32) {
    %c0_i32 = arith.constant 0 : i32
    %c0_i32_0 = arith.constant 0 : i32
    %c0_i32_1 = arith.constant 0 : i32
    return %c0_i32, %c0_i32_0 : i32, i32
  }
  func.func @transform_3(%arg0: i32) -> (i32, i32) {
    %c0_i32 = arith.constant 0 : i32
    %c0_i32_0 = arith.constant 0 : i32
    return %c0_i32, %arg0 : i32, i32
  }
}

</mosaic_0001>

<llo_original>
// kernel: autoencoder_forward.6
$region0: #{autoencoder_forward.6}
  #allocation0 [shape = 'u32[]', space=smem, size = 0x4, offset = 0x4, fixed_abs, tag = 'smem constant byte address 0x4 - core index']
  #allocation1 [shape = 'u32[144,128]{1,0:T(1,128)}', space=vmem, size = 0x12000, scoped, tag = 'internal scratch']
  %s0 = inlined_call_operand.vmem [shape: f32[16,128], index: 0, kind: input, shape index: {}]
  %s1 = inlined_call_operand.vmem [shape: f32[128,512], index: 1, kind: input, shape index: {}]
  %s2 = inlined_call_operand.vmem [shape: f32[16,1], index: 2, kind: input, shape index: {}]
  %s3 = inlined_call_operand.vmem [shape: f32[16,512], index: 3, kind: output, shape index: {}]
  %s4 = sld [smem:[#allocation0]]
  $region87: #{autoencoder_forward.6} parent=0
    _
  %s6 = ssub.s32 1, %s4
  %s7 = scalar_select 0, %s6, %s4
  $region1: #{autoencoder_forward.6} parent=0
    #allocation2 [shape = 'u8[262144]{0}', space=vmem, size = 0x40000, scoped, tag = 'input window, operand 1']
    #allocation3 [shape = 'u8[32768]{0}', space=vmem, size = 0x8000, scoped, tag = 'output window, operand 0']
    loop: start=0, step=1, limit=4
    $region2: #{autoencoder_forward.6} parent=1 // loop_pre_header
      _
    $region3: #{autoencoder_forward.6} parent=1 // loop_header
      %s9 = sphi 0, %s13
      %p10 = scmp.ge.s32.totalorder %s9, 4
      %s17 = sphi 0, %s17
      %s19 = sphi 0, %s17
      %s20 = sphi 0, %s19
      %s34 = sphi 0, %s20
      %s40 = sphi 0, %s42
      %s43 = sphi 0, %s40
      %s44 = sphi 0, %s43
      %s60 = sphi 0, %s44
      %s64 = sphi 0, %s64
      %s66 = sphi 0, %s64
      %s67 = sphi 0, %s66
      %s81 = sphi 0, %s67
      %s87 = sphi 0, %s89
      %s90 = sphi 0, %s87
      %s91 = sphi 0, %s90
      %s107 = sphi 0, %s91
    $region4: #{autoencoder_forward.6} parent=1 // loop_header_branch
      %12 = sbr.rel (%p10) target = $region8
    $region5: #{autoencoder_forward.6} parent=1 // loop_body
      %s14 = ssub.s32 %s9, 1
      %s15 = ssub.s32 %s9, 2
      %s16 = sadd.s32 %s9, 1
      %s18 = sadd.s32 %s17, 1
      %p21 = scmp.eq.s32.totalorder %s9, 1
      %p22 = scmp.ne.s32.totalorder %s17, %s19
      %p23 = scmp.eq.s32.totalorder %s9, 0
      %p24 = por %p22, %p23
      %p25 = scmp.ne.s32.totalorder %s17, %s19
      %p26 = scmp.eq.s32.totalorder %s14, 1
      %p27 = por %p25, %p26
      %p28 = scmp.ne.s32.totalorder %s19, %s20
      %p29 = scmp.eq.s32.totalorder %s14, 0
      %p30 = por %p28, %p29
      %p31 = scmp.ne.s32.totalorder %s19, %s20
      %p32 = scmp.eq.s32.totalorder %s15, 1
      %p33 = por %p31, %p32
      %p35 = scmp.ne.s32.totalorder %s20, %s34
      %p36 = scmp.eq.s32.totalorder %s15, 0
      %p37 = por %p35, %p36
      %s38 = ssub.s32 %s9, %s16
      %p39 = scmp.eq.s32.totalorder %s38, 0
      %s41 = sadd.s32 %s40, 1
      %s42 = scalar_select %p39, %s40, %s41
      %p45 = pneg %p39
      %p46 = scmp.eq.s32.totalorder %s9, 1
      %p47 = por %p45, %p46
      %p48 = scmp.ne.s32.totalorder %s40, %s43
      %p49 = scmp.eq.s32.totalorder %s9, 0
      %p50 = por %p48, %p49
      %p51 = scmp.ne.s32.totalorder %s40, %s43
      %p52 = scmp.eq.s32.totalorder %s14, 1
      %p53 = por %p51, %p52
      %p54 = scmp.ne.s32.totalorder %s43, %s44
      %p55 = scmp.eq.s32.totalorder %s14, 0
      %p56 = por %p54, %p55
      %p57 = scmp.ne.s32.totalorder %s43, %s44
      %p58 = scmp.eq.s32.totalorder %s15, 1
      %p59 = por %p57, %p58
      %p61 = scmp.ne.s32.totalorder %s44, %s60
      %p62 = scmp.eq.s32.totalorder %s15, 0
      %p63 = por %p61, %p62
      %s65 = sadd.s32 %s64, 1
      %p68 = scmp.eq.s32.totalorder %s9, 1
      %p69 = scmp.ne.s32.totalorder %s64, %s66
      %p70 = scmp.eq.s32.totalorder %s9, 0
      %p71 = por %p69, %p70
      %p72 = scmp.ne.s32.totalorder %s64, %s66
      %p73 = scmp.eq.s32.totalorder %s14, 1
      %p74 = por %p72, %p73
      %p75 = scmp.ne.s32.totalorder %s66, %s67
      %p76 = scmp.eq.s32.totalorder %s14, 0
      %p77 = por %p75, %p76
      %p78 = scmp.ne.s32.totalorder %s66, %s67
      %p79 = scmp.eq.s32.totalorder %s15, 1
      %p80 = por %p78, %p79
      %p82 = scmp.ne.s32.totalorder %s67, %s81
      %p83 = scmp.eq.s32.totalorder %s15, 0
      %p84 = por %p82, %p83
      %s85 = ssub.s32 %s9, %s16
      %p86 = scmp.eq.s32.totalorder %s85, 0
      %s88 = sadd.s32 %s87, 1
      %s89 = scalar_select %p86, %s87, %s88
      %p92 = pneg %p86
      %p93 = scmp.eq.s32.totalorder %s9, 1
      %p94 = por %p92, %p93
      %p95 = scmp.ne.s32.totalorder %s87, %s90
      %p96 = scmp.eq.s32.totalorder %s9, 0
      %p97 = por %p95, %p96
      %p98 = scmp.ne.s32.totalorder %s87, %s90
      %p99 = scmp.eq.s32.totalorder %s14, 1
      %p100 = por %p98, %p99
      %p101 = scmp.ne.s32.totalorder %s90, %s91
      %p102 = scmp.eq.s32.totalorder %s14, 0
      %p103 = por %p101, %p102
      %p104 = scmp.ne.s32.totalorder %s90, %s91
      %p105 = scmp.eq.s32.totalorder %s15, 1
      %p106 = por %p104, %p105
      %p108 = scmp.ne.s32.totalorder %s91, %s107
      %p109 = scmp.eq.s32.totalorder %s15, 0
      %p110 = por %p108, %p109
      %p111 = scmp.le.s32.totalorder 1, %s9
      %p112 = scmp.lt.s32.totalorder %s9, 3
      %p113 = pnand %p111, %p112
      %p114 = pneg %p113
      // Predicated region
      $region9: #{autoencoder_forward.6} parent=5 // pred_check
        _
      $region10: #{autoencoder_forward.6} parent=5 // pred_check_branch
        %116 = sbr.rel (%p113) target = $region12
      $region11: #{autoencoder_forward.6} parent=5 // pred_region
        %s117 = ssub.s32 %s9, 1
        // Predicated region
        $region13: #{autoencoder_forward.6} parent=11 // pred_check
          %p118 = pneg %p30
        $region14: #{autoencoder_forward.6} parent=11 // pred_check_branch
          %120 = sbr.rel (%p118) target = $region16
        $region15: #{autoencoder_forward.6} parent=11 // pred_region
          _
        $region16: #{autoencoder_forward.6} parent=11 // pred_fallthru
          _
        // Predicated region
        $region17: #{autoencoder_forward.6} parent=11 // pred_check
          %p121 = pneg %p77
        $region18: #{autoencoder_forward.6} parent=11 // pred_check_branch
          %123 = sbr.rel (%p121) target = $region20
        $region19: #{autoencoder_forward.6} parent=11 // pred_region
          _
        $region20: #{autoencoder_forward.6} parent=11 // pred_fallthru
          _
      $region12: #{autoencoder_forward.6} parent=5 // pred_fallthru
        _
      %p124 = scmp.lt.s32.totalorder %s9, 2
      // Predicated region
      $region21: #{autoencoder_forward.6} parent=5 // pred_check
        %p125 = pneg %p124
      $region22: #{autoencoder_forward.6} parent=5 // pred_check_branch
        %127 = sbr.rel (%p125) target = $region24
      $region23: #{autoencoder_forward.6} parent=5 // pred_region
        // Predicated region
        $region25: #{autoencoder_forward.6} parent=23 // pred_check
          %p128 = pneg %p50
        $region26: #{autoencoder_forward.6} parent=23 // pred_check_branch
          %130 = sbr.rel (%p128) target = $region28
        $region27: #{autoencoder_forward.6} parent=23 // pred_region
          %s131 = sand.u32 %s40, 1
          %s132 = sand.u32 %s40, 1
          %s133 = smul.addr %s132, 256
          %s134 = scalar_lea.vmem [#allocation2], %s133
          %s135 = smul.u32 2, %s9
          %s136 = smul.addr %s135, 8
          %s137 = scalar_lea.vmem %s1, %s136
          // Predicated region
          $region29: #{autoencoder_forward.6} parent=27 // pred_check
            _
          $region30: #{autoencoder_forward.6} parent=27 // pred_check_branch
            %139 = sbr.rel (0) target = $region32
          $region31: #{autoencoder_forward.6} parent=27 // pred_region
            // Predicated region
            $region33: #{autoencoder_forward.6} parent=31 // pred_check
              _
            $region34: #{autoencoder_forward.6} parent=31 // pred_check_branch
              %141 = sbr.rel (0) target = $region36
            $region35: #{autoencoder_forward.6} parent=31 // pred_region
              loop: start=0, step=1, limit=1
              $region37: #{autoencoder_forward.6} parent=35 // loop_pre_header
                _
              $region38: #{autoencoder_forward.6} parent=35 // loop_header
                %s143 = sphi 0, %s147
                %p144 = scmp.ge.s32.totalorder %s143, 1
                %s148 = sphi %s137, %s137
                %s149 = sphi %s134, %s134
              $region39: #{autoencoder_forward.6} parent=35 // loop_header_branch
                %146 = sbr.rel (%p144) target = $region43
              $region40: #{autoencoder_forward.6} parent=35 // loop_body
                %v150 = vld [vmem:[%s148] sm:$0xff]
                %151 = vst [vmem:[%s149] sm:$0xff] %v150
                %v152 = vld [vmem:[%s148 + $0x8] sm:$0xff]
                %153 = vst [vmem:[%s149 + $0x8] sm:$0xff] %v152
                %v154 = vld [vmem:[%s148 + $0x20] sm:$0xff]
                %155 = vst [vmem:[%s149 + $0x10] sm:$0xff] %v154
                %v156 = vld [vmem:[%s148 + $0x28] sm:$0xff]
                %157 = vst [vmem:[%s149 + $0x18] sm:$0xff] %v156
                %v158 = vld [vmem:[%s148 + $0x40] sm:$0xff]
                %159 = vst [vmem:[%s149 + $0x20] sm:$0xff] %v158
                %v160 = vld [vmem:[%s148 + $0x48] sm:$0xff]
                %161 = vst [vmem:[%s149 + $0x28] sm:$0xff] %v160
                %v162 = vld [vmem:[%s148 + $0x60] sm:$0xff]
                %163 = vst [vmem:[%s149 + $0x30] sm:$0xff] %v162
                %v164 = vld [vmem:[%s148 + $0x68] sm:$0xff]
                %165 = vst [vmem:[%s149 + $0x38] sm:$0xff] %v164
                %v166 = vld [vmem:[%s148 + $0x80] sm:$0xff]
                %167 = vst [vmem:[%s149 + $0x40] sm:$0xff] %v166
                %v168 = vld [vmem:[%s148 + $0x88] sm:$0xff]
                %169 = vst [vmem:[%s149 + $0x48] sm:$0xff] %v168
                %v170 = vld [vmem:[%s148 + $0xa0] sm:$0xff]
                %171 = vst [vmem:[%s149 + $0x50] sm:$0xff] %v170
                %v172 = vld [vmem:[%s148 + $0xa8] sm:$0xff]
                %173 = vst [vmem:[%s149 + $0x58] sm:$0xff] %v172
                %v174 = vld [vmem:[%s148 + $0xc0] sm:$0xff]
                %175 = vst [vmem:[%s149 + $0x60] sm:$0xff] %v174
                %v176 = vld [vmem:[%s148 + $0xc8] sm:$0xff]
                %177 = vst [vmem:[%s149 + $0x68] sm:$0xff] %v176
                %v178 = vld [vmem:[%s148 + $0xe0] sm:$0xff]
                %179 = vst [vmem:[%s149 + $0x70] sm:$0xff] %v178
                %v180 = vld [vmem:[%s148 + $0xe8] sm:$0xff]
                %181 = vst [vmem:[%s149 + $0x78] sm:$0xff] %v180
                %v182 = vld [vmem:[%s148 + $0x100] sm:$0xff]
                %183 = vst [vmem:[%s149 + $0x80] sm:$0xff] %v182
                %v184 = vld [vmem:[%s148 + $0x108] sm:$0xff]
                %185 = vst [vmem:[%s149 + $0x88] sm:$0xff] %v184
                %v186 = vld [vmem:[%s148 + $0x120] sm:$0xff]
                %187 = vst [vmem:[%s149 + $0x90] sm:$0xff] %v186
                %v188 = vld [vmem:[%s148 + $0x128] sm:$0xff]
                %189 = vst [vmem:[%s149 + $0x98] sm:$0xff] %v188
                %v190 = vld [vmem:[%s148 + $0x140] sm:$0xff]
                %191 = vst [vmem:[%s149 + $0xa0] sm:$0xff] %v190
                %v192 = vld [vmem:[%s148 + $0x148] sm:$0xff]
                %193 = vst [vmem:[%s149 + $0xa8] sm:$0xff] %v192
                %v194 = vld [vmem:[%s148 + $0x160] sm:$0xff]
                %195 = vst [vmem:[%s149 + $0xb0] sm:$0xff] %v194
                %v196 = vld [vmem:[%s148 + $0x168] sm:$0xff]
                %197 = vst [vmem:[%s149 + $0xb8] sm:$0xff] %v196
                %v198 = vld [vmem:[%s148 + $0x180] sm:$0xff]
                %199 = vst [vmem:[%s149 + $0xc0] sm:$0xff] %v198
                %v200 = vld [vmem:[%s148 + $0x188] sm:$0xff]
                %201 = vst [vmem:[%s149 + $0xc8] sm:$0xff] %v200
                %v202 = vld [vmem:[%s148 + $0x1a0] sm:$0xff]
                %203 = vst [vmem:[%s149 + $0xd0] sm:$0xff] %v202
                %v204 = vld [vmem:[%s148 + $0x1a8] sm:$0xff]
                %205 = vst [vmem:[%s149 + $0xd8] sm:$0xff] %v204
                %v206 = vld [vmem:[%s148 + $0x1c0] sm:$0xff]
                %207 = vst [vmem:[%s149 + $0xe0] sm:$0xff] %v206
                %v208 = vld [vmem:[%s148 + $0x1c8] sm:$0xff]
                %209 = vst [vmem:[%s149 + $0xe8] sm:$0xff] %v208
                %v210 = vld [vmem:[%s148 + $0x1e0] sm:$0xff]
                %211 = vst [vmem:[%s149 + $0xf0] sm:$0xff] %v210
                %v212 = vld [vmem:[%s148 + $0x1e8] sm:$0xff]
                %213 = vst [vmem:[%s149 + $0xf8] sm:$0xff] %v212
              $region41: #{autoencoder_forward.6} parent=35 // loop_footer
                %s147 = sadd.s32 1, %s143
              $region42: #{autoencoder_forward.6} parent=35 // loop_footer_branch
                %142 = sbr.rel target = $region38
              $region43: #{autoencoder_forward.6} parent=35 // loop_exit
                _
            $region36: #{autoencoder_forward.6} parent=31 // pred_fallthru
              _
            // Predicated region
            $region44: #{autoencoder_forward.6} parent=31 // pred_check
              _
            $region45: #{autoencoder_forward.6} parent=31 // pred_check_branch
              %215 = sbr.rel target = $region47
            $region46: #{autoencoder_forward.6} parent=31 // pred_region
              _
            $region47: #{autoencoder_forward.6} parent=31 // pred_fallthru
              _
          $region32: #{autoencoder_forward.6} parent=27 // pred_fallthru
            _
          %216 = vnop
        $region28: #{autoencoder_forward.6} parent=23 // pred_fallthru
          _
      $region24: #{autoencoder_forward.6} parent=5 // pred_fallthru
        _
      %p217 = scmp.le.s32.totalorder 1, %s9
      %p218 = scmp.lt.s32.totalorder %s9, 3
      %p219 = pnand %p217, %p218
      %p220 = pneg %p219
      // Predicated region
      $region48: #{autoencoder_forward.6} parent=5 // pred_check
        _
      $region49: #{autoencoder_forward.6} parent=5 // pred_check_branch
        %222 = sbr.rel (%p219) target = $region51
      $region50: #{autoencoder_forward.6} parent=5 // pred_region
        %s223 = ssub.s32 %s9, 1
        %s224 = sand.u32 %s43, 1
        %s225 = sand.u32 %s43, 1
        %s226 = smul.addr %s225, 256
        %s227 = scalar_lea.vmem [#allocation2], %s226
        // Predicated region
        $region52: #{autoencoder_forward.6} parent=50 // pred_check
          %p228 = pneg %p56
        $region53: #{autoencoder_forward.6} parent=50 // pred_check_branch
          %230 = sbr.rel (%p228) target = $region55
        $region54: #{autoencoder_forward.6} parent=50 // pred_region
          _
        $region55: #{autoencoder_forward.6} parent=50 // pred_fallthru
          _
        %p231 = pneg %p30
        %p232 = pneg %p27
        %s233 = sand.u32 %s43, 1
        %s234 = sand.u32 %s43, 1
        %s235 = smul.addr %s234, 256
        %s236 = scalar_lea.vmem [#allocation2], %s235
        %p237 = pneg %p56
        %p238 = pneg %p53
        %p239 = pneg %p77
        %p240 = pneg %p74
        %p241 = pneg %p103
        %p242 = pneg %p100
        %s243 = sand.u32 %s90, 1
        %s244 = sand.u32 %s90, 1
        %s245 = smul.addr %s244, 32
        %s246 = scalar_lea.vmem [#allocation3], %s245
        %s247 = smul.u32 2, %s14
        %s248 = smul.u32 2, %s14
        %v249 = vld [vmem:[%s0] sm:$0xff]
        %v250 = vld [vmem:[%s0 + $0x8] sm:$0xff]
        %v251 = vld [vmem:[%s227] sm:$0xff]
        %v252 = vld [vmem:[%s227 + $0x8] sm:$0xff]
        %v253 = vld [vmem:[%s227 + $0x10] sm:$0xff]
        %v254 = vld [vmem:[%s227 + $0x18] sm:$0xff]
        %v255 = vld [vmem:[%s227 + $0x20] sm:$0xff]
        %v256 = vld [vmem:[%s227 + $0x28] sm:$0xff]
        %v257 = vld [vmem:[%s227 + $0x30] sm:$0xff]
        %v258 = vld [vmem:[%s227 + $0x38] sm:$0xff]
        %v259 = vld [vmem:[%s227 + $0x40] sm:$0xff]
        %v260 = vld [vmem:[%s227 + $0x48] sm:$0xff]
        %v261 = vld [vmem:[%s227 + $0x50] sm:$0xff]
        %v262 = vld [vmem:[%s227 + $0x58] sm:$0xff]
        %v263 = vld [vmem:[%s227 + $0x60] sm:$0xff]
        %v264 = vld [vmem:[%s227 + $0x68] sm:$0xff]
        %v265 = vld [vmem:[%s227 + $0x70] sm:$0xff]
        %v266 = vld [vmem:[%s227 + $0x78] sm:$0xff]
        %v267 = vld [vmem:[%s227 + $0x80] sm:$0xff]
        %v268 = vld [vmem:[%s227 + $0x88] sm:$0xff]
        %v269 = vld [vmem:[%s227 + $0x90] sm:$0xff]
        %v270 = vld [vmem:[%s227 + $0x98] sm:$0xff]
        %v271 = vld [vmem:[%s227 + $0xa0] sm:$0xff]
        %v272 = vld [vmem:[%s227 + $0xa8] sm:$0xff]
        %v273 = vld [vmem:[%s227 + $0xb0] sm:$0xff]
        %v274 = vld [vmem:[%s227 + $0xb8] sm:$0xff]
        %v275 = vld [vmem:[%s227 + $0xc0] sm:$0xff]
        %v276 = vld [vmem:[%s227 + $0xc8] sm:$0xff]
        %v277 = vld [vmem:[%s227 + $0xd0] sm:$0xff]
        %v278 = vld [vmem:[%s227 + $0xd8] sm:$0xff]
        %v279 = vld [vmem:[%s227 + $0xe0] sm:$0xff]
        %v280 = vld [vmem:[%s227 + $0xe8] sm:$0xff]
        %v281 = vld [vmem:[%s227 + $0xf0] sm:$0xff]
        %v282 = vld [vmem:[%s227 + $0xf8] sm:$0xff]
        %v283 = vld [vmem:[%s2] sm:$0xff]
        %v284 = vld [vmem:[%s2 + $0x8] sm:$0xff]
        %286 = vset.pattern.permute.xlu0 0
        %287 = vperm.xlu0 %286, %v283
        %v288 = vpop.permute.xlu0 %287
        %291 = vset.pattern.permute.xlu0 0
        %292 = vperm.xlu0 %291, %v284
        %v293 = vpop.permute.xlu0 %292
        %295 = vmatprep.subr.mxu0 %v282
        %296 = vmatpush1.msra.mxu0 %v281
        %297 = vmatprep.subr.mxu0 %v280
        %298 = vmatpush1.msra.mxu0 %v279
        %299 = vmatprep.subr.mxu0 %v278
        %300 = vmatpush1.msra.mxu0 %v277
        %301 = vmatprep.subr.mxu0 %v276
        %302 = vmatpush1.msra.mxu0 %v275
        %303 = vmatprep.subr.mxu0 %v274
        %304 = vmatpush1.msra.mxu0 %v273
        %305 = vmatprep.subr.mxu0 %v272
        %306 = vmatpush1.msra.mxu0 %v271
        %307 = vmatprep.subr.mxu0 %v270
        %308 = vmatpush1.msra.mxu0 %v269
        %309 = vmatprep.subr.mxu0 %v268
        %310 = vmatpush1.msra.mxu0 %v267
        %311 = vmatprep.subr.mxu0 %v266
        %312 = vmatpush1.msra.mxu0 %v265
        %313 = vmatprep.subr.mxu0 %v264
        %314 = vmatpush1.msra.mxu0 %v263
        %315 = vmatprep.subr.mxu0 %v262
        %316 = vmatpush1.msra.mxu0 %v261
        %317 = vmatprep.subr.mxu0 %v260
        %318 = vmatpush1.msra.mxu0 %v259
        %319 = vmatprep.subr.mxu0 %v258
        %320 = vmatpush1.msra.mxu0 %v257
        %321 = vmatprep.subr.mxu0 %v256
        %322 = vmatpush1.msra.mxu0 %v255
        %323 = vmatprep.subr.mxu0 %v254
        %324 = vmatpush1.msra.mxu0 %v253
        %325 = vmatprep.subr.mxu0 %v252
        %326 = vmatpush1.msra.mxu0 %v251
        %327 = vmatprep.subr.mxu0 0.0
        %328 = vmatpush2.msra.mxu0 0.0
        %329 = vmatprep.subr.mxu0 0.0
        %330 = vmatpush2.msra.mxu0 0.0
        %331 = vmatprep.subr.mxu0 0.0
        %332 = vmatpush2.msra.mxu0 0.0
        %333 = vmatprep.subr.mxu0 0.0
        %334 = vmatpush2.msra.mxu0 0.0
        %335 = vmatprep.subr.mxu0 0.0
        %336 = vmatpush2.msra.mxu0 0.0
        %337 = vmatprep.subr.mxu0 0.0
        %338 = vmatpush2.msra.mxu0 0.0
        %339 = vmatprep.subr.mxu0 0.0
        %340 = vmatpush2.msra.mxu0 0.0
        %341 = vmatprep.subr.mxu0 0.0
        %342 = vmatpush2.msra.mxu0 0.0
        %343 = vmatprep.subr.mxu0 0.0
        %344 = vmatpush2.msra.mxu0 0.0
        %345 = vmatprep.subr.mxu0 0.0
        %346 = vmatpush2.msra.mxu0 0.0
        %347 = vmatprep.subr.mxu0 0.0
        %348 = vmatpush2.msra.mxu0 0.0
        %349 = vmatprep.subr.mxu0 0.0
        %350 = vmatpush2.msra.mxu0 0.0
        %351 = vmatprep.subr.mxu0 0.0
        %352 = vmatpush2.msra.mxu0 0.0
        %353 = vmatprep.subr.mxu0 0.0
        %354 = vmatpush2.msra.mxu0 0.0
        %355 = vmatprep.subr.mxu0 0.0
        %356 = vmatpush2.msra.mxu0 0.0
        %357 = vmatprep.subr.mxu0 0.0
        %358 = vmatpush2.msra.mxu0 0.0
        %359 = vmatprep.mubr.f32.mxu0 0.0
        %360 = vmatmul.mubr.f32.gmra.mxu0 %v249
        %v361 = vpop.f32.mrf.mxu0
        %v362 = vadd.f32 %v288, %v361
        %v363 = vpop.f32.mrf.mxu0
        %v364 = vadd.f32 %v288, %v363
        %365 = vmatprep.mubr.f32.mxu0 0.0
        %366 = vmatmul.mubr.f32.gmra.mxu0 %v250
        %v367 = vpop.f32.mrf.mxu0
        %v368 = vadd.f32 %v293, %v367
        %v369 = vpop.f32.mrf.mxu0
        %v370 = vadd.f32 %v293, %v369
        %371 = vdwg.mxu0
        %v372 = vmax.f32 %v362, 0.0
        %v373 = vmax.f32 %v364, 0.0
        %v374 = vmax.f32 %v368, 0.0
        %v375 = vmax.f32 %v370, 0.0
        %376 = vst [vmem:[%s246] sm:$0xff] %v372
        %377 = vst [vmem:[%s246 + $0x8] sm:$0xff] %v373
        %378 = vst [vmem:[%s246 + $0x10] sm:$0xff] %v374
        %379 = vst [vmem:[%s246 + $0x18] sm:$0xff] %v375
        %s380 = sand.u32 %s90, 1
        %s381 = sand.u32 %s90, 1
        %s382 = smul.addr %s381, 32
        %s383 = scalar_lea.vmem [#allocation3], %s382
        // Predicated region
        $region56: #{autoencoder_forward.6} parent=50 // pred_check
          %p384 = pneg %p100
        $region57: #{autoencoder_forward.6} parent=50 // pred_check_branch
          %386 = sbr.rel (%p384) target = $region59
        $region58: #{autoencoder_forward.6} parent=50 // pred_region
          %s387 = smul.u32 2, %s14
          %s388 = smul.addr %s387, 8
          %s389 = scalar_lea.vmem %s3, %s388
          // Predicated region
          $region60: #{autoencoder_forward.6} parent=58 // pred_check
            _
          $region61: #{autoencoder_forward.6} parent=58 // pred_check_branch
            %391 = sbr.rel (0) target = $region63
          $region62: #{autoencoder_forward.6} parent=58 // pred_region
            // Predicated region
            $region64: #{autoencoder_forward.6} parent=62 // pred_check
              _
            $region65: #{autoencoder_forward.6} parent=62 // pred_check_branch
              %393 = sbr.rel (0) target = $region67
            $region66: #{autoencoder_forward.6} parent=62 // pred_region
              loop: start=0, step=1, limit=1
              $region68: #{autoencoder_forward.6} parent=66 // loop_pre_header
                _
              $region69: #{autoencoder_forward.6} parent=66 // loop_header
                %s395 = sphi 0, %s399
                %p396 = scmp.ge.s32.totalorder %s395, 1
                %s400 = sphi %s383, %s383
                %s401 = sphi %s389, %s389
              $region70: #{autoencoder_forward.6} parent=66 // loop_header_branch
                %398 = sbr.rel (%p396) target = $region74
              $region71: #{autoencoder_forward.6} parent=66 // loop_body
                %v402 = vld [vmem:[%s400] sm:$0xff]
                %403 = vst [vmem:[%s401] sm:$0xff] %v402
                %v404 = vld [vmem:[%s400 + $0x8] sm:$0xff]
                %405 = vst [vmem:[%s401 + $0x8] sm:$0xff] %v404
                %v406 = vld [vmem:[%s400 + $0x10] sm:$0xff]
                %407 = vst [vmem:[%s401 + $0x20] sm:$0xff] %v406
                %v408 = vld [vmem:[%s400 + $0x18] sm:$0xff]
                %409 = vst [vmem:[%s401 + $0x28] sm:$0xff] %v408
              $region72: #{autoencoder_forward.6} parent=66 // loop_footer
                %s399 = sadd.s32 1, %s395
              $region73: #{autoencoder_forward.6} parent=66 // loop_footer_branch
                %394 = sbr.rel target = $region69
              $region74: #{autoencoder_forward.6} parent=66 // loop_exit
                _
            $region67: #{autoencoder_forward.6} parent=62 // pred_fallthru
              _
            // Predicated region
            $region75: #{autoencoder_forward.6} parent=62 // pred_check
              _
            $region76: #{autoencoder_forward.6} parent=62 // pred_check_branch
              %411 = sbr.rel target = $region78
            $region77: #{autoencoder_forward.6} parent=62 // pred_region
              _
            $region78: #{autoencoder_forward.6} parent=62 // pred_fallthru
              _
          $region63: #{autoencoder_forward.6} parent=58 // pred_fallthru
            _
          %412 = vnop
        $region59: #{autoencoder_forward.6} parent=50 // pred_fallthru
          _
      $region51: #{autoencoder_forward.6} parent=5 // pred_fallthru
        _
      %p413 = scmp.le.s32.totalorder 2, %s9
      // Predicated region
      $region79: #{autoencoder_forward.6} parent=5 // pred_check
        %p414 = pneg %p413
      $region80: #{autoencoder_forward.6} parent=5 // pred_check_branch
        %416 = sbr.rel (%p414) target = $region82
      $region81: #{autoencoder_forward.6} parent=5 // pred_region
        %s417 = ssub.s32 %s9, 2
        // Predicated region
        $region83: #{autoencoder_forward.6} parent=81 // pred_check
          %p418 = pneg %p106
        $region84: #{autoencoder_forward.6} parent=81 // pred_check_branch
          %420 = sbr.rel (%p418) target = $region86
        $region85: #{autoencoder_forward.6} parent=81 // pred_region
          %s421 = sand.u32 %s91, 1
          %s422 = sand.u32 %s91, 1
          %s423 = smul.addr %s422, 32
          %s424 = scalar_lea.vmem [#allocation3], %s423
        $region86: #{autoencoder_forward.6} parent=81 // pred_fallthru
          _
      $region82: #{autoencoder_forward.6} parent=5 // pred_fallthru
        _
    $region6: #{autoencoder_forward.6} parent=1 // loop_footer
      %s13 = sadd.s32 1, %s9
    $region7: #{autoencoder_forward.6} parent=1 // loop_footer_branch
      %8 = sbr.rel target = $region3
    $region8: #{autoencoder_forward.6} parent=1 // loop_exit
      _

// kernel: autoencoder_forward.7
$region0: #{autoencoder_forward.7}
  #allocation0 [shape = 'u32[]', space=smem, size = 0x4, offset = 0x4, fixed_abs, tag = 'smem constant byte address 0x4 - core index']
  #allocation1 [shape = 'u32[144,128]{1,0:T(1,128)}', space=vmem, size = 0x12000, scoped, tag = 'internal scratch']
  %s0 = inlined_call_operand.vmem [shape: f32[32,256], index: 0, kind: input, shape index: {}]
  %s1 = inlined_call_operand.vmem [shape: f32[256,128], index: 1, kind: input, shape index: {}]
  %s2 = inlined_call_operand.vmem [shape: f32[32,1], index: 2, kind: input, shape index: {}]
  %s3 = inlined_call_operand.vmem [shape: f32[32,128], index: 3, kind: output, shape index: {}]
  %s4 = sld [smem:[#allocation0]]
  $region22: #{autoencoder_forward.7} parent=0
    _
  %s6 = ssub.s32 1, %s4
  %s7 = scalar_select 0, %s6, %s4
  // Predicated region
  $region2: #{autoencoder_forward.7} parent=0 // pred_check
    _
  $region3: #{autoencoder_forward.7} parent=0 // pred_check_branch
    %9 = sbr.rel (0) target = $region5
  $region4: #{autoencoder_forward.7} parent=0 // pred_region
    _
  $region5: #{autoencoder_forward.7} parent=0 // pred_fallthru
    _
  // Predicated region
  $region6: #{autoencoder_forward.7} parent=0 // pred_check
    _
  $region7: #{autoencoder_forward.7} parent=0 // pred_check_branch
    %11 = sbr.rel (0) target = $region9
  $region8: #{autoencoder_forward.7} parent=0 // pred_region
    _
  $region9: #{autoencoder_forward.7} parent=0 // pred_fallthru
    _
  // Predicated region
  $region10: #{autoencoder_forward.7} parent=0 // pred_check
    _
  $region11: #{autoencoder_forward.7} parent=0 // pred_check_branch
    %13 = sbr.rel (0) target = $region13
  $region12: #{autoencoder_forward.7} parent=0 // pred_region
    _
  $region13: #{autoencoder_forward.7} parent=0 // pred_fallthru
    _
  %v14 = vld [vmem:[%s0] sm:$0xff]
  %v15 = vld [vmem:[%s0 + $0x8] sm:$0xff]
  %v16 = vld [vmem:[%s0 + $0x10] sm:$0xff]
  %v17 = vld [vmem:[%s0 + $0x18] sm:$0xff]
  %v18 = vld [vmem:[%s0 + $0x20] sm:$0xff]
  %v19 = vld [vmem:[%s0 + $0x28] sm:$0xff]
  %v20 = vld [vmem:[%s0 + $0x30] sm:$0xff]
  %v21 = vld [vmem:[%s0 + $0x38] sm:$0xff]
  %v22 = vld [vmem:[%s1] sm:$0xff]
  %v23 = vld [vmem:[%s1 + $0x8] sm:$0xff]
  %v24 = vld [vmem:[%s1 + $0x10] sm:$0xff]
  %v25 = vld [vmem:[%s1 + $0x18] sm:$0xff]
  %v26 = vld [vmem:[%s1 + $0x20] sm:$0xff]
  %v27 = vld [vmem:[%s1 + $0x28] sm:$0xff]
  %v28 = vld [vmem:[%s1 + $0x30] sm:$0xff]
  %v29 = vld [vmem:[%s1 + $0x38] sm:$0xff]
  %v30 = vld [vmem:[%s1 + $0x40] sm:$0xff]
  %v31 = vld [vmem:[%s1 + $0x48] sm:$0xff]
  %v32 = vld [vmem:[%s1 + $0x50] sm:$0xff]
  %v33 = vld [vmem:[%s1 + $0x58] sm:$0xff]
  %v34 = vld [vmem:[%s1 + $0x60] sm:$0xff]
  %v35 = vld [vmem:[%s1 + $0x68] sm:$0xff]
  %v36 = vld [vmem:[%s1 + $0x70] sm:$0xff]
  %v37 = vld [vmem:[%s1 + $0x78] sm:$0xff]
  %v38 = vld [vmem:[%s1 + $0x80] sm:$0xff]
  %v39 = vld [vmem:[%s1 + $0x88] sm:$0xff]
  %v40 = vld [vmem:[%s1 + $0x90] sm:$0xff]
  %v41 = vld [vmem:[%s1 + $0x98] sm:$0xff]
  %v42 = vld [vmem:[%s1 + $0xa0] sm:$0xff]
  %v43 = vld [vmem:[%s1 + $0xa8] sm:$0xff]
  %v44 = vld [vmem:[%s1 + $0xb0] sm:$0xff]
  %v45 = vld [vmem:[%s1 + $0xb8] sm:$0xff]
  %v46 = vld [vmem:[%s1 + $0xc0] sm:$0xff]
  %v47 = vld [vmem:[%s1 + $0xc8] sm:$0xff]
  %v48 = vld [vmem:[%s1 + $0xd0] sm:$0xff]
  %v49 = vld [vmem:[%s1 + $0xd8] sm:$0xff]
  %v50 = vld [vmem:[%s1 + $0xe0] sm:$0xff]
  %v51 = vld [vmem:[%s1 + $0xe8] sm:$0xff]
  %v52 = vld [vmem:[%s1 + $0xf0] sm:$0xff]
  %v53 = vld [vmem:[%s1 + $0xf8] sm:$0xff]
  %v54 = vld [vmem:[%s2] sm:$0xff]
  %v55 = vld [vmem:[%s2 + $0x8] sm:$0xff]
  %v56 = vld [vmem:[%s2 + $0x10] sm:$0xff]
  %v57 = vld [vmem:[%s2 + $0x18] sm:$0xff]
  %59 = vset.pattern.permute.xlu0 0
  %60 = vperm.xlu0 %59, %v54
  %v61 = vpop.permute.xlu0 %60
  %64 = vset.pattern.permute.xlu0 0
  %65 = vperm.xlu0 %64, %v55
  %v66 = vpop.permute.xlu0 %65
  %69 = vset.pattern.permute.xlu0 0
  %70 = vperm.xlu0 %69, %v56
  %v71 = vpop.permute.xlu0 %70
  %74 = vset.pattern.permute.xlu0 0
  %75 = vperm.xlu0 %74, %v57
  %v76 = vpop.permute.xlu0 %75
  %78 = vmatprep.subr.mxu0 0.0
  %79 = vmatpush1.msra.mxu0 %v37
  %80 = vmatprep.subr.mxu0 0.0
  %81 = vmatpush1.msra.mxu0 %v36
  %82 = vmatprep.subr.mxu0 0.0
  %83 = vmatpush1.msra.mxu0 %v35
  %84 = vmatprep.subr.mxu0 0.0
  %85 = vmatpush1.msra.mxu0 %v34
  %86 = vmatprep.subr.mxu0 0.0
  %87 = vmatpush1.msra.mxu0 %v33
  %88 = vmatprep.subr.mxu0 0.0
  %89 = vmatpush1.msra.mxu0 %v32
  %90 = vmatprep.subr.mxu0 0.0
  %91 = vmatpush1.msra.mxu0 %v31
  %92 = vmatprep.subr.mxu0 0.0
  %93 = vmatpush1.msra.mxu0 %v30
  %94 = vmatprep.subr.mxu0 0.0
  %95 = vmatpush1.msra.mxu0 %v29
  %96 = vmatprep.subr.mxu0 0.0
  %97 = vmatpush1.msra.mxu0 %v28
  %98 = vmatprep.subr.mxu0 0.0
  %99 = vmatpush1.msra.mxu0 %v27
  %100 = vmatprep.subr.mxu0 0.0
  %101 = vmatpush1.msra.mxu0 %v26
  %102 = vmatprep.subr.mxu0 0.0
  %103 = vmatpush1.msra.mxu0 %v25
  %104 = vmatprep.subr.mxu0 0.0
  %105 = vmatpush1.msra.mxu0 %v24
  %106 = vmatprep.subr.mxu0 0.0
  %107 = vmatpush1.msra.mxu0 %v23
  %108 = vmatprep.subr.mxu0 0.0
  %109 = vmatpush1.msra.mxu0 %v22
  %110 = vmatprep.subr.mxu0 0.0
  %111 = vmatpush2.msra.mxu0 %v53
  %112 = vmatprep.subr.mxu0 0.0
  %113 = vmatpush2.msra.mxu0 %v52
  %114 = vmatprep.subr.mxu0 0.0
  %115 = vmatpush2.msra.mxu0 %v51
  %116 = vmatprep.subr.mxu0 0.0
  %117 = vmatpush2.msra.mxu0 %v50
  %118 = vmatprep.subr.mxu0 0.0
  %119 = vmatpush2.msra.mxu0 %v49
  %120 = vmatprep.subr.mxu0 0.0
  %121 = vmatpush2.msra.mxu0 %v48
  %122 = vmatprep.subr.mxu0 0.0
  %123 = vmatpush2.msra.mxu0 %v47
  %124 = vmatprep.subr.mxu0 0.0
  %125 = vmatpush2.msra.mxu0 %v46
  %126 = vmatprep.subr.mxu0 0.0
  %127 = vmatpush2.msra.mxu0 %v45
  %128 = vmatprep.subr.mxu0 0.0
  %129 = vmatpush2.msra.mxu0 %v44
  %130 = vmatprep.subr.mxu0 0.0
  %131 = vmatpush2.msra.mxu0 %v43
  %132 = vmatprep.subr.mxu0 0.0
  %133 = vmatpush2.msra.mxu0 %v42
  %134 = vmatprep.subr.mxu0 0.0
  %135 = vmatpush2.msra.mxu0 %v41
  %136 = vmatprep.subr.mxu0 0.0
  %137 = vmatpush2.msra.mxu0 %v40
  %138 = vmatprep.subr.mxu0 0.0
  %139 = vmatpush2.msra.mxu0 %v39
  %140 = vmatprep.subr.mxu0 0.0
  %141 = vmatpush2.msra.mxu0 %v38
  %142 = vmatprep.mubr.f32.mxu0 %v15
  %143 = vmatmul.mubr.f32.gmra.mxu0 %v14
  %v144 = vpop.f32.mrf.mxu0
  %v145 = vadd.f32 %v61, %v144
  %v146 = vpop.f32.mrf.mxu0
  %147 = vmatprep.mubr.f32.mxu0 %v17
  %148 = vmatmul.mubr.f32.gmra.mxu0 %v16
  %v149 = vpop.f32.mrf.mxu0
  %v150 = vadd.f32 %v66, %v149
  %v151 = vpop.f32.mrf.mxu0
  %152 = vmatprep.mubr.f32.mxu0 %v19
  %153 = vmatmul.mubr.f32.gmra.mxu0 %v18
  %v154 = vpop.f32.mrf.mxu0
  %v155 = vadd.f32 %v71, %v154
  %v156 = vpop.f32.mrf.mxu0
  %157 = vmatprep.mubr.f32.mxu0 %v21
  %158 = vmatmul.mubr.f32.gmra.mxu0 %v20
  %v159 = vpop.f32.mrf.mxu0
  %v160 = vadd.f32 %v76, %v159
  %v161 = vpop.f32.mrf.mxu0
  %162 = vdwg.mxu0
  %v163 = vmax.f32 %v145, 0.0
  %v164 = vmax.f32 %v150, 0.0
  %v165 = vmax.f32 %v155, 0.0
  %v166 = vmax.f32 %v160, 0.0
  %167 = vst [vmem:[%s3] sm:$0xff] %v163
  %168 = vst [vmem:[%s3 + $0x8] sm:$0xff] %v164
  %169 = vst [vmem:[%s3 + $0x10] sm:$0xff] %v165
  %170 = vst [vmem:[%s3 + $0x18] sm:$0xff] %v166
  // Predicated region
  $region14: #{autoencoder_forward.7} parent=0 // pred_check
    _
  $region15: #{autoencoder_forward.7} parent=0 // pred_check_branch
    %172 = sbr.rel (0) target = $region17
  $region16: #{autoencoder_forward.7} parent=0 // pred_region
    _
  $region17: #{autoencoder_forward.7} parent=0 // pred_fallthru
    _
  // Predicated region
  $region18: #{autoencoder_forward.7} parent=0 // pred_check
    _
  $region19: #{autoencoder_forward.7} parent=0 // pred_check_branch
    %174 = sbr.rel (0) target = $region21
  $region20: #{autoencoder_forward.7} parent=0 // pred_region
    _
  $region21: #{autoencoder_forward.7} parent=0 // pred_fallthru
    _

// kernel: autoencoder_forward.8
$region0: #{autoencoder_forward.8}
  #allocation0 [shape = 'u32[]', space=smem, size = 0x4, offset = 0x4, fixed_abs, tag = 'smem constant byte address 0x4 - core index']
  #allocation1 [shape = 'u32[144,128]{1,0:T(1,128)}', space=vmem, size = 0x12000, scoped, tag = 'internal scratch']
  %s0 = inlined_call_operand.vmem [shape: f32[64,384], index: 0, kind: input, shape index: {}]
  %s1 = inlined_call_operand.vmem [shape: f32[384,128], index: 1, kind: input, shape index: {}]
  %s2 = inlined_call_operand.vmem [shape: f32[64,1], index: 2, kind: input, shape index: {}]
  %s3 = inlined_call_operand.vmem [shape: f32[64,128], index: 3, kind: output, shape index: {}]
  %s4 = sld [smem:[#allocation0]]
  $region22: #{autoencoder_forward.8} parent=0
    _
  %s6 = ssub.s32 1, %s4
  %s7 = scalar_select 0, %s6, %s4
  // Predicated region
  $region2: #{autoencoder_forward.8} parent=0 // pred_check
    _
  $region3: #{autoencoder_forward.8} parent=0 // pred_check_branch
    %9 = sbr.rel (0) target = $region5
  $region4: #{autoencoder_forward.8} parent=0 // pred_region
    _
  $region5: #{autoencoder_forward.8} parent=0 // pred_fallthru
    _
  // Predicated region
  $region6: #{autoencoder_forward.8} parent=0 // pred_check
    _
  $region7: #{autoencoder_forward.8} parent=0 // pred_check_branch
    %11 = sbr.rel (0) target = $region9
  $region8: #{autoencoder_forward.8} parent=0 // pred_region
    _
  $region9: #{autoencoder_forward.8} parent=0 // pred_fallthru
    _
  // Predicated region
  $region10: #{autoencoder_forward.8} parent=0 // pred_check
    _
  $region11: #{autoencoder_forward.8} parent=0 // pred_check_branch
    %13 = sbr.rel (0) target = $region13
  $region12: #{autoencoder_forward.8} parent=0 // pred_region
    _
  $region13: #{autoencoder_forward.8} parent=0 // pred_fallthru
    _
  %v14 = vld [vmem:[%s0] sm:$0xff]
  %v15 = vld [vmem:[%s0 + $0x8] sm:$0xff]
  %v16 = vld [vmem:[%s0 + $0x10] sm:$0xff]
  %v17 = vld [vmem:[%s0 + $0x18] sm:$0xff]
  %v18 = vld [vmem:[%s0 + $0x20] sm:$0xff]
  %v19 = vld [vmem:[%s0 + $0x28] sm:$0xff]
  %v20 = vld [vmem:[%s0 + $0x30] sm:$0xff]
  %v21 = vld [vmem:[%s0 + $0x38] sm:$0xff]
  %v22 = vld [vmem:[%s0 + $0x40] sm:$0xff]
  %v23 = vld [vmem:[%s0 + $0x48] sm:$0xff]
  %v24 = vld [vmem:[%s0 + $0x50] sm:$0xff]
  %v25 = vld [vmem:[%s0 + $0x58] sm:$0xff]
  %v26 = vld [vmem:[%s0 + $0x60] sm:$0xff]
  %v27 = vld [vmem:[%s0 + $0x68] sm:$0xff]
  %v28 = vld [vmem:[%s0 + $0x70] sm:$0xff]
  %v29 = vld [vmem:[%s0 + $0x78] sm:$0xff]
  %v30 = vld [vmem:[%s0 + $0x80] sm:$0xff]
  %v31 = vld [vmem:[%s0 + $0x88] sm:$0xff]
  %v32 = vld [vmem:[%s0 + $0x90] sm:$0xff]
  %v33 = vld [vmem:[%s0 + $0x98] sm:$0xff]
  %v34 = vld [vmem:[%s0 + $0xa0] sm:$0xff]
  %v35 = vld [vmem:[%s0 + $0xa8] sm:$0xff]
  %v36 = vld [vmem:[%s0 + $0xb0] sm:$0xff]
  %v37 = vld [vmem:[%s0 + $0xb8] sm:$0xff]
  %v38 = vld [vmem:[%s1] sm:$0xff]
  %v39 = vld [vmem:[%s1 + $0x8] sm:$0xff]
  %v40 = vld [vmem:[%s1 + $0x10] sm:$0xff]
  %v41 = vld [vmem:[%s1 + $0x18] sm:$0xff]
  %v42 = vld [vmem:[%s1 + $0x20] sm:$0xff]
  %v43 = vld [vmem:[%s1 + $0x28] sm:$0xff]
  %v44 = vld [vmem:[%s1 + $0x30] sm:$0xff]
  %v45 = vld [vmem:[%s1 + $0x38] sm:$0xff]
  %v46 = vld [vmem:[%s1 + $0x40] sm:$0xff]
  %v47 = vld [vmem:[%s1 + $0x48] sm:$0xff]
  %v48 = vld [vmem:[%s1 + $0x50] sm:$0xff]
  %v49 = vld [vmem:[%s1 + $0x58] sm:$0xff]
  %v50 = vld [vmem:[%s1 + $0x60] sm:$0xff]
  %v51 = vld [vmem:[%s1 + $0x68] sm:$0xff]
  %v52 = vld [vmem:[%s1 + $0x70] sm:$0xff]
  %v53 = vld [vmem:[%s1 + $0x78] sm:$0xff]
  %v54 = vld [vmem:[%s1 + $0x80] sm:$0xff]
  %v55 = vld [vmem:[%s1 + $0x88] sm:$0xff]
  %v56 = vld [vmem:[%s1 + $0x90] sm:$0xff]
  %v57 = vld [vmem:[%s1 + $0x98] sm:$0xff]
  %v58 = vld [vmem:[%s1 + $0xa0] sm:$0xff]
  %v59 = vld [vmem:[%s1 + $0xa8] sm:$0xff]
  %v60 = vld [vmem:[%s1 + $0xb0] sm:$0xff]
  %v61 = vld [vmem:[%s1 + $0xb8] sm:$0xff]
  %v62 = vld [vmem:[%s1 + $0xc0] sm:$0xff]
  %v63 = vld [vmem:[%s1 + $0xc8] sm:$0xff]
  %v64 = vld [vmem:[%s1 + $0xd0] sm:$0xff]
  %v65 = vld [vmem:[%s1 + $0xd8] sm:$0xff]
  %v66 = vld [vmem:[%s1 + $0xe0] sm:$0xff]
  %v67 = vld [vmem:[%s1 + $0xe8] sm:$0xff]
  %v68 = vld [vmem:[%s1 + $0xf0] sm:$0xff]
  %v69 = vld [vmem:[%s1 + $0xf8] sm:$0xff]
  %v70 = vld [vmem:[%s1 + $0x100] sm:$0xff]
  %v71 = vld [vmem:[%s1 + $0x108] sm:$0xff]
  %v72 = vld [vmem:[%s1 + $0x110] sm:$0xff]
  %v73 = vld [vmem:[%s1 + $0x118] sm:$0xff]
  %v74 = vld [vmem:[%s1 + $0x120] sm:$0xff]
  %v75 = vld [vmem:[%s1 + $0x128] sm:$0xff]
  %v76 = vld [vmem:[%s1 + $0x130] sm:$0xff]
  %v77 = vld [vmem:[%s1 + $0x138] sm:$0xff]
  %v78 = vld [vmem:[%s1 + $0x140] sm:$0xff]
  %v79 = vld [vmem:[%s1 + $0x148] sm:$0xff]
  %v80 = vld [vmem:[%s1 + $0x150] sm:$0xff]
  %v81 = vld [vmem:[%s1 + $0x158] sm:$0xff]
  %v82 = vld [vmem:[%s1 + $0x160] sm:$0xff]
  %v83 = vld [vmem:[%s1 + $0x168] sm:$0xff]
  %v84 = vld [vmem:[%s1 + $0x170] sm:$0xff]
  %v85 = vld [vmem:[%s1 + $0x178] sm:$0xff]
  %v86 = vld [vmem:[%s2] sm:$0xff]
  %v87 = vld [vmem:[%s2 + $0x8] sm:$0xff]
  %v88 = vld [vmem:[%s2 + $0x10] sm:$0xff]
  %v89 = vld [vmem:[%s2 + $0x18] sm:$0xff]
  %v90 = vld [vmem:[%s2 + $0x20] sm:$0xff]
  %v91 = vld [vmem:[%s2 + $0x28] sm:$0xff]
  %v92 = vld [vmem:[%s2 + $0x30] sm:$0xff]
  %v93 = vld [vmem:[%s2 + $0x38] sm:$0xff]
  %95 = vset.pattern.permute.xlu0 0
  %96 = vperm.xlu0 %95, %v86
  %v97 = vpop.permute.xlu0 %96
  %100 = vset.pattern.permute.xlu0 0
  %101 = vperm.xlu0 %100, %v87
  %v102 = vpop.permute.xlu0 %101
  %105 = vset.pattern.permute.xlu0 0
  %106 = vperm.xlu0 %105, %v88
  %v107 = vpop.permute.xlu0 %106
  %110 = vset.pattern.permute.xlu0 0
  %111 = vperm.xlu0 %110, %v89
  %v112 = vpop.permute.xlu0 %111
  %115 = vset.pattern.permute.xlu0 0
  %116 = vperm.xlu0 %115, %v90
  %v117 = vpop.permute.xlu0 %116
  %120 = vset.pattern.permute.xlu0 0
  %121 = vperm.xlu0 %120, %v91
  %v122 = vpop.permute.xlu0 %121
  %125 = vset.pattern.permute.xlu0 0
  %126 = vperm.xlu0 %125, %v92
  %v127 = vpop.permute.xlu0 %126
  %130 = vset.pattern.permute.xlu0 0
  %131 = vperm.xlu0 %130, %v93
  %v132 = vpop.permute.xlu0 %131
  %134 = vmatprep.subr.mxu0 0.0
  %135 = vmatpush1.msra.mxu0 %v53
  %136 = vmatprep.subr.mxu0 0.0
  %137 = vmatpush1.msra.mxu0 %v52
  %138 = vmatprep.subr.mxu0 0.0
  %139 = vmatpush1.msra.mxu0 %v51
  %140 = vmatprep.subr.mxu0 0.0
  %141 = vmatpush1.msra.mxu0 %v50
  %142 = vmatprep.subr.mxu0 0.0
  %143 = vmatpush1.msra.mxu0 %v49
  %144 = vmatprep.subr.mxu0 0.0
  %145 = vmatpush1.msra.mxu0 %v48
  %146 = vmatprep.subr.mxu0 0.0
  %147 = vmatpush1.msra.mxu0 %v47
  %148 = vmatprep.subr.mxu0 0.0
  %149 = vmatpush1.msra.mxu0 %v46
  %150 = vmatprep.subr.mxu0 0.0
  %151 = vmatpush1.msra.mxu0 %v45
  %152 = vmatprep.subr.mxu0 0.0
  %153 = vmatpush1.msra.mxu0 %v44
  %154 = vmatprep.subr.mxu0 0.0
  %155 = vmatpush1.msra.mxu0 %v43
  %156 = vmatprep.subr.mxu0 0.0
  %157 = vmatpush1.msra.mxu0 %v42
  %158 = vmatprep.subr.mxu0 0.0
  %159 = vmatpush1.msra.mxu0 %v41
  %160 = vmatprep.subr.mxu0 0.0
  %161 = vmatpush1.msra.mxu0 %v40
  %162 = vmatprep.subr.mxu0 0.0
  %163 = vmatpush1.msra.mxu0 %v39
  %164 = vmatprep.subr.mxu0 0.0
  %165 = vmatpush1.msra.mxu0 %v38
  %166 = vmatprep.subr.mxu0 0.0
  %167 = vmatpush2.msra.mxu0 %v69
  %168 = vmatprep.subr.mxu0 0.0
  %169 = vmatpush2.msra.mxu0 %v68
  %170 = vmatprep.subr.mxu0 0.0
  %171 = vmatpush2.msra.mxu0 %v67
  %172 = vmatprep.subr.mxu0 0.0
  %173 = vmatpush2.msra.mxu0 %v66
  %174 = vmatprep.subr.mxu0 0.0
  %175 = vmatpush2.msra.mxu0 %v65
  %176 = vmatprep.subr.mxu0 0.0
  %177 = vmatpush2.msra.mxu0 %v64
  %178 = vmatprep.subr.mxu0 0.0
  %179 = vmatpush2.msra.mxu0 %v63
  %180 = vmatprep.subr.mxu0 0.0
  %181 = vmatpush2.msra.mxu0 %v62
  %182 = vmatprep.subr.mxu0 0.0
  %183 = vmatpush2.msra.mxu0 %v61
  %184 = vmatprep.subr.mxu0 0.0
  %185 = vmatpush2.msra.mxu0 %v60
  %186 = vmatprep.subr.mxu0 0.0
  %187 = vmatpush2.msra.mxu0 %v59
  %188 = vmatprep.subr.mxu0 0.0
  %189 = vmatpush2.msra.mxu0 %v58
  %190 = vmatprep.subr.mxu0 0.0
  %191 = vmatpush2.msra.mxu0 %v57
  %192 = vmatprep.subr.mxu0 0.0
  %193 = vmatpush2.msra.mxu0 %v56
  %194 = vmatprep.subr.mxu0 0.0
  %195 = vmatpush2.msra.mxu0 %v55
  %196 = vmatprep.subr.mxu0 0.0
  %197 = vmatpush2.msra.mxu0 %v54
  %198 = vmatprep.mubr.f32.mxu0 %v15
  %199 = vmatmul.mubr.f32.gmra.mxu0 %v14
  %v200 = vpop.f32.mrf.mxu0
  %v201 = vadd.f32 %v97, %v200
  %v202 = vpop.f32.mrf.mxu0
  %203 = vmatprep.mubr.f32.mxu0 %v18
  %204 = vmatmul.mubr.f32.gmra.mxu0 %v17
  %v205 = vpop.f32.mrf.mxu0
  %v206 = vadd.f32 %v102, %v205
  %v207 = vpop.f32.mrf.mxu0
  %208 = vmatprep.mubr.f32.mxu0 %v21
  %209 = vmatmul.mubr.f32.gmra.mxu0 %v20
  %v210 = vpop.f32.mrf.mxu0
  %v211 = vadd.f32 %v107, %v210
  %v212 = vpop.f32.mrf.mxu0
  %213 = vmatprep.mubr.f32.mxu0 %v24
  %214 = vmatmul.mubr.f32.gmra.mxu0 %v23
  %v215 = vpop.f32.mrf.mxu0
  %v216 = vadd.f32 %v112, %v215
  %v217 = vpop.f32.mrf.mxu0
  %218 = vmatprep.mubr.f32.mxu0 %v27
  %219 = vmatmul.mubr.f32.gmra.mxu0 %v26
  %v220 = vpop.f32.mrf.mxu0
  %v221 = vadd.f32 %v117, %v220
  %v222 = vpop.f32.mrf.mxu0
  %223 = vmatprep.mubr.f32.mxu0 %v30
  %224 = vmatmul.mubr.f32.gmra.mxu0 %v29
  %v225 = vpop.f32.mrf.mxu0
  %v226 = vadd.f32 %v122, %v225
  %v227 = vpop.f32.mrf.mxu0
  %228 = vmatprep.mubr.f32.mxu0 %v33
  %229 = vmatmul.mubr.f32.gmra.mxu0 %v32
  %v230 = vpop.f32.mrf.mxu0
  %v231 = vadd.f32 %v127, %v230
  %v232 = vpop.f32.mrf.mxu0
  %233 = vmatprep.mubr.f32.mxu0 %v36
  %234 = vmatmul.mubr.f32.gmra.mxu0 %v35
  %v235 = vpop.f32.mrf.mxu0
  %v236 = vadd.f32 %v132, %v235
  %v237 = vpop.f32.mrf.mxu0
  %238 = vdwg.mxu0
  %239 = vmatprep.subr.mxu0 0.0
  %240 = vmatpush1.msra.mxu0 %v85
  %241 = vmatprep.subr.mxu0 0.0
  %242 = vmatpush1.msra.mxu0 %v84
  %243 = vmatprep.subr.mxu0 0.0
  %244 = vmatpush1.msra.mxu0 %v83
  %245 = vmatprep.subr.mxu0 0.0
  %246 = vmatpush1.msra.mxu0 %v82
  %247 = vmatprep.subr.mxu0 0.0
  %248 = vmatpush1.msra.mxu0 %v81
  %249 = vmatprep.subr.mxu0 0.0
  %250 = vmatpush1.msra.mxu0 %v80
  %251 = vmatprep.subr.mxu0 0.0
  %252 = vmatpush1.msra.mxu0 %v79
  %253 = vmatprep.subr.mxu0 0.0
  %254 = vmatpush1.msra.mxu0 %v78
  %255 = vmatprep.subr.mxu0 0.0
  %256 = vmatpush1.msra.mxu0 %v77
  %257 = vmatprep.subr.mxu0 0.0
  %258 = vmatpush1.msra.mxu0 %v76
  %259 = vmatprep.subr.mxu0 0.0
  %260 = vmatpush1.msra.mxu0 %v75
  %261 = vmatprep.subr.mxu0 0.0
  %262 = vmatpush1.msra.mxu0 %v74
  %263 = vmatprep.subr.mxu0 0.0
  %264 = vmatpush1.msra.mxu0 %v73
  %265 = vmatprep.subr.mxu0 0.0
  %266 = vmatpush1.msra.mxu0 %v72
  %267 = vmatprep.subr.mxu0 0.0
  %268 = vmatpush1.msra.mxu0 %v71
  %269 = vmatprep.subr.mxu0 0.0
  %270 = vmatpush1.msra.mxu0 %v70
  %271 = vmatprep.subr.mxu0 0.0
  %272 = vmatpush2.msra.mxu0 0.0
  %273 = vmatprep.subr.mxu0 0.0
  %274 = vmatpush2.msra.mxu0 0.0
  %275 = vmatprep.subr.mxu0 0.0
  %276 = vmatpush2.msra.mxu0 0.0
  %277 = vmatprep.subr.mxu0 0.0
  %278 = vmatpush2.msra.mxu0 0.0
  %279 = vmatprep.subr.mxu0 0.0
  %280 = vmatpush2.msra.mxu0 0.0
  %281 = vmatprep.subr.mxu0 0.0
  %282 = vmatpush2.msra.mxu0 0.0
  %283 = vmatprep.subr.mxu0 0.0
  %284 = vmatpush2.msra.mxu0 0.0
  %285 = vmatprep.subr.mxu0 0.0
  %286 = vmatpush2.msra.mxu0 0.0
  %287 = vmatprep.subr.mxu0 0.0
  %288 = vmatpush2.msra.mxu0 0.0
  %289 = vmatprep.subr.mxu0 0.0
  %290 = vmatpush2.msra.mxu0 0.0
  %291 = vmatprep.subr.mxu0 0.0
  %292 = vmatpush2.msra.mxu0 0.0
  %293 = vmatprep.subr.mxu0 0.0
  %294 = vmatpush2.msra.mxu0 0.0
  %295 = vmatprep.subr.mxu0 0.0
  %296 = vmatpush2.msra.mxu0 0.0
  %297 = vmatprep.subr.mxu0 0.0
  %298 = vmatpush2.msra.mxu0 0.0
  %299 = vmatprep.subr.mxu0 0.0
  %300 = vmatpush2.msra.mxu0 0.0
  %301 = vmatprep.subr.mxu0 0.0
  %302 = vmatpush2.msra.mxu0 0.0
  %303 = vmatprep.mubr.f32.mxu0 0.0
  %304 = vmatmul.mubr.f32.gmra.mxu0 %v16
  %v305 = vpop.f32.mrf.mxu0
  %v306 = vadd.f32 %v201, %v305
  %v307 = vpop.f32.mrf.mxu0
  %308 = vmatprep.mubr.f32.mxu0 0.0
  %309 = vmatmul.mubr.f32.gmra.mxu0 %v19
  %v310 = vpop.f32.mrf.mxu0
  %v311 = vadd.f32 %v206, %v310
  %v312 = vpop.f32.mrf.mxu0
  %313 = vmatprep.mubr.f32.mxu0 0.0
  %314 = vmatmul.mubr.f32.gmra.mxu0 %v22
  %v315 = vpop.f32.mrf.mxu0
  %v316 = vadd.f32 %v211, %v315
  %v317 = vpop.f32.mrf.mxu0
  %318 = vmatprep.mubr.f32.mxu0 0.0
  %319 = vmatmul.mubr.f32.gmra.mxu0 %v25
  %v320 = vpop.f32.mrf.mxu0
  %v321 = vadd.f32 %v216, %v320
  %v322 = vpop.f32.mrf.mxu0
  %323 = vmatprep.mubr.f32.mxu0 0.0
  %324 = vmatmul.mubr.f32.gmra.mxu0 %v28
  %v325 = vpop.f32.mrf.mxu0
  %v326 = vadd.f32 %v221, %v325
  %v327 = vpop.f32.mrf.mxu0
  %328 = vmatprep.mubr.f32.mxu0 0.0
  %329 = vmatmul.mubr.f32.gmra.mxu0 %v31
  %v330 = vpop.f32.mrf.mxu0
  %v331 = vadd.f32 %v226, %v330
  %v332 = vpop.f32.mrf.mxu0
  %333 = vmatprep.mubr.f32.mxu0 0.0
  %334 = vmatmul.mubr.f32.gmra.mxu0 %v34
  %v335 = vpop.f32.mrf.mxu0
  %v336 = vadd.f32 %v231, %v335
  %v337 = vpop.f32.mrf.mxu0
  %338 = vmatprep.mubr.f32.mxu0 0.0
  %339 = vmatmul.mubr.f32.gmra.mxu0 %v37
  %v340 = vpop.f32.mrf.mxu0
  %v341 = vadd.f32 %v236, %v340
  %v342 = vpop.f32.mrf.mxu0
  %343 = vdwg.mxu0
  %v344 = vmax.f32 %v306, 0.0
  %v345 = vmax.f32 %v311, 0.0
  %v346 = vmax.f32 %v316, 0.0
  %v347 = vmax.f32 %v321, 0.0
  %v348 = vmax.f32 %v326, 0.0
  %v349 = vmax.f32 %v331, 0.0
  %v350 = vmax.f32 %v336, 0.0
  %v351 = vmax.f32 %v341, 0.0
  %352 = vst [vmem:[%s3] sm:$0xff] %v344
  %353 = vst [vmem:[%s3 + $0x8] sm:$0xff] %v345
  %354 = vst [vmem:[%s3 + $0x10] sm:$0xff] %v346
  %355 = vst [vmem:[%s3 + $0x18] sm:$0xff] %v347
  %356 = vst [vmem:[%s3 + $0x20] sm:$0xff] %v348
  %357 = vst [vmem:[%s3 + $0x28] sm:$0xff] %v349
  %358 = vst [vmem:[%s3 + $0x30] sm:$0xff] %v350
  %359 = vst [vmem:[%s3 + $0x38] sm:$0xff] %v351
  // Predicated region
  $region14: #{autoencoder_forward.8} parent=0 // pred_check
    _
  $region15: #{autoencoder_forward.8} parent=0 // pred_check_branch
    %361 = sbr.rel (0) target = $region17
  $region16: #{autoencoder_forward.8} parent=0 // pred_region
    _
  $region17: #{autoencoder_forward.8} parent=0 // pred_fallthru
    _
  // Predicated region
  $region18: #{autoencoder_forward.8} parent=0 // pred_check
    _
  $region19: #{autoencoder_forward.8} parent=0 // pred_check_branch
    %363 = sbr.rel (0) target = $region21
  $region20: #{autoencoder_forward.8} parent=0 // pred_region
    _
  $region21: #{autoencoder_forward.8} parent=0 // pred_fallthru
    _

// kernel: tile.12
$region0: #{tile.12}
  #allocation0 [shape = 's32[1]{0}', space=sflag, size = 0x4, scoped, tag = 'scoped memory for tile.12']
  %s0 = inlined_call_operand.vmem [shape: f32[16], index: 0, kind: input, shape index: {}]
  %s1 = inlined_call_operand.vmem [shape: f32[4,16], index: 1, kind: output, shape index: {}]
  // Predicated region
  $region2: #{tile.12} parent=0 // pred_check
    _
  $region3: #{tile.12} parent=0 // pred_check_branch
    %3 = sbr.rel (0) target = $region5
  $region4: #{tile.12} parent=0 // pred_region
    _
  $region5: #{tile.12} parent=0 // pred_fallthru
    _
  %v4 = vld [vmem:[%s0] ss:$0 sm:$0xff]
  %5 = vst [vmem:[%s1] sm:$0xf] %v4

// kernel: tile.0
$region0: #{tile.0}
  %s0 = inlined_call_operand.vmem [shape: f32[4,16], index: 0, kind: input, shape index: {}]
  %s1 = inlined_call_operand.vmem [shape: f32[64,1], index: 1, kind: output, shape index: {}]
  $region1: #{tile.0} parent=0
    #allocation0 [shape = 'u8[4096]{0}', space=vmem, size = 0x1000, scoped, tag = 'scoped mem for input reshape']
    %s3 = sshll.u32 1, 4
    %s4 = ssub.s32 %s3, 1
    %v5 = vld [vmem:[%s0] sm:%s4]
    %6 = vst [vmem:[#allocation0] sm:%s4] %v5
    %v7 = vld [vmem:[#allocation0] sm:$0xf]
    %vm8 = vcmask 7168
    %9 = vst.msk [vmem:[%s1] ss:$16 sm:$0x3] %vm8, %v7
    %10 = vst.msk [vmem:[%s1] ss:$16 sm:$0xc] %vm8, %v7
    %v11 = vld [vmem:[#allocation0] sm:$0xf]
    %12 = vrot.lane.b32.xlu0 %v11, 127
    %v13 = vpop.permute.xlu0 %12
    %vm14 = vcmask 7168
    %s15 = scalar_lea.vmem %s1, 1
    %16 = vst.msk [vmem:[%s15] ss:$16 sm:$0x3] %vm14, %v13
    %s17 = scalar_lea.vmem %s1, 1
    %18 = vst.msk [vmem:[%s17] ss:$16 sm:$0xc] %vm14, %v13
    %v19 = vld [vmem:[#allocation0] sm:$0xf]
    %20 = vrot.lane.b32.xlu0 %v19, 126
    %v21 = vpop.permute.xlu0 %20
    %vm22 = vcmask 7168
    %s23 = scalar_lea.vmem %s1, 2
    %24 = vst.msk [vmem:[%s23] ss:$16 sm:$0x3] %vm22, %v21
    %s25 = scalar_lea.vmem %s1, 2
    %26 = vst.msk [vmem:[%s25] ss:$16 sm:$0xc] %vm22, %v21
    %v27 = vld [vmem:[#allocation0] sm:$0xf]
    %28 = vrot.lane.b32.xlu0 %v27, 125
    %v29 = vpop.permute.xlu0 %28
    %vm30 = vcmask 7168
    %s31 = scalar_lea.vmem %s1, 3
    %32 = vst.msk [vmem:[%s31] ss:$16 sm:$0x3] %vm30, %v29
    %s33 = scalar_lea.vmem %s1, 3
    %34 = vst.msk [vmem:[%s33] ss:$16 sm:$0xc] %vm30, %v29
    %v35 = vld [vmem:[#allocation0] sm:$0xf]
    %36 = vrot.lane.b32.xlu0 %v35, 124
    %v37 = vpop.permute.xlu0 %36
    %vm38 = vcmask 7168
    %s39 = scalar_lea.vmem %s1, 4
    %40 = vst.msk [vmem:[%s39] ss:$16 sm:$0x3] %vm38, %v37
    %s41 = scalar_lea.vmem %s1, 4
    %42 = vst.msk [vmem:[%s41] ss:$16 sm:$0xc] %vm38, %v37
    %v43 = vld [vmem:[#allocation0] sm:$0xf]
    %44 = vrot.lane.b32.xlu0 %v43, 123
    %v45 = vpop.permute.xlu0 %44
    %vm46 = vcmask 7168
    %s47 = scalar_lea.vmem %s1, 5
    %48 = vst.msk [vmem:[%s47] ss:$16 sm:$0x3] %vm46, %v45
    %s49 = scalar_lea.vmem %s1, 5
    %50 = vst.msk [vmem:[%s49] ss:$16 sm:$0xc] %vm46, %v45
    %v51 = vld [vmem:[#allocation0] sm:$0xf]
    %52 = vrot.lane.b32.xlu0 %v51, 122
    %v53 = vpop.permute.xlu0 %52
    %vm54 = vcmask 7168
    %s55 = scalar_lea.vmem %s1, 6
    %56 = vst.msk [vmem:[%s55] ss:$16 sm:$0x3] %vm54, %v53
    %s57 = scalar_lea.vmem %s1, 6
    %58 = vst.msk [vmem:[%s57] ss:$16 sm:$0xc] %vm54, %v53
    %v59 = vld [vmem:[#allocation0] sm:$0xf]
    %60 = vrot.lane.b32.xlu0 %v59, 121
    %v61 = vpop.permute.xlu0 %60
    %vm62 = vcmask 7168
    %s63 = scalar_lea.vmem %s1, 7
    %64 = vst.msk [vmem:[%s63] ss:$16 sm:$0x3] %vm62, %v61
    %s65 = scalar_lea.vmem %s1, 7
    %66 = vst.msk [vmem:[%s65] ss:$16 sm:$0xc] %vm62, %v61
    %v67 = vld [vmem:[#allocation0] sm:$0xf]
    %68 = vrot.lane.b32.xlu0 %v67, 120
    %v69 = vpop.permute.xlu0 %68
    %vm70 = vcmask 7168
    %s71 = scalar_lea.vmem %s1, 8
    %72 = vst.msk [vmem:[%s71] ss:$16 sm:$0x3] %vm70, %v69
    %s73 = scalar_lea.vmem %s1, 8
    %74 = vst.msk [vmem:[%s73] ss:$16 sm:$0xc] %vm70, %v69
    %v75 = vld [vmem:[#allocation0] sm:$0xf]
    %76 = vrot.lane.b32.xlu0 %v75, 119
    %v77 = vpop.permute.xlu0 %76
    %vm78 = vcmask 7168
    %s79 = scalar_lea.vmem %s1, 9
    %80 = vst.msk [vmem:[%s79] ss:$16 sm:$0x3] %vm78, %v77
    %s81 = scalar_lea.vmem %s1, 9
    %82 = vst.msk [vmem:[%s81] ss:$16 sm:$0xc] %vm78, %v77
    %v83 = vld [vmem:[#allocation0] sm:$0xf]
    %84 = vrot.lane.b32.xlu0 %v83, 118
    %v85 = vpop.permute.xlu0 %84
    %vm86 = vcmask 7168
    %s87 = scalar_lea.vmem %s1, 10
    %88 = vst.msk [vmem:[%s87] ss:$16 sm:$0x3] %vm86, %v85
    %s89 = scalar_lea.vmem %s1, 10
    %90 = vst.msk [vmem:[%s89] ss:$16 sm:$0xc] %vm86, %v85
    %v91 = vld [vmem:[#allocation0] sm:$0xf]
    %92 = vrot.lane.b32.xlu0 %v91, 117
    %v93 = vpop.permute.xlu0 %92
    %vm94 = vcmask 7168
    %s95 = scalar_lea.vmem %s1, 11
    %96 = vst.msk [vmem:[%s95] ss:$16 sm:$0x3] %vm94, %v93
    %s97 = scalar_lea.vmem %s1, 11
    %98 = vst.msk [vmem:[%s97] ss:$16 sm:$0xc] %vm94, %v93
    %v99 = vld [vmem:[#allocation0] sm:$0xf]
    %100 = vrot.lane.b32.xlu0 %v99, 116
    %v101 = vpop.permute.xlu0 %100
    %vm102 = vcmask 7168
    %s103 = scalar_lea.vmem %s1, 12
    %104 = vst.msk [vmem:[%s103] ss:$16 sm:$0x3] %vm102, %v101
    %s105 = scalar_lea.vmem %s1, 12
    %106 = vst.msk [vmem:[%s105] ss:$16 sm:$0xc] %vm102, %v101
    %v107 = vld [vmem:[#allocation0] sm:$0xf]
    %108 = vrot.lane.b32.xlu0 %v107, 115
    %v109 = vpop.permute.xlu0 %108
    %vm110 = vcmask 7168
    %s111 = scalar_lea.vmem %s1, 13
    %112 = vst.msk [vmem:[%s111] ss:$16 sm:$0x3] %vm110, %v109
    %s113 = scalar_lea.vmem %s1, 13
    %114 = vst.msk [vmem:[%s113] ss:$16 sm:$0xc] %vm110, %v109
    %v115 = vld [vmem:[#allocation0] sm:$0xf]
    %116 = vrot.lane.b32.xlu0 %v115, 114
    %v117 = vpop.permute.xlu0 %116
    %vm118 = vcmask 7168
    %s119 = scalar_lea.vmem %s1, 14
    %120 = vst.msk [vmem:[%s119] ss:$16 sm:$0x3] %vm118, %v117
    %s121 = scalar_lea.vmem %s1, 14
    %122 = vst.msk [vmem:[%s121] ss:$16 sm:$0xc] %vm118, %v117
    %v123 = vld [vmem:[#allocation0] sm:$0xf]
    %124 = vrot.lane.b32.xlu0 %v123, 113
    %v125 = vpop.permute.xlu0 %124
    %vm126 = vcmask 7168
    %s127 = scalar_lea.vmem %s1, 15
    %128 = vst.msk [vmem:[%s127] ss:$16 sm:$0x3] %vm126, %v125
    %s129 = scalar_lea.vmem %s1, 15
    %130 = vst.msk [vmem:[%s129] ss:$16 sm:$0xc] %vm126, %v125

// kernel: autoencoder_forward.9
$region0: #{autoencoder_forward.9}
  #allocation0 [shape = 'u32[]', space=smem, size = 0x4, offset = 0x4, fixed_abs, tag = 'smem constant byte address 0x4 - core index']
  #allocation1 [shape = 'u32[144,128]{1,0:T(1,128)}', space=vmem, size = 0x12000, scoped, tag = 'internal scratch']
  %s0 = inlined_call_operand.vmem [shape: f32[2,1664], index: 0, kind: input, shape index: {}]
  %s1 = inlined_call_operand.vmem [shape: f32[1664,128], index: 1, kind: input, shape index: {}]
  %s2 = inlined_call_operand.vmem [shape: f32[1,128], index: 2, kind: input, shape index: {}]
  %s3 = inlined_call_operand.vmem [shape: f32[128,1792], index: 3, kind: input, shape index: {}]
  %s4 = inlined_call_operand.vmem [shape: f32[1,1792], index: 4, kind: input, shape index: {}]
  %s5 = inlined_call_operand.vmem [shape: f32[2,1792], index: 5, kind: output, shape index: {}]
  %s6 = sld [smem:[#allocation0]]
  $region76: #{autoencoder_forward.9} parent=0
    _
  %s8 = ssub.s32 1, %s6
  %s9 = scalar_select 0, %s8, %s6
  $region1: #{autoencoder_forward.9} parent=0
    #allocation2 [shape = 'u8[917504]{0}', space=vmem, size = 0xe0000, scoped, tag = 'input window, operand 3']
    loop: start=0, step=1, limit=4
    $region2: #{autoencoder_forward.9} parent=1 // loop_pre_header
      _
    $region3: #{autoencoder_forward.9} parent=1 // loop_header
      %s11 = sphi 0, %s15
      %p12 = scmp.ge.s32.totalorder %s11, 4
      %s19 = sphi 0, %s19
      %s21 = sphi 0, %s19
      %s22 = sphi 0, %s21
      %s36 = sphi 0, %s22
      %s40 = sphi 0, %s40
      %s42 = sphi 0, %s40
      %s43 = sphi 0, %s42
      %s57 = sphi 0, %s43
      %s61 = sphi 0, %s61
      %s63 = sphi 0, %s61
      %s64 = sphi 0, %s63
      %s78 = sphi 0, %s64
      %s84 = sphi 0, %s86
      %s87 = sphi 0, %s84
      %s88 = sphi 0, %s87
      %s104 = sphi 0, %s88
      %s110 = sphi 0, %s112
      %s113 = sphi 0, %s110
      %s114 = sphi 0, %s113
      %s130 = sphi 0, %s114
      %s136 = sphi 0, %s138
      %s139 = sphi 0, %s136
      %s140 = sphi 0, %s139
      %s156 = sphi 0, %s140
    $region4: #{autoencoder_forward.9} parent=1 // loop_header_branch
      %14 = sbr.rel (%p12) target = $region8
    $region5: #{autoencoder_forward.9} parent=1 // loop_body
      %s16 = ssub.s32 %s11, 1
      %s17 = ssub.s32 %s11, 2
      %s18 = sadd.s32 %s11, 1
      %s20 = sadd.s32 %s19, 1
      %p23 = scmp.eq.s32.totalorder %s11, 1
      %p24 = scmp.ne.s32.totalorder %s19, %s21
      %p25 = scmp.eq.s32.totalorder %s11, 0
      %p26 = por %p24, %p25
      %p27 = scmp.ne.s32.totalorder %s19, %s21
      %p28 = scmp.eq.s32.totalorder %s16, 1
      %p29 = por %p27, %p28
      %p30 = scmp.ne.s32.totalorder %s21, %s22
      %p31 = scmp.eq.s32.totalorder %s16, 0
      %p32 = por %p30, %p31
      %p33 = scmp.ne.s32.totalorder %s21, %s22
      %p34 = scmp.eq.s32.totalorder %s17, 1
      %p35 = por %p33, %p34
      %p37 = scmp.ne.s32.totalorder %s22, %s36
      %p38 = scmp.eq.s32.totalorder %s17, 0
      %p39 = por %p37, %p38
      %s41 = sadd.s32 %s40, 1
      %p44 = scmp.eq.s32.totalorder %s11, 1
      %p45 = scmp.ne.s32.totalorder %s40, %s42
      %p46 = scmp.eq.s32.totalorder %s11, 0
      %p47 = por %p45, %p46
      %p48 = scmp.ne.s32.totalorder %s40, %s42
      %p49 = scmp.eq.s32.totalorder %s16, 1
      %p50 = por %p48, %p49
      %p51 = scmp.ne.s32.totalorder %s42, %s43
      %p52 = scmp.eq.s32.totalorder %s16, 0
      %p53 = por %p51, %p52
      %p54 = scmp.ne.s32.totalorder %s42, %s43
      %p55 = scmp.eq.s32.totalorder %s17, 1
      %p56 = por %p54, %p55
      %p58 = scmp.ne.s32.totalorder %s43, %s57
      %p59 = scmp.eq.s32.totalorder %s17, 0
      %p60 = por %p58, %p59
      %s62 = sadd.s32 %s61, 1
      %p65 = scmp.eq.s32.totalorder %s11, 1
      %p66 = scmp.ne.s32.totalorder %s61, %s63
      %p67 = scmp.eq.s32.totalorder %s11, 0
      %p68 = por %p66, %p67
      %p69 = scmp.ne.s32.totalorder %s61, %s63
      %p70 = scmp.eq.s32.totalorder %s16, 1
      %p71 = por %p69, %p70
      %p72 = scmp.ne.s32.totalorder %s63, %s64
      %p73 = scmp.eq.s32.totalorder %s16, 0
      %p74 = por %p72, %p73
      %p75 = scmp.ne.s32.totalorder %s63, %s64
      %p76 = scmp.eq.s32.totalorder %s17, 1
      %p77 = por %p75, %p76
      %p79 = scmp.ne.s32.totalorder %s64, %s78
      %p80 = scmp.eq.s32.totalorder %s17, 0
      %p81 = por %p79, %p80
      %s82 = ssub.s32 %s11, %s18
      %p83 = scmp.eq.s32.totalorder %s82, 0
      %s85 = sadd.s32 %s84, 1
      %s86 = scalar_select %p83, %s84, %s85
      %p89 = pneg %p83
      %p90 = scmp.eq.s32.totalorder %s11, 1
      %p91 = por %p89, %p90
      %p92 = scmp.ne.s32.totalorder %s84, %s87
      %p93 = scmp.eq.s32.totalorder %s11, 0
      %p94 = por %p92, %p93
      %p95 = scmp.ne.s32.totalorder %s84, %s87
      %p96 = scmp.eq.s32.totalorder %s16, 1
      %p97 = por %p95, %p96
      %p98 = scmp.ne.s32.totalorder %s87, %s88
      %p99 = scmp.eq.s32.totalorder %s16, 0
      %p100 = por %p98, %p99
      %p101 = scmp.ne.s32.totalorder %s87, %s88
      %p102 = scmp.eq.s32.totalorder %s17, 1
      %p103 = por %p101, %p102
      %p105 = scmp.ne.s32.totalorder %s88, %s104
      %p106 = scmp.eq.s32.totalorder %s17, 0
      %p107 = por %p105, %p106
      %s108 = ssub.s32 %s11, %s18
      %p109 = scmp.eq.s32.totalorder %s108, 0
      %s111 = sadd.s32 %s110, 1
      %s112 = scalar_select %p109, %s110, %s111
      %p115 = pneg %p109
      %p116 = scmp.eq.s32.totalorder %s11, 1
      %p117 = por %p115, %p116
      %p118 = scmp.ne.s32.totalorder %s110, %s113
      %p119 = scmp.eq.s32.totalorder %s11, 0
      %p120 = por %p118, %p119
      %p121 = scmp.ne.s32.totalorder %s110, %s113
      %p122 = scmp.eq.s32.totalorder %s16, 1
      %p123 = por %p121, %p122
      %p124 = scmp.ne.s32.totalorder %s113, %s114
      %p125 = scmp.eq.s32.totalorder %s16, 0
      %p126 = por %p124, %p125
      %p127 = scmp.ne.s32.totalorder %s113, %s114
      %p128 = scmp.eq.s32.totalorder %s17, 1
      %p129 = por %p127, %p128
      %p131 = scmp.ne.s32.totalorder %s114, %s130
      %p132 = scmp.eq.s32.totalorder %s17, 0
      %p133 = por %p131, %p132
      %s134 = ssub.s32 %s11, %s18
      %p135 = scmp.eq.s32.totalorder %s134, 0
      %s137 = sadd.s32 %s136, 1
      %s138 = scalar_select %p135, %s136, %s137
      %p141 = pneg %p135
      %p142 = scmp.eq.s32.totalorder %s11, 1
      %p143 = por %p141, %p142
      %p144 = scmp.ne.s32.totalorder %s136, %s139
      %p145 = scmp.eq.s32.totalorder %s11, 0
      %p146 = por %p144, %p145
      %p147 = scmp.ne.s32.totalorder %s136, %s139
      %p148 = scmp.eq.s32.totalorder %s16, 1
      %p149 = por %p147, %p148
      %p150 = scmp.ne.s32.totalorder %s139, %s140
      %p151 = scmp.eq.s32.totalorder %s16, 0
      %p152 = por %p150, %p151
      %p153 = scmp.ne.s32.totalorder %s139, %s140
      %p154 = scmp.eq.s32.totalorder %s17, 1
      %p155 = por %p153, %p154
      %p157 = scmp.ne.s32.totalorder %s140, %s156
      %p158 = scmp.eq.s32.totalorder %s17, 0
      %p159 = por %p157, %p158
      %p160 = scmp.le.s32.totalorder 1, %s11
      %p161 = scmp.lt.s32.totalorder %s11, 3
      %p162 = pnand %p160, %p161
      %p163 = pneg %p162
      // Predicated region
      $region9: #{autoencoder_forward.9} parent=5 // pred_check
        _
      $region10: #{autoencoder_forward.9} parent=5 // pred_check_branch
        %165 = sbr.rel (%p162) target = $region12
      $region11: #{autoencoder_forward.9} parent=5 // pred_region
        %s166 = ssub.s32 %s11, 1
        // Predicated region
        $region13: #{autoencoder_forward.9} parent=11 // pred_check
          %p167 = pneg %p32
        $region14: #{autoencoder_forward.9} parent=11 // pred_check_branch
          %169 = sbr.rel (%p167) target = $region16
        $region15: #{autoencoder_forward.9} parent=11 // pred_region
          _
        $region16: #{autoencoder_forward.9} parent=11 // pred_fallthru
          _
        // Predicated region
        $region17: #{autoencoder_forward.9} parent=11 // pred_check
          %p170 = pneg %p53
        $region18: #{autoencoder_forward.9} parent=11 // pred_check_branch
          %172 = sbr.rel (%p170) target = $region20
        $region19: #{autoencoder_forward.9} parent=11 // pred_region
          _
        $region20: #{autoencoder_forward.9} parent=11 // pred_fallthru
          _
        // Predicated region
        $region21: #{autoencoder_forward.9} parent=11 // pred_check
          %p173 = pneg %p74
        $region22: #{autoencoder_forward.9} parent=11 // pred_check_branch
          %175 = sbr.rel (%p173) target = $region24
        $region23: #{autoencoder_forward.9} parent=11 // pred_region
          _
        $region24: #{autoencoder_forward.9} parent=11 // pred_fallthru
          _
      $region12: #{autoencoder_forward.9} parent=5 // pred_fallthru
        _
      %p176 = scmp.lt.s32.totalorder %s11, 2
      // Predicated region
      $region25: #{autoencoder_forward.9} parent=5 // pred_check
        %p177 = pneg %p176
      $region26: #{autoencoder_forward.9} parent=5 // pred_check_branch
        %179 = sbr.rel (%p177) target = $region28
      $region27: #{autoencoder_forward.9} parent=5 // pred_region
        // Predicated region
        $region29: #{autoencoder_forward.9} parent=27 // pred_check
          %p180 = pneg %p94
        $region30: #{autoencoder_forward.9} parent=27 // pred_check_branch
          %182 = sbr.rel (%p180) target = $region32
        $region31: #{autoencoder_forward.9} parent=27 // pred_region
          %s183 = sand.u32 %s84, 1
          %s184 = sand.u32 %s84, 1
          %s185 = smul.addr %s184, 896
          %s186 = scalar_lea.vmem [#allocation2], %s185
          %s187 = smul.u32 7, %s11
          %s188 = smul.addr %s187, 8
          %s189 = scalar_lea.vmem %s3, %s188
          // Predicated region
          $region33: #{autoencoder_forward.9} parent=31 // pred_check
            _
          $region34: #{autoencoder_forward.9} parent=31 // pred_check_branch
            %191 = sbr.rel (0) target = $region36
          $region35: #{autoencoder_forward.9} parent=31 // pred_region
            // Predicated region
            $region37: #{autoencoder_forward.9} parent=35 // pred_check
              _
            $region38: #{autoencoder_forward.9} parent=35 // pred_check_branch
              %193 = sbr.rel (0) target = $region40
            $region39: #{autoencoder_forward.9} parent=35 // pred_region
              loop: start=0, step=1, limit=1
              $region41: #{autoencoder_forward.9} parent=39 // loop_pre_header
                _
              $region42: #{autoencoder_forward.9} parent=39 // loop_header
                %s195 = sphi 0, %s199
                %p196 = scmp.ge.s32.totalorder %s195, 1
                %s200 = sphi %s189, %s189
                %s201 = sphi %s186, %s186
              $region43: #{autoencoder_forward.9} parent=39 // loop_header_branch
                %198 = sbr.rel (%p196) target = $region47
              $region44: #{autoencoder_forward.9} parent=39 // loop_body
                %v202 = vld [vmem:[%s200] sm:$0xff]
                %203 = vst [vmem:[%s201] sm:$0xff] %v202
                %v204 = vld [vmem:[%s200 + $0x8] sm:$0xff]
                %205 = vst [vmem:[%s201 + $0x8] sm:$0xff] %v204
                %v206 = vld [vmem:[%s200 + $0x10] sm:$0xff]
                %207 = vst [vmem:[%s201 + $0x10] sm:$0xff] %v206
                %v208 = vld [vmem:[%s200 + $0x18] sm:$0xff]
                %209 = vst [vmem:[%s201 + $0x18] sm:$0xff] %v208
                %v210 = vld [vmem:[%s200 + $0x20] sm:$0xff]
                %211 = vst [vmem:[%s201 + $0x20] sm:$0xff] %v210
                %v212 = vld [vmem:[%s200 + $0x28] sm:$0xff]
                %213 = vst [vmem:[%s201 + $0x28] sm:$0xff] %v212
                %v214 = vld [vmem:[%s200 + $0x30] sm:$0xff]
                %215 = vst [vmem:[%s201 + $0x30] sm:$0xff] %v214
                %v216 = vld [vmem:[%s200 + $0x70] sm:$0xff]
                %217 = vst [vmem:[%s201 + $0x38] sm:$0xff] %v216
                %v218 = vld [vmem:[%s200 + $0x78] sm:$0xff]
                %219 = vst [vmem:[%s201 + $0x40] sm:$0xff] %v218
                %v220 = vld [vmem:[%s200 + $0x80] sm:$0xff]
                %221 = vst [vmem:[%s201 + $0x48] sm:$0xff] %v220
                %v222 = vld [vmem:[%s200 + $0x88] sm:$0xff]
                %223 = vst [vmem:[%s201 + $0x50] sm:$0xff] %v222
                %v224 = vld [vmem:[%s200 + $0x90] sm:$0xff]
                %225 = vst [vmem:[%s201 + $0x58] sm:$0xff] %v224
                %v226 = vld [vmem:[%s200 + $0x98] sm:$0xff]
                %227 = vst [vmem:[%s201 + $0x60] sm:$0xff] %v226
                %v228 = vld [vmem:[%s200 + $0xa0] sm:$0xff]
                %229 = vst [vmem:[%s201 + $0x68] sm:$0xff] %v228
                %v230 = vld [vmem:[%s200 + $0xe0] sm:$0xff]
                %231 = vst [vmem:[%s201 + $0x70] sm:$0xff] %v230
                %v232 = vld [vmem:[%s200 + $0xe8] sm:$0xff]
                %233 = vst [vmem:[%s201 + $0x78] sm:$0xff] %v232
                %v234 = vld [vmem:[%s200 + $0xf0] sm:$0xff]
                %235 = vst [vmem:[%s201 + $0x80] sm:$0xff] %v234
                %v236 = vld [vmem:[%s200 + $0xf8] sm:$0xff]
                %237 = vst [vmem:[%s201 + $0x88] sm:$0xff] %v236
                %v238 = vld [vmem:[%s200 + $0x100] sm:$0xff]
                %239 = vst [vmem:[%s201 + $0x90] sm:$0xff] %v238
                %v240 = vld [vmem:[%s200 + $0x108] sm:$0xff]
                %241 = vst [vmem:[%s201 + $0x98] sm:$0xff] %v240
                %v242 = vld [vmem:[%s200 + $0x110] sm:$0xff]
                %243 = vst [vmem:[%s201 + $0xa0] sm:$0xff] %v242
                %v244 = vld [vmem:[%s200 + $0x150] sm:$0xff]
                %245 = vst [vmem:[%s201 + $0xa8] sm:$0xff] %v244
                %v246 = vld [vmem:[%s200 + $0x158] sm:$0xff]
                %247 = vst [vmem:[%s201 + $0xb0] sm:$0xff] %v246
                %v248 = vld [vmem:[%s200 + $0x160] sm:$0xff]
                %249 = vst [vmem:[%s201 + $0xb8] sm:$0xff] %v248
                %v250 = vld [vmem:[%s200 + $0x168] sm:$0xff]
                %251 = vst [vmem:[%s201 + $0xc0] sm:$0xff] %v250
                %v252 = vld [vmem:[%s200 + $0x170] sm:$0xff]
                %253 = vst [vmem:[%s201 + $0xc8] sm:$0xff] %v252
                %v254 = vld [vmem:[%s200 + $0x178] sm:$0xff]
                %255 = vst [vmem:[%s201 + $0xd0] sm:$0xff] %v254
                %v256 = vld [vmem:[%s200 + $0x180] sm:$0xff]
                %257 = vst [vmem:[%s201 + $0xd8] sm:$0xff] %v256
                %v258 = vld [vmem:[%s200 + $0x1c0] sm:$0xff]
                %259 = vst [vmem:[%s201 + $0xe0] sm:$0xff] %v258
                %v260 = vld [vmem:[%s200 + $0x1c8] sm:$0xff]
                %261 = vst [vmem:[%s201 + $0xe8] sm:$0xff] %v260
                %v262 = vld [vmem:[%s200 + $0x1d0] sm:$0xff]
                %263 = vst [vmem:[%s201 + $0xf0] sm:$0xff] %v262
                %v264 = vld [vmem:[%s200 + $0x1d8] sm:$0xff]
                %265 = vst [vmem:[%s201 + $0xf8] sm:$0xff] %v264
                %v266 = vld [vmem:[%s200 + $0x1e0] sm:$0xff]
                %267 = vst [vmem:[%s201 + $0x100] sm:$0xff] %v266
                %v268 = vld [vmem:[%s200 + $0x1e8] sm:$0xff]
                %269 = vst [vmem:[%s201 + $0x108] sm:$0xff] %v268
                %v270 = vld [vmem:[%s200 + $0x1f0] sm:$0xff]
                %271 = vst [vmem:[%s201 + $0x110] sm:$0xff] %v270
                %v272 = vld [vmem:[%s200 + $0x230] sm:$0xff]
                %273 = vst [vmem:[%s201 + $0x118] sm:$0xff] %v272
                %v274 = vld [vmem:[%s200 + $0x238] sm:$0xff]
                %275 = vst [vmem:[%s201 + $0x120] sm:$0xff] %v274
                %v276 = vld [vmem:[%s200 + $0x240] sm:$0xff]
                %277 = vst [vmem:[%s201 + $0x128] sm:$0xff] %v276
                %v278 = vld [vmem:[%s200 + $0x248] sm:$0xff]
                %279 = vst [vmem:[%s201 + $0x130] sm:$0xff] %v278
                %v280 = vld [vmem:[%s200 + $0x250] sm:$0xff]
                %281 = vst [vmem:[%s201 + $0x138] sm:$0xff] %v280
                %v282 = vld [vmem:[%s200 + $0x258] sm:$0xff]
                %283 = vst [vmem:[%s201 + $0x140] sm:$0xff] %v282
                %v284 = vld [vmem:[%s200 + $0x260] sm:$0xff]
                %285 = vst [vmem:[%s201 + $0x148] sm:$0xff] %v284
                %v286 = vld [vmem:[%s200 + $0x2a0] sm:$0xff]
                %287 = vst [vmem:[%s201 + $0x150] sm:$0xff] %v286
                %v288 = vld [vmem:[%s200 + $0x2a8] sm:$0xff]
                %289 = vst [vmem:[%s201 + $0x158] sm:$0xff] %v288
                %v290 = vld [vmem:[%s200 + $0x2b0] sm:$0xff]
                %291 = vst [vmem:[%s201 + $0x160] sm:$0xff] %v290
                %v292 = vld [vmem:[%s200 + $0x2b8] sm:$0xff]
                %293 = vst [vmem:[%s201 + $0x168] sm:$0xff] %v292
                %v294 = vld [vmem:[%s200 + $0x2c0] sm:$0xff]
                %295 = vst [vmem:[%s201 + $0x170] sm:$0xff] %v294
                %v296 = vld [vmem:[%s200 + $0x2c8] sm:$0xff]
                %297 = vst [vmem:[%s201 + $0x178] sm:$0xff] %v296
                %v298 = vld [vmem:[%s200 + $0x2d0] sm:$0xff]
                %299 = vst [vmem:[%s201 + $0x180] sm:$0xff] %v298
                %v300 = vld [vmem:[%s200 + $0x310] sm:$0xff]
                %301 = vst [vmem:[%s201 + $0x188] sm:$0xff] %v300
                %v302 = vld [vmem:[%s200 + $0x318] sm:$0xff]
                %303 = vst [vmem:[%s201 + $0x190] sm:$0xff] %v302
                %v304 = vld [vmem:[%s200 + $0x320] sm:$0xff]
                %305 = vst [vmem:[%s201 + $0x198] sm:$0xff] %v304
                %v306 = vld [vmem:[%s200 + $0x328] sm:$0xff]
                %307 = vst [vmem:[%s201 + $0x1a0] sm:$0xff] %v306
                %v308 = vld [vmem:[%s200 + $0x330] sm:$0xff]
                %309 = vst [vmem:[%s201 + $0x1a8] sm:$0xff] %v308
                %v310 = vld [vmem:[%s200 + $0x338] sm:$0xff]
                %311 = vst [vmem:[%s201 + $0x1b0] sm:$0xff] %v310
                %v312 = vld [vmem:[%s200 + $0x340] sm:$0xff]
                %313 = vst [vmem:[%s201 + $0x1b8] sm:$0xff] %v312
                %v314 = vld [vmem:[%s200 + $0x380] sm:$0xff]
                %315 = vst [vmem:[%s201 + $0x1c0] sm:$0xff] %v314
                %v316 = vld [vmem:[%s200 + $0x388] sm:$0xff]
                %317 = vst [vmem:[%s201 + $0x1c8] sm:$0xff] %v316
                %v318 = vld [vmem:[%s200 + $0x390] sm:$0xff]
                %319 = vst [vmem:[%s201 + $0x1d0] sm:$0xff] %v318
                %v320 = vld [vmem:[%s200 + $0x398] sm:$0xff]
                %321 = vst [vmem:[%s201 + $0x1d8] sm:$0xff] %v320
                %v322 = vld [vmem:[%s200 + $0x3a0] sm:$0xff]
                %323 = vst [vmem:[%s201 + $0x1e0] sm:$0xff] %v322
                %v324 = vld [vmem:[%s200 + $0x3a8] sm:$0xff]
                %325 = vst [vmem:[%s201 + $0x1e8] sm:$0xff] %v324
                %v326 = vld [vmem:[%s200 + $0x3b0] sm:$0xff]
                %327 = vst [vmem:[%s201 + $0x1f0] sm:$0xff] %v326
                %v328 = vld [vmem:[%s200 + $0x3f0] sm:$0xff]
                %329 = vst [vmem:[%s201 + $0x1f8] sm:$0xff] %v328
                %v330 = vld [vmem:[%s200 + $0x3f8] sm:$0xff]
                %331 = vst [vmem:[%s201 + $0x200] sm:$0xff] %v330
                %v332 = vld [vmem:[%s200 + $0x400] sm:$0xff]
                %333 = vst [vmem:[%s201 + $0x208] sm:$0xff] %v332
                %v334 = vld [vmem:[%s200 + $0x408] sm:$0xff]
                %335 = vst [vmem:[%s201 + $0x210] sm:$0xff] %v334
                %v336 = vld [vmem:[%s200 + $0x410] sm:$0xff]
                %337 = vst [vmem:[%s201 + $0x218] sm:$0xff] %v336
                %v338 = vld [vmem:[%s200 + $0x418] sm:$0xff]
                %339 = vst [vmem:[%s201 + $0x220] sm:$0xff] %v338
                %v340 = vld [vmem:[%s200 + $0x420] sm:$0xff]
                %341 = vst [vmem:[%s201 + $0x228] sm:$0xff] %v340
                %v342 = vld [vmem:[%s200 + $0x460] sm:$0xff]
                %343 = vst [vmem:[%s201 + $0x230] sm:$0xff] %v342
                %v344 = vld [vmem:[%s200 + $0x468] sm:$0xff]
                %345 = vst [vmem:[%s201 + $0x238] sm:$0xff] %v344
                %v346 = vld [vmem:[%s200 + $0x470] sm:$0xff]
                %347 = vst [vmem:[%s201 + $0x240] sm:$0xff] %v346
                %v348 = vld [vmem:[%s200 + $0x478] sm:$0xff]
                %349 = vst [vmem:[%s201 + $0x248] sm:$0xff] %v348
                %v350 = vld [vmem:[%s200 + $0x480] sm:$0xff]
                %351 = vst [vmem:[%s201 + $0x250] sm:$0xff] %v350
                %v352 = vld [vmem:[%s200 + $0x488] sm:$0xff]
                %353 = vst [vmem:[%s201 + $0x258] sm:$0xff] %v352
                %v354 = vld [vmem:[%s200 + $0x490] sm:$0xff]
                %355 = vst [vmem:[%s201 + $0x260] sm:$0xff] %v354
                %v356 = vld [vmem:[%s200 + $0x4d0] sm:$0xff]
                %357 = vst [vmem:[%s201 + $0x268] sm:$0xff] %v356
                %v358 = vld [vmem:[%s200 + $0x4d8] sm:$0xff]
                %359 = vst [vmem:[%s201 + $0x270] sm:$0xff] %v358
                %v360 = vld [vmem:[%s200 + $0x4e0] sm:$0xff]
                %361 = vst [vmem:[%s201 + $0x278] sm:$0xff] %v360
                %v362 = vld [vmem:[%s200 + $0x4e8] sm:$0xff]
                %363 = vst [vmem:[%s201 + $0x280] sm:$0xff] %v362
                %v364 = vld [vmem:[%s200 + $0x4f0] sm:$0xff]
                %365 = vst [vmem:[%s201 + $0x288] sm:$0xff] %v364
                %v366 = vld [vmem:[%s200 + $0x4f8] sm:$0xff]
                %367 = vst [vmem:[%s201 + $0x290] sm:$0xff] %v366
                %v368 = vld [vmem:[%s200 + $0x500] sm:$0xff]
                %369 = vst [vmem:[%s201 + $0x298] sm:$0xff] %v368
                %v370 = vld [vmem:[%s200 + $0x540] sm:$0xff]
                %371 = vst [vmem:[%s201 + $0x2a0] sm:$0xff] %v370
                %v372 = vld [vmem:[%s200 + $0x548] sm:$0xff]
                %373 = vst [vmem:[%s201 + $0x2a8] sm:$0xff] %v372
                %v374 = vld [vmem:[%s200 + $0x550] sm:$0xff]
                %375 = vst [vmem:[%s201 + $0x2b0] sm:$0xff] %v374
                %v376 = vld [vmem:[%s200 + $0x558] sm:$0xff]
                %377 = vst [vmem:[%s201 + $0x2b8] sm:$0xff] %v376
                %v378 = vld [vmem:[%s200 + $0x560] sm:$0xff]
                %379 = vst [vmem:[%s201 + $0x2c0] sm:$0xff] %v378
                %v380 = vld [vmem:[%s200 + $0x568] sm:$0xff]
                %381 = vst [vmem:[%s201 + $0x2c8] sm:$0xff] %v380
                %v382 = vld [vmem:[%s200 + $0x570] sm:$0xff]
                %383 = vst [vmem:[%s201 + $0x2d0] sm:$0xff] %v382
                %v384 = vld [vmem:[%s200 + $0x5b0] sm:$0xff]
                %385 = vst [vmem:[%s201 + $0x2d8] sm:$0xff] %v384
                %v386 = vld [vmem:[%s200 + $0x5b8] sm:$0xff]
                %387 = vst [vmem:[%s201 + $0x2e0] sm:$0xff] %v386
                %v388 = vld [vmem:[%s200 + $0x5c0] sm:$0xff]
                %389 = vst [vmem:[%s201 + $0x2e8] sm:$0xff] %v388
                %v390 = vld [vmem:[%s200 + $0x5c8] sm:$0xff]
                %391 = vst [vmem:[%s201 + $0x2f0] sm:$0xff] %v390
                %v392 = vld [vmem:[%s200 + $0x5d0] sm:$0xff]
                %393 = vst [vmem:[%s201 + $0x2f8] sm:$0xff] %v392
                %v394 = vld [vmem:[%s200 + $0x5d8] sm:$0xff]
                %395 = vst [vmem:[%s201 + $0x300] sm:$0xff] %v394
                %v396 = vld [vmem:[%s200 + $0x5e0] sm:$0xff]
                %397 = vst [vmem:[%s201 + $0x308] sm:$0xff] %v396
                %v398 = vld [vmem:[%s200 + $0x620] sm:$0xff]
                %399 = vst [vmem:[%s201 + $0x310] sm:$0xff] %v398
                %v400 = vld [vmem:[%s200 + $0x628] sm:$0xff]
                %401 = vst [vmem:[%s201 + $0x318] sm:$0xff] %v400
                %v402 = vld [vmem:[%s200 + $0x630] sm:$0xff]
                %403 = vst [vmem:[%s201 + $0x320] sm:$0xff] %v402
                %v404 = vld [vmem:[%s200 + $0x638] sm:$0xff]
                %405 = vst [vmem:[%s201 + $0x328] sm:$0xff] %v404
                %v406 = vld [vmem:[%s200 + $0x640] sm:$0xff]
                %407 = vst [vmem:[%s201 + $0x330] sm:$0xff] %v406
                %v408 = vld [vmem:[%s200 + $0x648] sm:$0xff]
                %409 = vst [vmem:[%s201 + $0x338] sm:$0xff] %v408
                %v410 = vld [vmem:[%s200 + $0x650] sm:$0xff]
                %411 = vst [vmem:[%s201 + $0x340] sm:$0xff] %v410
                %v412 = vld [vmem:[%s200 + $0x690] sm:$0xff]
                %413 = vst [vmem:[%s201 + $0x348] sm:$0xff] %v412
                %v414 = vld [vmem:[%s200 + $0x698] sm:$0xff]
                %415 = vst [vmem:[%s201 + $0x350] sm:$0xff] %v414
                %v416 = vld [vmem:[%s200 + $0x6a0] sm:$0xff]
                %417 = vst [vmem:[%s201 + $0x358] sm:$0xff] %v416
                %v418 = vld [vmem:[%s200 + $0x6a8] sm:$0xff]
                %419 = vst [vmem:[%s201 + $0x360] sm:$0xff] %v418
                %v420 = vld [vmem:[%s200 + $0x6b0] sm:$0xff]
                %421 = vst [vmem:[%s201 + $0x368] sm:$0xff] %v420
                %v422 = vld [vmem:[%s200 + $0x6b8] sm:$0xff]
                %423 = vst [vmem:[%s201 + $0x370] sm:$0xff] %v422
                %v424 = vld [vmem:[%s200 + $0x6c0] sm:$0xff]
                %425 = vst [vmem:[%s201 + $0x378] sm:$0xff] %v424
              $region45: #{autoencoder_forward.9} parent=39 // loop_footer
                %s199 = sadd.s32 1, %s195
              $region46: #{autoencoder_forward.9} parent=39 // loop_footer_branch
                %194 = sbr.rel target = $region42
              $region47: #{autoencoder_forward.9} parent=39 // loop_exit
                _
            $region40: #{autoencoder_forward.9} parent=35 // pred_fallthru
              _
            // Predicated region
            $region48: #{autoencoder_forward.9} parent=35 // pred_check
              _
            $region49: #{autoencoder_forward.9} parent=35 // pred_check_branch
              %427 = sbr.rel target = $region51
            $region50: #{autoencoder_forward.9} parent=35 // pred_region
              _
            $region51: #{autoencoder_forward.9} parent=35 // pred_fallthru
              _
          $region36: #{autoencoder_forward.9} parent=31 // pred_fallthru
            _
          %428 = vnop
        $region32: #{autoencoder_forward.9} parent=27 // pred_fallthru
          _
        // Predicated region
        $region52: #{autoencoder_forward.9} parent=27 // pred_check
          %p429 = pneg %p120
        $region53: #{autoencoder_forward.9} parent=27 // pred_check_branch
          %431 = sbr.rel (%p429) target = $region55
        $region54: #{autoencoder_forward.9} parent=27 // pred_region
          %s432 = smul.u32 7, %s11
          %p433 = scmp.lt.s32.totalorder %s432, 13
          %s434 = scalar_select %p433, %s432, 13
          %s435 = scalar_lea.vmem %s4, %s434
          %s436 = smul.u32 7, %s11
        $region55: #{autoencoder_forward.9} parent=27 // pred_fallthru
          _
      $region28: #{autoencoder_forward.9} parent=5 // pred_fallthru
        _
      %p437 = scmp.le.s32.totalorder 1, %s11
      %p438 = scmp.lt.s32.totalorder %s11, 3
      %p439 = pnand %p437, %p438
      %p440 = pneg %p439
      // Predicated region
      $region56: #{autoencoder_forward.9} parent=5 // pred_check
        _
      $region57: #{autoencoder_forward.9} parent=5 // pred_check_branch
        %442 = sbr.rel (%p439) target = $region59
      $region58: #{autoencoder_forward.9} parent=5 // pred_region
        %s443 = ssub.s32 %s11, 1
        %s444 = sand.u32 %s87, 1
        %s445 = sand.u32 %s87, 1
        %s446 = smul.addr %s445, 896
        %s447 = scalar_lea.vmem [#allocation2], %s446
        // Predicated region
        $region60: #{autoencoder_forward.9} parent=58 // pred_check
          %p448 = pneg %p100
        $region61: #{autoencoder_forward.9} parent=58 // pred_check_branch
          %450 = sbr.rel (%p448) target = $region63
        $region62: #{autoencoder_forward.9} parent=58 // pred_region
          _
        $region63: #{autoencoder_forward.9} parent=58 // pred_fallthru
          _
        %p451 = pneg %p32
        %p452 = pneg %p29
        %p453 = pneg %p53
        %p454 = pneg %p50
        %p455 = pneg %p74
        %p456 = pneg %p71
        %s457 = sand.u32 %s87, 1
        %s458 = sand.u32 %s87, 1
        %s459 = smul.addr %s458, 896
        %s460 = scalar_lea.vmem [#allocation2], %s459
        %p461 = pneg %p100
        %p462 = pneg %p97
        %s463 = smul.u32 7, %s16
        %p464 = scmp.lt.s32.totalorder %s463, 13
        %s465 = scalar_select %p464, %s463, 13
        %s466 = scalar_lea.vmem %s4, %s465
        %p467 = pneg %p126
        %p468 = pneg %p123
        %p469 = pneg %p152
        %p470 = pneg %p149
        %s471 = smul.u32 7, %s16
        %p472 = scmp.lt.s32.totalorder %s471, 13
        %s473 = scalar_select %p472, %s471, 13
        %s474 = smul.addr %s473, 2
        %s475 = scalar_lea.vmem %s5, %s474
        %s476 = smul.u32 7, %s16
        %s477 = smul.u32 7, %s16
        %p478 = scmp.lt.s32.totalorder %s477, 13
        %s479 = scalar_select %p478, %s477, 13
        %s480 = scalar_lea.vmem %s4, %s479
        %s481 = smul.u32 7, %s16
        %s482 = smul.u32 7, %s16
        %p483 = scmp.lt.s32.totalorder %s482, 13
        %s484 = scalar_select %p483, %s482, 13
        %s485 = smul.addr %s484, 2
        %s486 = scalar_lea.vmem %s5, %s485
        %s487 = smul.u32 7, %s16
        %v488 = vld [vmem:[%s0] sm:$0xff]
        %v489 = vld [vmem:[%s0 + $0x8] sm:$0xff]
        %v490 = vld [vmem:[%s0 + $0x10] sm:$0xff]
        %v491 = vld [vmem:[%s0 + $0x18] sm:$0x3]
        %v492 = vld [vmem:[%s1] sm:$0xff]
        %v493 = vld [vmem:[%s1 + $0x8] sm:$0xff]
        %v494 = vld [vmem:[%s1 + $0x10] sm:$0xff]
        %v495 = vld [vmem:[%s1 + $0x18] sm:$0xff]
        %v496 = vld [vmem:[%s1 + $0x20] sm:$0xff]
        %v497 = vld [vmem:[%s1 + $0x28] sm:$0xff]
        %v498 = vld [vmem:[%s1 + $0x30] sm:$0xff]
        %v499 = vld [vmem:[%s1 + $0x38] sm:$0xff]
        %v500 = vld [vmem:[%s1 + $0x40] sm:$0xff]
        %v501 = vld [vmem:[%s1 + $0x48] sm:$0xff]
        %v502 = vld [vmem:[%s1 + $0x50] sm:$0xff]
        %v503 = vld [vmem:[%s1 + $0x58] sm:$0xff]
        %v504 = vld [vmem:[%s1 + $0x60] sm:$0xff]
        %v505 = vld [vmem:[%s1 + $0x68] sm:$0xff]
        %v506 = vld [vmem:[%s1 + $0x70] sm:$0xff]
        %v507 = vld [vmem:[%s1 + $0x78] sm:$0xff]
        %v508 = vld [vmem:[%s1 + $0x80] sm:$0xff]
        %v509 = vld [vmem:[%s1 + $0x88] sm:$0xff]
        %v510 = vld [vmem:[%s1 + $0x90] sm:$0xff]
        %v511 = vld [vmem:[%s1 + $0x98] sm:$0xff]
        %v512 = vld [vmem:[%s1 + $0xa0] sm:$0xff]
        %v513 = vld [vmem:[%s1 + $0xa8] sm:$0xff]
        %v514 = vld [vmem:[%s1 + $0xb0] sm:$0xff]
        %v515 = vld [vmem:[%s1 + $0xb8] sm:$0xff]
        %v516 = vld [vmem:[%s1 + $0xc0] sm:$0xff]
        %v517 = vld [vmem:[%s1 + $0xc8] sm:$0xff]
        %v518 = vld [vmem:[%s1 + $0xd0] sm:$0xff]
        %v519 = vld [vmem:[%s1 + $0xd8] sm:$0xff]
        %v520 = vld [vmem:[%s1 + $0xe0] sm:$0xff]
        %v521 = vld [vmem:[%s1 + $0xe8] sm:$0xff]
        %v522 = vld [vmem:[%s1 + $0xf0] sm:$0xff]
        %v523 = vld [vmem:[%s1 + $0xf8] sm:$0xff]
        %v524 = vld [vmem:[%s1 + $0x100] sm:$0xff]
        %v525 = vld [vmem:[%s1 + $0x108] sm:$0xff]
        %v526 = vld [vmem:[%s1 + $0x110] sm:$0xff]
        %v527 = vld [vmem:[%s1 + $0x118] sm:$0xff]
        %v528 = vld [vmem:[%s1 + $0x120] sm:$0xff]
        %v529 = vld [vmem:[%s1 + $0x128] sm:$0xff]
        %v530 = vld [vmem:[%s1 + $0x130] sm:$0xff]
        %v531 = vld [vmem:[%s1 + $0x138] sm:$0xff]
        %v532 = vld [vmem:[%s1 + $0x140] sm:$0xff]
        %v533 = vld [vmem:[%s1 + $0x148] sm:$0xff]
        %v534 = vld [vmem:[%s1 + $0x150] sm:$0xff]
        %v535 = vld [vmem:[%s1 + $0x158] sm:$0xff]
        %v536 = vld [vmem:[%s1 + $0x160] sm:$0xff]
        %v537 = vld [vmem:[%s1 + $0x168] sm:$0xff]
        %v538 = vld [vmem:[%s1 + $0x170] sm:$0xff]
        %v539 = vld [vmem:[%s1 + $0x178] sm:$0xff]
        %v540 = vld [vmem:[%s1 + $0x180] sm:$0xff]
        %v541 = vld [vmem:[%s1 + $0x188] sm:$0xff]
        %v542 = vld [vmem:[%s1 + $0x190] sm:$0xff]
        %v543 = vld [vmem:[%s1 + $0x198] sm:$0xff]
        %v544 = vld [vmem:[%s1 + $0x1a0] sm:$0xff]
        %v545 = vld [vmem:[%s1 + $0x1a8] sm:$0xff]
        %v546 = vld [vmem:[%s1 + $0x1b0] sm:$0xff]
        %v547 = vld [vmem:[%s1 + $0x1b8] sm:$0xff]
        %v548 = vld [vmem:[%s1 + $0x1c0] sm:$0xff]
        %v549 = vld [vmem:[%s1 + $0x1c8] sm:$0xff]
        %v550 = vld [vmem:[%s1 + $0x1d0] sm:$0xff]
        %v551 = vld [vmem:[%s1 + $0x1d8] sm:$0xff]
        %v552 = vld [vmem:[%s1 + $0x1e0] sm:$0xff]
        %v553 = vld [vmem:[%s1 + $0x1e8] sm:$0xff]
        %v554 = vld [vmem:[%s1 + $0x1f0] sm:$0xff]
        %v555 = vld [vmem:[%s1 + $0x1f8] sm:$0xff]
        %v556 = vld [vmem:[%s1 + $0x200] sm:$0xff]
        %v557 = vld [vmem:[%s1 + $0x208] sm:$0xff]
        %v558 = vld [vmem:[%s1 + $0x210] sm:$0xff]
        %v559 = vld [vmem:[%s1 + $0x218] sm:$0xff]
        %v560 = vld [vmem:[%s1 + $0x220] sm:$0xff]
        %v561 = vld [vmem:[%s1 + $0x228] sm:$0xff]
        %v562 = vld [vmem:[%s1 + $0x230] sm:$0xff]
        %v563 = vld [vmem:[%s1 + $0x238] sm:$0xff]
        %v564 = vld [vmem:[%s1 + $0x240] sm:$0xff]
        %v565 = vld [vmem:[%s1 + $0x248] sm:$0xff]
        %v566 = vld [vmem:[%s1 + $0x250] sm:$0xff]
        %v567 = vld [vmem:[%s1 + $0x258] sm:$0xff]
        %v568 = vld [vmem:[%s1 + $0x260] sm:$0xff]
        %v569 = vld [vmem:[%s1 + $0x268] sm:$0xff]
        %v570 = vld [vmem:[%s1 + $0x270] sm:$0xff]
        %v571 = vld [vmem:[%s1 + $0x278] sm:$0xff]
        %v572 = vld [vmem:[%s1 + $0x280] sm:$0xff]
        %v573 = vld [vmem:[%s1 + $0x288] sm:$0xff]
        %v574 = vld [vmem:[%s1 + $0x290] sm:$0xff]
        %v575 = vld [vmem:[%s1 + $0x298] sm:$0xff]
        %v576 = vld [vmem:[%s1 + $0x2a0] sm:$0xff]
        %v577 = vld [vmem:[%s1 + $0x2a8] sm:$0xff]
        %v578 = vld [vmem:[%s1 + $0x2b0] sm:$0xff]
        %v579 = vld [vmem:[%s1 + $0x2b8] sm:$0xff]
        %v580 = vld [vmem:[%s1 + $0x2c0] sm:$0xff]
        %v581 = vld [vmem:[%s1 + $0x2c8] sm:$0xff]
        %v582 = vld [vmem:[%s1 + $0x2d0] sm:$0xff]
        %v583 = vld [vmem:[%s1 + $0x2d8] sm:$0xff]
        %v584 = vld [vmem:[%s1 + $0x2e0] sm:$0xff]
        %v585 = vld [vmem:[%s1 + $0x2e8] sm:$0xff]
        %v586 = vld [vmem:[%s1 + $0x2f0] sm:$0xff]
        %v587 = vld [vmem:[%s1 + $0x2f8] sm:$0xff]
        %v588 = vld [vmem:[%s1 + $0x300] sm:$0xff]
        %v589 = vld [vmem:[%s1 + $0x308] sm:$0xff]
        %v590 = vld [vmem:[%s1 + $0x310] sm:$0xff]
        %v591 = vld [vmem:[%s1 + $0x318] sm:$0xff]
        %v592 = vld [vmem:[%s1 + $0x320] sm:$0xff]
        %v593 = vld [vmem:[%s1 + $0x328] sm:$0xff]
        %v594 = vld [vmem:[%s1 + $0x330] sm:$0xff]
        %v595 = vld [vmem:[%s1 + $0x338] sm:$0xff]
        %v596 = vld [vmem:[%s1 + $0x340] sm:$0xff]
        %v597 = vld [vmem:[%s1 + $0x348] sm:$0xff]
        %v598 = vld [vmem:[%s1 + $0x350] sm:$0xff]
        %v599 = vld [vmem:[%s1 + $0x358] sm:$0xff]
        %v600 = vld [vmem:[%s1 + $0x360] sm:$0xff]
        %v601 = vld [vmem:[%s1 + $0x368] sm:$0xff]
        %v602 = vld [vmem:[%s1 + $0x370] sm:$0xff]
        %v603 = vld [vmem:[%s1 + $0x378] sm:$0xff]
        %v604 = vld [vmem:[%s1 + $0x380] sm:$0xff]
        %v605 = vld [vmem:[%s1 + $0x388] sm:$0xff]
        %v606 = vld [vmem:[%s1 + $0x390] sm:$0xff]
        %v607 = vld [vmem:[%s1 + $0x398] sm:$0xff]
        %v608 = vld [vmem:[%s1 + $0x3a0] sm:$0xff]
        %v609 = vld [vmem:[%s1 + $0x3a8] sm:$0xff]
        %v610 = vld [vmem:[%s1 + $0x3b0] sm:$0xff]
        %v611 = vld [vmem:[%s1 + $0x3b8] sm:$0xff]
        %v612 = vld [vmem:[%s1 + $0x3c0] sm:$0xff]
        %v613 = vld [vmem:[%s1 + $0x3c8] sm:$0xff]
        %v614 = vld [vmem:[%s1 + $0x3d0] sm:$0xff]
        %v615 = vld [vmem:[%s1 + $0x3d8] sm:$0xff]
        %v616 = vld [vmem:[%s1 + $0x3e0] sm:$0xff]
        %v617 = vld [vmem:[%s1 + $0x3e8] sm:$0xff]
        %v618 = vld [vmem:[%s1 + $0x3f0] sm:$0xff]
        %v619 = vld [vmem:[%s1 + $0x3f8] sm:$0xff]
        %v620 = vld [vmem:[%s1 + $0x400] sm:$0xff]
        %v621 = vld [vmem:[%s1 + $0x408] sm:$0xff]
        %v622 = vld [vmem:[%s1 + $0x410] sm:$0xff]
        %v623 = vld [vmem:[%s1 + $0x418] sm:$0xff]
        %v624 = vld [vmem:[%s1 + $0x420] sm:$0xff]
        %v625 = vld [vmem:[%s1 + $0x428] sm:$0xff]
        %v626 = vld [vmem:[%s1 + $0x430] sm:$0xff]
        %v627 = vld [vmem:[%s1 + $0x438] sm:$0xff]
        %v628 = vld [vmem:[%s1 + $0x440] sm:$0xff]
        %v629 = vld [vmem:[%s1 + $0x448] sm:$0xff]
        %v630 = vld [vmem:[%s1 + $0x450] sm:$0xff]
        %v631 = vld [vmem:[%s1 + $0x458] sm:$0xff]
        %v632 = vld [vmem:[%s1 + $0x460] sm:$0xff]
        %v633 = vld [vmem:[%s1 + $0x468] sm:$0xff]
        %v634 = vld [vmem:[%s1 + $0x470] sm:$0xff]
        %v635 = vld [vmem:[%s1 + $0x478] sm:$0xff]
        %v636 = vld [vmem:[%s1 + $0x480] sm:$0xff]
        %v637 = vld [vmem:[%s1 + $0x488] sm:$0xff]
        %v638 = vld [vmem:[%s1 + $0x490] sm:$0xff]
        %v639 = vld [vmem:[%s1 + $0x498] sm:$0xff]
        %v640 = vld [vmem:[%s1 + $0x4a0] sm:$0xff]
        %v641 = vld [vmem:[%s1 + $0x4a8] sm:$0xff]
        %v642 = vld [vmem:[%s1 + $0x4b0] sm:$0xff]
        %v643 = vld [vmem:[%s1 + $0x4b8] sm:$0xff]
        %v644 = vld [vmem:[%s1 + $0x4c0] sm:$0xff]
        %v645 = vld [vmem:[%s1 + $0x4c8] sm:$0xff]
        %v646 = vld [vmem:[%s1 + $0x4d0] sm:$0xff]
        %v647 = vld [vmem:[%s1 + $0x4d8] sm:$0xff]
        %v648 = vld [vmem:[%s1 + $0x4e0] sm:$0xff]
        %v649 = vld [vmem:[%s1 + $0x4e8] sm:$0xff]
        %v650 = vld [vmem:[%s1 + $0x4f0] sm:$0xff]
        %v651 = vld [vmem:[%s1 + $0x4f8] sm:$0xff]
        %v652 = vld [vmem:[%s1 + $0x500] sm:$0xff]
        %v653 = vld [vmem:[%s1 + $0x508] sm:$0xff]
        %v654 = vld [vmem:[%s1 + $0x510] sm:$0xff]
        %v655 = vld [vmem:[%s1 + $0x518] sm:$0xff]
        %v656 = vld [vmem:[%s1 + $0x520] sm:$0xff]
        %v657 = vld [vmem:[%s1 + $0x528] sm:$0xff]
        %v658 = vld [vmem:[%s1 + $0x530] sm:$0xff]
        %v659 = vld [vmem:[%s1 + $0x538] sm:$0xff]
        %v660 = vld [vmem:[%s1 + $0x540] sm:$0xff]
        %v661 = vld [vmem:[%s1 + $0x548] sm:$0xff]
        %v662 = vld [vmem:[%s1 + $0x550] sm:$0xff]
        %v663 = vld [vmem:[%s1 + $0x558] sm:$0xff]
        %v664 = vld [vmem:[%s1 + $0x560] sm:$0xff]
        %v665 = vld [vmem:[%s1 + $0x568] sm:$0xff]
        %v666 = vld [vmem:[%s1 + $0x570] sm:$0xff]
        %v667 = vld [vmem:[%s1 + $0x578] sm:$0xff]
        %v668 = vld [vmem:[%s1 + $0x580] sm:$0xff]
        %v669 = vld [vmem:[%s1 + $0x588] sm:$0xff]
        %v670 = vld [vmem:[%s1 + $0x590] sm:$0xff]
        %v671 = vld [vmem:[%s1 + $0x598] sm:$0xff]
        %v672 = vld [vmem:[%s1 + $0x5a0] sm:$0xff]
        %v673 = vld [vmem:[%s1 + $0x5a8] sm:$0xff]
        %v674 = vld [vmem:[%s1 + $0x5b0] sm:$0xff]
        %v675 = vld [vmem:[%s1 + $0x5b8] sm:$0xff]
        %v676 = vld [vmem:[%s1 + $0x5c0] sm:$0xff]
        %v677 = vld [vmem:[%s1 + $0x5c8] sm:$0xff]
        %v678 = vld [vmem:[%s1 + $0x5d0] sm:$0xff]
        %v679 = vld [vmem:[%s1 + $0x5d8] sm:$0xff]
        %v680 = vld [vmem:[%s1 + $0x5e0] sm:$0xff]
        %v681 = vld [vmem:[%s1 + $0x5e8] sm:$0xff]
        %v682 = vld [vmem:[%s1 + $0x5f0] sm:$0xff]
        %v683 = vld [vmem:[%s1 + $0x5f8] sm:$0xff]
        %v684 = vld [vmem:[%s1 + $0x600] sm:$0xff]
        %v685 = vld [vmem:[%s1 + $0x608] sm:$0xff]
        %v686 = vld [vmem:[%s1 + $0x610] sm:$0xff]
        %v687 = vld [vmem:[%s1 + $0x618] sm:$0xff]
        %v688 = vld [vmem:[%s1 + $0x620] sm:$0xff]
        %v689 = vld [vmem:[%s1 + $0x628] sm:$0xff]
        %v690 = vld [vmem:[%s1 + $0x630] sm:$0xff]
        %v691 = vld [vmem:[%s1 + $0x638] sm:$0xff]
        %v692 = vld [vmem:[%s1 + $0x640] sm:$0xff]
        %v693 = vld [vmem:[%s1 + $0x648] sm:$0xff]
        %v694 = vld [vmem:[%s1 + $0x650] sm:$0xff]
        %v695 = vld [vmem:[%s1 + $0x658] sm:$0xff]
        %v696 = vld [vmem:[%s1 + $0x660] sm:$0xff]
        %v697 = vld [vmem:[%s1 + $0x668] sm:$0xff]
        %v698 = vld [vmem:[%s1 + $0x670] sm:$0xff]
        %v699 = vld [vmem:[%s1 + $0x678] sm:$0xff]
        %v700 = vld [vmem:[%s2] sm:$0x1]
        %v702 = vlaneseq
        %v703 = vshrl.u32 %v702, 7
        %v704 = vsub.s32 0, %v703
        %v705 = vrot.slane %v700, %v704
        %v711 = vcombine.high %v488, %v488
        %v713 = vunpack.c.l.s4 1983009808
        %v714 = vunpack.c.0.s8 %v713
        %v715 = vlaneseq
        %v716 = vshrl.u32 %v715, 7
        %v717 = vsub.s32 %v714, %v716
        %v718 = vrot.slane %v488, %v717
        %v720 = vunpack.c.l.s4 1983009808
        %v721 = vunpack.c.0.s8 %v720
        %v722 = vlaneseq
        %v723 = vshrl.u32 %v722, 7
        %v724 = vsub.s32 %v721, %v723
        %v725 = vrot.slane %v711, %v724
        %v726 = vcombine.high %v718, %v718
        %v727 = vcombine.high %v725, %v725
        %v728 = vcombine.high %v489, %v489
        %v730 = vunpack.c.l.s4 1983009808
        %v731 = vunpack.c.0.s8 %v730
        %v732 = vlaneseq
        %v733 = vshrl.u32 %v732, 7
        %v734 = vsub.s32 %v731, %v733
        %v735 = vrot.slane %v489, %v734
        %v737 = vunpack.c.l.s4 1983009808
        %v738 = vunpack.c.0.s8 %v737
        %v739 = vlaneseq
        %v740 = vshrl.u32 %v739, 7
        %v741 = vsub.s32 %v738, %v740
        %v742 = vrot.slane %v728, %v741
        %v743 = vcombine.high %v735, %v735
        %v744 = vcombine.high %v742, %v742
        %v745 = vcombine.high %v490, %v490
        %v747 = vunpack.c.l.s4 1983009808
        %v748 = vunpack.c.0.s8 %v747
        %v749 = vlaneseq
        %v750 = vshrl.u32 %v749, 7
        %v751 = vsub.s32 %v748, %v750
        %v752 = vrot.slane %v490, %v751
        %v754 = vunpack.c.l.s4 1983009808
        %v755 = vunpack.c.0.s8 %v754
        %v756 = vlaneseq
        %v757 = vshrl.u32 %v756, 7
        %v758 = vsub.s32 %v755, %v757
        %v759 = vrot.slane %v745, %v758
        %v760 = vcombine.high %v752, %v752
        %v761 = vcombine.high %v759, %v759
        %v763 = vunpack.c.l.s4 1983009808
        %v764 = vunpack.c.0.s8 %v763
        %v765 = vlaneseq
        %v766 = vshrl.u32 %v765, 7
        %v767 = vsub.s32 %v764, %v766
        %v768 = vrot.slane %v491, %v767
        %782 = vmatprep.subr.mxu0 0.0
        %783 = vmatpush1.msra.mxu0 %v507
        %784 = vmatprep.subr.mxu0 0.0
        %785 = vmatpush1.msra.mxu0 %v506
        %786 = vmatprep.subr.mxu0 0.0
        %787 = vmatpush1.msra.mxu0 %v505
        %788 = vmatprep.subr.mxu0 0.0
        %789 = vmatpush1.msra.mxu0 %v504
        %790 = vmatprep.subr.mxu0 0.0
        %791 = vmatpush1.msra.mxu0 %v503
        %792 = vmatprep.subr.mxu0 0.0
        %793 = vmatpush1.msra.mxu0 %v502
        %794 = vmatprep.subr.mxu0 0.0
        %795 = vmatpush1.msra.mxu0 %v501
        %796 = vmatprep.subr.mxu0 0.0
        %797 = vmatpush1.msra.mxu0 %v500
        %798 = vmatprep.subr.mxu0 0.0
        %799 = vmatpush1.msra.mxu0 %v499
        %800 = vmatprep.subr.mxu0 0.0
        %801 = vmatpush1.msra.mxu0 %v498
        %802 = vmatprep.subr.mxu0 0.0
        %803 = vmatpush1.msra.mxu0 %v497
        %804 = vmatprep.subr.mxu0 0.0
        %805 = vmatpush1.msra.mxu0 %v496
        %806 = vmatprep.subr.mxu0 0.0
        %807 = vmatpush1.msra.mxu0 %v495
        %808 = vmatprep.subr.mxu0 0.0
        %809 = vmatpush1.msra.mxu0 %v494
        %810 = vmatprep.subr.mxu0 0.0
        %811 = vmatpush1.msra.mxu0 %v493
        %812 = vmatprep.subr.mxu0 0.0
        %813 = vmatpush1.msra.mxu0 %v492
        %814 = vmatprep.subr.mxu0 0.0
        %815 = vmatpush2.msra.mxu0 %v523
        %816 = vmatprep.subr.mxu0 0.0
        %817 = vmatpush2.msra.mxu0 %v522
        %818 = vmatprep.subr.mxu0 0.0
        %819 = vmatpush2.msra.mxu0 %v521
        %820 = vmatprep.subr.mxu0 0.0
        %821 = vmatpush2.msra.mxu0 %v520
        %822 = vmatprep.subr.mxu0 0.0
        %823 = vmatpush2.msra.mxu0 %v519
        %824 = vmatprep.subr.mxu0 0.0
        %825 = vmatpush2.msra.mxu0 %v518
        %826 = vmatprep.subr.mxu0 0.0
        %827 = vmatpush2.msra.mxu0 %v517
        %828 = vmatprep.subr.mxu0 0.0
        %829 = vmatpush2.msra.mxu0 %v516
        %830 = vmatprep.subr.mxu0 0.0
        %831 = vmatpush2.msra.mxu0 %v515
        %832 = vmatprep.subr.mxu0 0.0
        %833 = vmatpush2.msra.mxu0 %v514
        %834 = vmatprep.subr.mxu0 0.0
        %835 = vmatpush2.msra.mxu0 %v513
        %836 = vmatprep.subr.mxu0 0.0
        %837 = vmatpush2.msra.mxu0 %v512
        %838 = vmatprep.subr.mxu0 0.0
        %839 = vmatpush2.msra.mxu0 %v511
        %840 = vmatprep.subr.mxu0 0.0
        %841 = vmatpush2.msra.mxu0 %v510
        %842 = vmatprep.subr.mxu0 0.0
        %843 = vmatpush2.msra.mxu0 %v509
        %844 = vmatprep.subr.mxu0 0.0
        %845 = vmatpush2.msra.mxu0 %v508
        %846 = vmatprep.mubr.f32.mxu0 %v726
        %847 = vmatmul.mubr.f32.gmra.mxu0 %v718
        %v848 = vpop.f32.mrf.mxu0
        %v849 = vadd.f32 %v705, %v848
        %v850 = vpop.f32.mrf.mxu0
        %851 = vdwg.mxu0
        %852 = vmatprep.subr.mxu0 0.0
        %853 = vmatpush1.msra.mxu0 %v539
        %854 = vmatprep.subr.mxu0 0.0
        %855 = vmatpush1.msra.mxu0 %v538
        %856 = vmatprep.subr.mxu0 0.0
        %857 = vmatpush1.msra.mxu0 %v537
        %858 = vmatprep.subr.mxu0 0.0
        %859 = vmatpush1.msra.mxu0 %v536
        %860 = vmatprep.subr.mxu0 0.0
        %861 = vmatpush1.msra.mxu0 %v535
        %862 = vmatprep.subr.mxu0 0.0
        %863 = vmatpush1.msra.mxu0 %v534
        %864 = vmatprep.subr.mxu0 0.0
        %865 = vmatpush1.msra.mxu0 %v533
        %866 = vmatprep.subr.mxu0 0.0
        %867 = vmatpush1.msra.mxu0 %v532
        %868 = vmatprep.subr.mxu0 0.0
        %869 = vmatpush1.msra.mxu0 %v531
        %870 = vmatprep.subr.mxu0 0.0
        %871 = vmatpush1.msra.mxu0 %v530
        %872 = vmatprep.subr.mxu0 0.0
        %873 = vmatpush1.msra.mxu0 %v529
        %874 = vmatprep.subr.mxu0 0.0
        %875 = vmatpush1.msra.mxu0 %v528
        %876 = vmatprep.subr.mxu0 0.0
        %877 = vmatpush1.msra.mxu0 %v527
        %878 = vmatprep.subr.mxu0 0.0
        %879 = vmatpush1.msra.mxu0 %v526
        %880 = vmatprep.subr.mxu0 0.0
        %881 = vmatpush1.msra.mxu0 %v525
        %882 = vmatprep.subr.mxu0 0.0
        %883 = vmatpush1.msra.mxu0 %v524
        %884 = vmatprep.subr.mxu0 0.0
        %885 = vmatpush2.msra.mxu0 %v555
        %886 = vmatprep.subr.mxu0 0.0
        %887 = vmatpush2.msra.mxu0 %v554
        %888 = vmatprep.subr.mxu0 0.0
        %889 = vmatpush2.msra.mxu0 %v553
        %890 = vmatprep.subr.mxu0 0.0
        %891 = vmatpush2.msra.mxu0 %v552
        %892 = vmatprep.subr.mxu0 0.0
        %893 = vmatpush2.msra.mxu0 %v551
        %894 = vmatprep.subr.mxu0 0.0
        %895 = vmatpush2.msra.mxu0 %v550
        %896 = vmatprep.subr.mxu0 0.0
        %897 = vmatpush2.msra.mxu0 %v549
        %898 = vmatprep.subr.mxu0 0.0
        %899 = vmatpush2.msra.mxu0 %v548
        %900 = vmatprep.subr.mxu0 0.0
        %901 = vmatpush2.msra.mxu0 %v547
        %902 = vmatprep.subr.mxu0 0.0
        %903 = vmatpush2.msra.mxu0 %v546
        %904 = vmatprep.subr.mxu0 0.0
        %905 = vmatpush2.msra.mxu0 %v545
        %906 = vmatprep.subr.mxu0 0.0
        %907 = vmatpush2.msra.mxu0 %v544
        %908 = vmatprep.subr.mxu0 0.0
        %909 = vmatpush2.msra.mxu0 %v543
        %910 = vmatprep.subr.mxu0 0.0
        %911 = vmatpush2.msra.mxu0 %v542
        %912 = vmatprep.subr.mxu0 0.0
        %913 = vmatpush2.msra.mxu0 %v541
        %914 = vmatprep.subr.mxu0 0.0
        %915 = vmatpush2.msra.mxu0 %v540
        %916 = vmatprep.mubr.f32.mxu0 %v727
        %917 = vmatmul.mubr.f32.gmra.mxu0 %v725
        %v918 = vpop.f32.mrf.mxu0
        %v919 = vadd.f32 %v849, %v918
        %v920 = vpop.f32.mrf.mxu0
        %921 = vdwg.mxu0
        %922 = vmatprep.subr.mxu0 0.0
        %923 = vmatpush1.msra.mxu0 %v571
        %924 = vmatprep.subr.mxu0 0.0
        %925 = vmatpush1.msra.mxu0 %v570
        %926 = vmatprep.subr.mxu0 0.0
        %927 = vmatpush1.msra.mxu0 %v569
        %928 = vmatprep.subr.mxu0 0.0
        %929 = vmatpush1.msra.mxu0 %v568
        %930 = vmatprep.subr.mxu0 0.0
        %931 = vmatpush1.msra.mxu0 %v567
        %932 = vmatprep.subr.mxu0 0.0
        %933 = vmatpush1.msra.mxu0 %v566
        %934 = vmatprep.subr.mxu0 0.0
        %935 = vmatpush1.msra.mxu0 %v565
        %936 = vmatprep.subr.mxu0 0.0
        %937 = vmatpush1.msra.mxu0 %v564
        %938 = vmatprep.subr.mxu0 0.0
        %939 = vmatpush1.msra.mxu0 %v563
        %940 = vmatprep.subr.mxu0 0.0
        %941 = vmatpush1.msra.mxu0 %v562
        %942 = vmatprep.subr.mxu0 0.0
        %943 = vmatpush1.msra.mxu0 %v561
        %944 = vmatprep.subr.mxu0 0.0
        %945 = vmatpush1.msra.mxu0 %v560
        %946 = vmatprep.subr.mxu0 0.0
        %947 = vmatpush1.msra.mxu0 %v559
        %948 = vmatprep.subr.mxu0 0.0
        %949 = vmatpush1.msra.mxu0 %v558
        %950 = vmatprep.subr.mxu0 0.0
        %951 = vmatpush1.msra.mxu0 %v557
        %952 = vmatprep.subr.mxu0 0.0
        %953 = vmatpush1.msra.mxu0 %v556
        %954 = vmatprep.subr.mxu0 0.0
        %955 = vmatpush2.msra.mxu0 %v587
        %956 = vmatprep.subr.mxu0 0.0
        %957 = vmatpush2.msra.mxu0 %v586
        %958 = vmatprep.subr.mxu0 0.0
        %959 = vmatpush2.msra.mxu0 %v585
        %960 = vmatprep.subr.mxu0 0.0
        %961 = vmatpush2.msra.mxu0 %v584
        %962 = vmatprep.subr.mxu0 0.0
        %963 = vmatpush2.msra.mxu0 %v583
        %964 = vmatprep.subr.mxu0 0.0
        %965 = vmatpush2.msra.mxu0 %v582
        %966 = vmatprep.subr.mxu0 0.0
        %967 = vmatpush2.msra.mxu0 %v581
        %968 = vmatprep.subr.mxu0 0.0
        %969 = vmatpush2.msra.mxu0 %v580
        %970 = vmatprep.subr.mxu0 0.0
        %971 = vmatpush2.msra.mxu0 %v579
        %972 = vmatprep.subr.mxu0 0.0
        %973 = vmatpush2.msra.mxu0 %v578
        %974 = vmatprep.subr.mxu0 0.0
        %975 = vmatpush2.msra.mxu0 %v577
        %976 = vmatprep.subr.mxu0 0.0
        %977 = vmatpush2.msra.mxu0 %v576
        %978 = vmatprep.subr.mxu0 0.0
        %979 = vmatpush2.msra.mxu0 %v575
        %980 = vmatprep.subr.mxu0 0.0
        %981 = vmatpush2.msra.mxu0 %v574
        %982 = vmatprep.subr.mxu0 0.0
        %983 = vmatpush2.msra.mxu0 %v573
        %984 = vmatprep.subr.mxu0 0.0
        %985 = vmatpush2.msra.mxu0 %v572
        %986 = vmatprep.mubr.f32.mxu0 %v743
        %987 = vmatmul.mubr.f32.gmra.mxu0 %v735
        %v988 = vpop.f32.mrf.mxu0
        %v989 = vadd.f32 %v919, %v988
        %v990 = vpop.f32.mrf.mxu0
        %991 = vdwg.mxu0
        %992 = vmatprep.subr.mxu0 0.0
        %993 = vmatpush1.msra.mxu0 %v603
        %994 = vmatprep.subr.mxu0 0.0
        %995 = vmatpush1.msra.mxu0 %v602
        %996 = vmatprep.subr.mxu0 0.0
        %997 = vmatpush1.msra.mxu0 %v601
        %998 = vmatprep.subr.mxu0 0.0
        %999 = vmatpush1.msra.mxu0 %v600
        %1000 = vmatprep.subr.mxu0 0.0
        %1001 = vmatpush1.msra.mxu0 %v599
        %1002 = vmatprep.subr.mxu0 0.0
        %1003 = vmatpush1.msra.mxu0 %v598
        %1004 = vmatprep.subr.mxu0 0.0
        %1005 = vmatpush1.msra.mxu0 %v597
        %1006 = vmatprep.subr.mxu0 0.0
        %1007 = vmatpush1.msra.mxu0 %v596
        %1008 = vmatprep.subr.mxu0 0.0
        %1009 = vmatpush1.msra.mxu0 %v595
        %1010 = vmatprep.subr.mxu0 0.0
        %1011 = vmatpush1.msra.mxu0 %v594
        %1012 = vmatprep.subr.mxu0 0.0
        %1013 = vmatpush1.msra.mxu0 %v593
        %1014 = vmatprep.subr.mxu0 0.0
        %1015 = vmatpush1.msra.mxu0 %v592
        %1016 = vmatprep.subr.mxu0 0.0
        %1017 = vmatpush1.msra.mxu0 %v591
        %1018 = vmatprep.subr.mxu0 0.0
        %1019 = vmatpush1.msra.mxu0 %v590
        %1020 = vmatprep.subr.mxu0 0.0
        %1021 = vmatpush1.msra.mxu0 %v589
        %1022 = vmatprep.subr.mxu0 0.0
        %1023 = vmatpush1.msra.mxu0 %v588
        %1024 = vmatprep.subr.mxu0 0.0
        %1025 = vmatpush2.msra.mxu0 %v619
        %1026 = vmatprep.subr.mxu0 0.0
        %1027 = vmatpush2.msra.mxu0 %v618
        %1028 = vmatprep.subr.mxu0 0.0
        %1029 = vmatpush2.msra.mxu0 %v617
        %1030 = vmatprep.subr.mxu0 0.0
        %1031 = vmatpush2.msra.mxu0 %v616
        %1032 = vmatprep.subr.mxu0 0.0
        %1033 = vmatpush2.msra.mxu0 %v615
        %1034 = vmatprep.subr.mxu0 0.0
        %1035 = vmatpush2.msra.mxu0 %v614
        %1036 = vmatprep.subr.mxu0 0.0
        %1037 = vmatpush2.msra.mxu0 %v613
        %1038 = vmatprep.subr.mxu0 0.0
        %1039 = vmatpush2.msra.mxu0 %v612
        %1040 = vmatprep.subr.mxu0 0.0
        %1041 = vmatpush2.msra.mxu0 %v611
        %1042 = vmatprep.subr.mxu0 0.0
        %1043 = vmatpush2.msra.mxu0 %v610
        %1044 = vmatprep.subr.mxu0 0.0
        %1045 = vmatpush2.msra.mxu0 %v609
        %1046 = vmatprep.subr.mxu0 0.0
        %1047 = vmatpush2.msra.mxu0 %v608
        %1048 = vmatprep.subr.mxu0 0.0
        %1049 = vmatpush2.msra.mxu0 %v607
        %1050 = vmatprep.subr.mxu0 0.0
        %1051 = vmatpush2.msra.mxu0 %v606
        %1052 = vmatprep.subr.mxu0 0.0
        %1053 = vmatpush2.msra.mxu0 %v605
        %1054 = vmatprep.subr.mxu0 0.0
        %1055 = vmatpush2.msra.mxu0 %v604
        %1056 = vmatprep.mubr.f32.mxu0 %v744
        %1057 = vmatmul.mubr.f32.gmra.mxu0 %v742
        %v1058 = vpop.f32.mrf.mxu0
        %v1059 = vadd.f32 %v989, %v1058
        %v1060 = vpop.f32.mrf.mxu0
        %1061 = vdwg.mxu0
        %1062 = vmatprep.subr.mxu0 0.0
        %1063 = vmatpush1.msra.mxu0 %v635
        %1064 = vmatprep.subr.mxu0 0.0
        %1065 = vmatpush1.msra.mxu0 %v634
        %1066 = vmatprep.subr.mxu0 0.0
        %1067 = vmatpush1.msra.mxu0 %v633
        %1068 = vmatprep.subr.mxu0 0.0
        %1069 = vmatpush1.msra.mxu0 %v632
        %1070 = vmatprep.subr.mxu0 0.0
        %1071 = vmatpush1.msra.mxu0 %v631
        %1072 = vmatprep.subr.mxu0 0.0
        %1073 = vmatpush1.msra.mxu0 %v630
        %1074 = vmatprep.subr.mxu0 0.0
        %1075 = vmatpush1.msra.mxu0 %v629
        %1076 = vmatprep.subr.mxu0 0.0
        %1077 = vmatpush1.msra.mxu0 %v628
        %1078 = vmatprep.subr.mxu0 0.0
        %1079 = vmatpush1.msra.mxu0 %v627
        %1080 = vmatprep.subr.mxu0 0.0
        %1081 = vmatpush1.msra.mxu0 %v626
        %1082 = vmatprep.subr.mxu0 0.0
        %1083 = vmatpush1.msra.mxu0 %v625
        %1084 = vmatprep.subr.mxu0 0.0
        %1085 = vmatpush1.msra.mxu0 %v624
        %1086 = vmatprep.subr.mxu0 0.0
        %1087 = vmatpush1.msra.mxu0 %v623
        %1088 = vmatprep.subr.mxu0 0.0
        %1089 = vmatpush1.msra.mxu0 %v622
        %1090 = vmatprep.subr.mxu0 0.0
        %1091 = vmatpush1.msra.mxu0 %v621
        %1092 = vmatprep.subr.mxu0 0.0
        %1093 = vmatpush1.msra.mxu0 %v620
        %1094 = vmatprep.subr.mxu0 0.0
        %1095 = vmatpush2.msra.mxu0 %v651
        %1096 = vmatprep.subr.mxu0 0.0
        %1097 = vmatpush2.msra.mxu0 %v650
        %1098 = vmatprep.subr.mxu0 0.0
        %1099 = vmatpush2.msra.mxu0 %v649
        %1100 = vmatprep.subr.mxu0 0.0
        %1101 = vmatpush2.msra.mxu0 %v648
        %1102 = vmatprep.subr.mxu0 0.0
        %1103 = vmatpush2.msra.mxu0 %v647
        %1104 = vmatprep.subr.mxu0 0.0
        %1105 = vmatpush2.msra.mxu0 %v646
        %1106 = vmatprep.subr.mxu0 0.0
        %1107 = vmatpush2.msra.mxu0 %v645
        %1108 = vmatprep.subr.mxu0 0.0
        %1109 = vmatpush2.msra.mxu0 %v644
        %1110 = vmatprep.subr.mxu0 0.0
        %1111 = vmatpush2.msra.mxu0 %v643
        %1112 = vmatprep.subr.mxu0 0.0
        %1113 = vmatpush2.msra.mxu0 %v642
        %1114 = vmatprep.subr.mxu0 0.0
        %1115 = vmatpush2.msra.mxu0 %v641
        %1116 = vmatprep.subr.mxu0 0.0
        %1117 = vmatpush2.msra.mxu0 %v640
        %1118 = vmatprep.subr.mxu0 0.0
        %1119 = vmatpush2.msra.mxu0 %v639
        %1120 = vmatprep.subr.mxu0 0.0
        %1121 = vmatpush2.msra.mxu0 %v638
        %1122 = vmatprep.subr.mxu0 0.0
        %1123 = vmatpush2.msra.mxu0 %v637
        %1124 = vmatprep.subr.mxu0 0.0
        %1125 = vmatpush2.msra.mxu0 %v636
        %1126 = vmatprep.mubr.f32.mxu0 %v760
        %1127 = vmatmul.mubr.f32.gmra.mxu0 %v752
        %v1128 = vpop.f32.mrf.mxu0
        %v1129 = vadd.f32 %v1059, %v1128
        %v1130 = vpop.f32.mrf.mxu0
        %1131 = vdwg.mxu0
        %1132 = vmatprep.subr.mxu0 0.0
        %1133 = vmatpush1.msra.mxu0 %v667
        %1134 = vmatprep.subr.mxu0 0.0
        %1135 = vmatpush1.msra.mxu0 %v666
        %1136 = vmatprep.subr.mxu0 0.0
        %1137 = vmatpush1.msra.mxu0 %v665
        %1138 = vmatprep.subr.mxu0 0.0
        %1139 = vmatpush1.msra.mxu0 %v664
        %1140 = vmatprep.subr.mxu0 0.0
        %1141 = vmatpush1.msra.mxu0 %v663
        %1142 = vmatprep.subr.mxu0 0.0
        %1143 = vmatpush1.msra.mxu0 %v662
        %1144 = vmatprep.subr.mxu0 0.0
        %1145 = vmatpush1.msra.mxu0 %v661
        %1146 = vmatprep.subr.mxu0 0.0
        %1147 = vmatpush1.msra.mxu0 %v660
        %1148 = vmatprep.subr.mxu0 0.0
        %1149 = vmatpush1.msra.mxu0 %v659
        %1150 = vmatprep.subr.mxu0 0.0
        %1151 = vmatpush1.msra.mxu0 %v658
        %1152 = vmatprep.subr.mxu0 0.0
        %1153 = vmatpush1.msra.mxu0 %v657
        %1154 = vmatprep.subr.mxu0 0.0
        %1155 = vmatpush1.msra.mxu0 %v656
        %1156 = vmatprep.subr.mxu0 0.0
        %1157 = vmatpush1.msra.mxu0 %v655
        %1158 = vmatprep.subr.mxu0 0.0
        %1159 = vmatpush1.msra.mxu0 %v654
        %1160 = vmatprep.subr.mxu0 0.0
        %1161 = vmatpush1.msra.mxu0 %v653
        %1162 = vmatprep.subr.mxu0 0.0
        %1163 = vmatpush1.msra.mxu0 %v652
        %1164 = vmatprep.subr.mxu0 0.0
        %1165 = vmatpush2.msra.mxu0 %v683
        %1166 = vmatprep.subr.mxu0 0.0
        %1167 = vmatpush2.msra.mxu0 %v682
        %1168 = vmatprep.subr.mxu0 0.0
        %1169 = vmatpush2.msra.mxu0 %v681
        %1170 = vmatprep.subr.mxu0 0.0
        %1171 = vmatpush2.msra.mxu0 %v680
        %1172 = vmatprep.subr.mxu0 0.0
        %1173 = vmatpush2.msra.mxu0 %v679
        %1174 = vmatprep.subr.mxu0 0.0
        %1175 = vmatpush2.msra.mxu0 %v678
        %1176 = vmatprep.subr.mxu0 0.0
        %1177 = vmatpush2.msra.mxu0 %v677
        %1178 = vmatprep.subr.mxu0 0.0
        %1179 = vmatpush2.msra.mxu0 %v676
        %1180 = vmatprep.subr.mxu0 0.0
        %1181 = vmatpush2.msra.mxu0 %v675
        %1182 = vmatprep.subr.mxu0 0.0
        %1183 = vmatpush2.msra.mxu0 %v674
        %1184 = vmatprep.subr.mxu0 0.0
        %1185 = vmatpush2.msra.mxu0 %v673
        %1186 = vmatprep.subr.mxu0 0.0
        %1187 = vmatpush2.msra.mxu0 %v672
        %1188 = vmatprep.subr.mxu0 0.0
        %1189 = vmatpush2.msra.mxu0 %v671
        %1190 = vmatprep.subr.mxu0 0.0
        %1191 = vmatpush2.msra.mxu0 %v670
        %1192 = vmatprep.subr.mxu0 0.0
        %1193 = vmatpush2.msra.mxu0 %v669
        %1194 = vmatprep.subr.mxu0 0.0
        %1195 = vmatpush2.msra.mxu0 %v668
        %1196 = vmatprep.mubr.f32.mxu0 %v761
        %1197 = vmatmul.mubr.f32.gmra.mxu0 %v759
        %v1198 = vpop.f32.mrf.mxu0
        %v1199 = vadd.f32 %v1129, %v1198
        %v1200 = vpop.f32.mrf.mxu0
        %1201 = vdwg.mxu0
        %1202 = vmatprep.subr.mxu0 0.0
        %1203 = vmatpush1.msra.mxu0 %v699
        %1204 = vmatprep.subr.mxu0 0.0
        %1205 = vmatpush1.msra.mxu0 %v698
        %1206 = vmatprep.subr.mxu0 0.0
        %1207 = vmatpush1.msra.mxu0 %v697
        %1208 = vmatprep.subr.mxu0 0.0
        %1209 = vmatpush1.msra.mxu0 %v696
        %1210 = vmatprep.subr.mxu0 0.0
        %1211 = vmatpush1.msra.mxu0 %v695
        %1212 = vmatprep.subr.mxu0 0.0
        %1213 = vmatpush1.msra.mxu0 %v694
        %1214 = vmatprep.subr.mxu0 0.0
        %1215 = vmatpush1.msra.mxu0 %v693
        %1216 = vmatprep.subr.mxu0 0.0
        %1217 = vmatpush1.msra.mxu0 %v692
        %1218 = vmatprep.subr.mxu0 0.0
        %1219 = vmatpush1.msra.mxu0 %v691
        %1220 = vmatprep.subr.mxu0 0.0
        %1221 = vmatpush1.msra.mxu0 %v690
        %1222 = vmatprep.subr.mxu0 0.0
        %1223 = vmatpush1.msra.mxu0 %v689
        %1224 = vmatprep.subr.mxu0 0.0
        %1225 = vmatpush1.msra.mxu0 %v688
        %1226 = vmatprep.subr.mxu0 0.0
        %1227 = vmatpush1.msra.mxu0 %v687
        %1228 = vmatprep.subr.mxu0 0.0
        %1229 = vmatpush1.msra.mxu0 %v686
        %1230 = vmatprep.subr.mxu0 0.0
        %1231 = vmatpush1.msra.mxu0 %v685
        %1232 = vmatprep.subr.mxu0 0.0
        %1233 = vmatpush1.msra.mxu0 %v684
        %1234 = vmatprep.subr.mxu0 0.0
        %1235 = vmatpush2.msra.mxu0 0.0
        %1236 = vmatprep.subr.mxu0 0.0
        %1237 = vmatpush2.msra.mxu0 0.0
        %1238 = vmatprep.subr.mxu0 0.0
        %1239 = vmatpush2.msra.mxu0 0.0
        %1240 = vmatprep.subr.mxu0 0.0
        %1241 = vmatpush2.msra.mxu0 0.0
        %1242 = vmatprep.subr.mxu0 0.0
        %1243 = vmatpush2.msra.mxu0 0.0
        %1244 = vmatprep.subr.mxu0 0.0
        %1245 = vmatpush2.msra.mxu0 0.0
        %1246 = vmatprep.subr.mxu0 0.0
        %1247 = vmatpush2.msra.mxu0 0.0
        %1248 = vmatprep.subr.mxu0 0.0
        %1249 = vmatpush2.msra.mxu0 0.0
        %1250 = vmatprep.subr.mxu0 0.0
        %1251 = vmatpush2.msra.mxu0 0.0
        %1252 = vmatprep.subr.mxu0 0.0
        %1253 = vmatpush2.msra.mxu0 0.0
        %1254 = vmatprep.subr.mxu0 0.0
        %1255 = vmatpush2.msra.mxu0 0.0
        %1256 = vmatprep.subr.mxu0 0.0
        %1257 = vmatpush2.msra.mxu0 0.0
        %1258 = vmatprep.subr.mxu0 0.0
        %1259 = vmatpush2.msra.mxu0 0.0
        %1260 = vmatprep.subr.mxu0 0.0
        %1261 = vmatpush2.msra.mxu0 0.0
        %1262 = vmatprep.subr.mxu0 0.0
        %1263 = vmatpush2.msra.mxu0 0.0
        %1264 = vmatprep.subr.mxu0 0.0
        %1265 = vmatpush2.msra.mxu0 0.0
        %1266 = vmatprep.mubr.f32.mxu0 0.0
        %1267 = vmatmul.mubr.f32.gmra.mxu0 %v768
        %v1268 = vpop.f32.mrf.mxu0
        %v1269 = vadd.f32 %v1199, %v1268
        %v1270 = vpop.f32.mrf.mxu0
        %1271 = vdwg.mxu0
        %v1272 = vld [vmem:[%s447] sm:$0xff]
        %v1273 = vld [vmem:[%s447 + $0x8] sm:$0xff]
        %v1274 = vld [vmem:[%s447 + $0x10] sm:$0xff]
        %v1275 = vld [vmem:[%s447 + $0x18] sm:$0xff]
        %v1276 = vld [vmem:[%s447 + $0x20] sm:$0xff]
        %v1277 = vld [vmem:[%s447 + $0x28] sm:$0xff]
        %v1278 = vld [vmem:[%s447 + $0x30] sm:$0xff]
        %v1279 = vld [vmem:[%s447 + $0x38] sm:$0xff]
        %v1280 = vld [vmem:[%s447 + $0x40] sm:$0xff]
        %v1281 = vld [vmem:[%s447 + $0x48] sm:$0xff]
        %v1282 = vld [vmem:[%s447 + $0x50] sm:$0xff]
        %v1283 = vld [vmem:[%s447 + $0x58] sm:$0xff]
        %v1284 = vld [vmem:[%s447 + $0x60] sm:$0xff]
        %v1285 = vld [vmem:[%s447 + $0x68] sm:$0xff]
        %v1286 = vld [vmem:[%s447 + $0x70] sm:$0xff]
        %v1287 = vld [vmem:[%s447 + $0x78] sm:$0xff]
        %v1288 = vld [vmem:[%s447 + $0x80] sm:$0xff]
        %v1289 = vld [vmem:[%s447 + $0x88] sm:$0xff]
        %v1290 = vld [vmem:[%s447 + $0x90] sm:$0xff]
        %v1291 = vld [vmem:[%s447 + $0x98] sm:$0xff]
        %v1292 = vld [vmem:[%s447 + $0xa0] sm:$0xff]
        %v1293 = vld [vmem:[%s447 + $0xa8] sm:$0xff]
        %v1294 = vld [vmem:[%s447 + $0xb0] sm:$0xff]
        %v1295 = vld [vmem:[%s447 + $0xb8] sm:$0xff]
        %v1296 = vld [vmem:[%s447 + $0xc0] sm:$0xff]
        %v1297 = vld [vmem:[%s447 + $0xc8] sm:$0xff]
        %v1298 = vld [vmem:[%s447 + $0xd0] sm:$0xff]
        %v1299 = vld [vmem:[%s447 + $0xd8] sm:$0xff]
        %v1300 = vld [vmem:[%s447 + $0xe0] sm:$0xff]
        %v1301 = vld [vmem:[%s447 + $0xe8] sm:$0xff]
        %v1302 = vld [vmem:[%s447 + $0xf0] sm:$0xff]
        %v1303 = vld [vmem:[%s447 + $0xf8] sm:$0xff]
        %v1304 = vld [vmem:[%s447 + $0x100] sm:$0xff]
        %v1305 = vld [vmem:[%s447 + $0x108] sm:$0xff]
        %v1306 = vld [vmem:[%s447 + $0x110] sm:$0xff]
        %v1307 = vld [vmem:[%s447 + $0x118] sm:$0xff]
        %v1308 = vld [vmem:[%s447 + $0x120] sm:$0xff]
        %v1309 = vld [vmem:[%s447 + $0x128] sm:$0xff]
        %v1310 = vld [vmem:[%s447 + $0x130] sm:$0xff]
        %v1311 = vld [vmem:[%s447 + $0x138] sm:$0xff]
        %v1312 = vld [vmem:[%s447 + $0x140] sm:$0xff]
        %v1313 = vld [vmem:[%s447 + $0x148] sm:$0xff]
        %v1314 = vld [vmem:[%s447 + $0x150] sm:$0xff]
        %v1315 = vld [vmem:[%s447 + $0x158] sm:$0xff]
        %v1316 = vld [vmem:[%s447 + $0x160] sm:$0xff]
        %v1317 = vld [vmem:[%s447 + $0x168] sm:$0xff]
        %v1318 = vld [vmem:[%s447 + $0x170] sm:$0xff]
        %v1319 = vld [vmem:[%s447 + $0x178] sm:$0xff]
        %v1320 = vld [vmem:[%s447 + $0x180] sm:$0xff]
        %v1321 = vld [vmem:[%s447 + $0x188] sm:$0xff]
        %v1322 = vld [vmem:[%s447 + $0x190] sm:$0xff]
        %v1323 = vld [vmem:[%s447 + $0x198] sm:$0xff]
        %v1324 = vld [vmem:[%s447 + $0x1a0] sm:$0xff]
        %v1325 = vld [vmem:[%s447 + $0x1a8] sm:$0xff]
        %v1326 = vld [vmem:[%s447 + $0x1b0] sm:$0xff]
        %v1327 = vld [vmem:[%s447 + $0x1b8] sm:$0xff]
        %v1328 = vld [vmem:[%s447 + $0x1c0] sm:$0xff]
        %v1329 = vld [vmem:[%s447 + $0x1c8] sm:$0xff]
        %v1330 = vld [vmem:[%s447 + $0x1d0] sm:$0xff]
        %v1331 = vld [vmem:[%s447 + $0x1d8] sm:$0xff]
        %v1332 = vld [vmem:[%s447 + $0x1e0] sm:$0xff]
        %v1333 = vld [vmem:[%s447 + $0x1e8] sm:$0xff]
        %v1334 = vld [vmem:[%s447 + $0x1f0] sm:$0xff]
        %v1335 = vld [vmem:[%s447 + $0x1f8] sm:$0xff]
        %v1336 = vld [vmem:[%s447 + $0x200] sm:$0xff]
        %v1337 = vld [vmem:[%s447 + $0x208] sm:$0xff]
        %v1338 = vld [vmem:[%s447 + $0x210] sm:$0xff]
        %v1339 = vld [vmem:[%s447 + $0x218] sm:$0xff]
        %v1340 = vld [vmem:[%s447 + $0x220] sm:$0xff]
        %v1341 = vld [vmem:[%s447 + $0x228] sm:$0xff]
        %v1342 = vld [vmem:[%s447 + $0x230] sm:$0xff]
        %v1343 = vld [vmem:[%s447 + $0x238] sm:$0xff]
        %v1344 = vld [vmem:[%s447 + $0x240] sm:$0xff]
        %v1345 = vld [vmem:[%s447 + $0x248] sm:$0xff]
        %v1346 = vld [vmem:[%s447 + $0x250] sm:$0xff]
        %v1347 = vld [vmem:[%s447 + $0x258] sm:$0xff]
        %v1348 = vld [vmem:[%s447 + $0x260] sm:$0xff]
        %v1349 = vld [vmem:[%s447 + $0x268] sm:$0xff]
        %v1350 = vld [vmem:[%s447 + $0x270] sm:$0xff]
        %v1351 = vld [vmem:[%s447 + $0x278] sm:$0xff]
        %v1352 = vld [vmem:[%s447 + $0x280] sm:$0xff]
        %v1353 = vld [vmem:[%s447 + $0x288] sm:$0xff]
        %v1354 = vld [vmem:[%s447 + $0x290] sm:$0xff]
        %v1355 = vld [vmem:[%s447 + $0x298] sm:$0xff]
        %v1356 = vld [vmem:[%s447 + $0x2a0] sm:$0xff]
        %v1357 = vld [vmem:[%s447 + $0x2a8] sm:$0xff]
        %v1358 = vld [vmem:[%s447 + $0x2b0] sm:$0xff]
        %v1359 = vld [vmem:[%s447 + $0x2b8] sm:$0xff]
        %v1360 = vld [vmem:[%s447 + $0x2c0] sm:$0xff]
        %v1361 = vld [vmem:[%s447 + $0x2c8] sm:$0xff]
        %v1362 = vld [vmem:[%s447 + $0x2d0] sm:$0xff]
        %v1363 = vld [vmem:[%s447 + $0x2d8] sm:$0xff]
        %v1364 = vld [vmem:[%s447 + $0x2e0] sm:$0xff]
        %v1365 = vld [vmem:[%s447 + $0x2e8] sm:$0xff]
        %v1366 = vld [vmem:[%s447 + $0x2f0] sm:$0xff]
        %v1367 = vld [vmem:[%s447 + $0x2f8] sm:$0xff]
        %v1368 = vld [vmem:[%s447 + $0x300] sm:$0xff]
        %v1369 = vld [vmem:[%s447 + $0x308] sm:$0xff]
        %v1370 = vld [vmem:[%s447 + $0x310] sm:$0xff]
        %v1371 = vld [vmem:[%s447 + $0x318] sm:$0xff]
        %v1372 = vld [vmem:[%s447 + $0x320] sm:$0xff]
        %v1373 = vld [vmem:[%s447 + $0x328] sm:$0xff]
        %v1374 = vld [vmem:[%s447 + $0x330] sm:$0xff]
        %v1375 = vld [vmem:[%s447 + $0x338] sm:$0xff]
        %v1376 = vld [vmem:[%s447 + $0x340] sm:$0xff]
        %v1377 = vld [vmem:[%s447 + $0x348] sm:$0xff]
        %v1378 = vld [vmem:[%s447 + $0x350] sm:$0xff]
        %v1379 = vld [vmem:[%s447 + $0x358] sm:$0xff]
        %v1380 = vld [vmem:[%s447 + $0x360] sm:$0xff]
        %v1381 = vld [vmem:[%s447 + $0x368] sm:$0xff]
        %v1382 = vld [vmem:[%s447 + $0x370] sm:$0xff]
        %v1383 = vld [vmem:[%s447 + $0x378] sm:$0xff]
        %v1384 = vld [vmem:[%s480] sm:$0xff]
        %v1386 = vlaneseq
        %v1387 = vshrl.u32 %v1386, 7
        %v1388 = vsub.s32 0, %v1387
        %v1389 = vrot.slane %v1384, %v1388
        %v1390 = vlaneseq
        %v1391 = vshrl.u32 %v1390, 7
        %v1392 = vsub.s32 1, %v1391
        %v1393 = vrot.slane %v1384, %v1392
        %v1394 = vlaneseq
        %v1395 = vshrl.u32 %v1394, 7
        %v1396 = vsub.s32 2, %v1395
        %v1397 = vrot.slane %v1384, %v1396
        %v1398 = vlaneseq
        %v1399 = vshrl.u32 %v1398, 7
        %v1400 = vsub.s32 3, %v1399
        %v1401 = vrot.slane %v1384, %v1400
        %v1402 = vlaneseq
        %v1403 = vshrl.u32 %v1402, 7
        %v1404 = vsub.s32 4, %v1403
        %v1405 = vrot.slane %v1384, %v1404
        %v1406 = vlaneseq
        %v1407 = vshrl.u32 %v1406, 7
        %v1408 = vsub.s32 5, %v1407
        %v1409 = vrot.slane %v1384, %v1408
        %v1410 = vlaneseq
        %v1411 = vshrl.u32 %v1410, 7
        %v1412 = vsub.s32 6, %v1411
        %v1413 = vrot.slane %v1384, %v1412
        %1421 = vmatprep.subr.mxu0 %v1378
        %1422 = vmatpush1.msra.mxu0 %v1377
        %1423 = vmatprep.subr.mxu0 %v1371
        %1424 = vmatpush1.msra.mxu0 %v1370
        %1425 = vmatprep.subr.mxu0 %v1364
        %1426 = vmatpush1.msra.mxu0 %v1363
        %1427 = vmatprep.subr.mxu0 %v1357
        %1428 = vmatpush1.msra.mxu0 %v1356
        %1429 = vmatprep.subr.mxu0 %v1350
        %1430 = vmatpush1.msra.mxu0 %v1349
        %1431 = vmatprep.subr.mxu0 %v1343
        %1432 = vmatpush1.msra.mxu0 %v1342
        %1433 = vmatprep.subr.mxu0 %v1336
        %1434 = vmatpush1.msra.mxu0 %v1335
        %1435 = vmatprep.subr.mxu0 %v1329
        %1436 = vmatpush1.msra.mxu0 %v1328
        %1437 = vmatprep.subr.mxu0 %v1322
        %1438 = vmatpush1.msra.mxu0 %v1321
        %1439 = vmatprep.subr.mxu0 %v1315
        %1440 = vmatpush1.msra.mxu0 %v1314
        %1441 = vmatprep.subr.mxu0 %v1308
        %1442 = vmatpush1.msra.mxu0 %v1307
        %1443 = vmatprep.subr.mxu0 %v1301
        %1444 = vmatpush1.msra.mxu0 %v1300
        %1445 = vmatprep.subr.mxu0 %v1294
        %1446 = vmatpush1.msra.mxu0 %v1293
        %1447 = vmatprep.subr.mxu0 %v1287
        %1448 = vmatpush1.msra.mxu0 %v1286
        %1449 = vmatprep.subr.mxu0 %v1280
        %1450 = vmatpush1.msra.mxu0 %v1279
        %1451 = vmatprep.subr.mxu0 %v1273
        %1452 = vmatpush1.msra.mxu0 %v1272
        %1453 = vmatprep.subr.mxu0 0.0
        %1454 = vmatpush2.msra.mxu0 0.0
        %1455 = vmatprep.subr.mxu0 0.0
        %1456 = vmatpush2.msra.mxu0 0.0
        %1457 = vmatprep.subr.mxu0 0.0
        %1458 = vmatpush2.msra.mxu0 0.0
        %1459 = vmatprep.subr.mxu0 0.0
        %1460 = vmatpush2.msra.mxu0 0.0
        %1461 = vmatprep.subr.mxu0 0.0
        %1462 = vmatpush2.msra.mxu0 0.0
        %1463 = vmatprep.subr.mxu0 0.0
        %1464 = vmatpush2.msra.mxu0 0.0
        %1465 = vmatprep.subr.mxu0 0.0
        %1466 = vmatpush2.msra.mxu0 0.0
        %1467 = vmatprep.subr.mxu0 0.0
        %1468 = vmatpush2.msra.mxu0 0.0
        %1469 = vmatprep.subr.mxu0 0.0
        %1470 = vmatpush2.msra.mxu0 0.0
        %1471 = vmatprep.subr.mxu0 0.0
        %1472 = vmatpush2.msra.mxu0 0.0
        %1473 = vmatprep.subr.mxu0 0.0
        %1474 = vmatpush2.msra.mxu0 0.0
        %1475 = vmatprep.subr.mxu0 0.0
        %1476 = vmatpush2.msra.mxu0 0.0
        %1477 = vmatprep.subr.mxu0 0.0
        %1478 = vmatpush2.msra.mxu0 0.0
        %1479 = vmatprep.subr.mxu0 0.0
        %1480 = vmatpush2.msra.mxu0 0.0
        %1481 = vmatprep.subr.mxu0 0.0
        %1482 = vmatpush2.msra.mxu0 0.0
        %1483 = vmatprep.subr.mxu0 0.0
        %1484 = vmatpush2.msra.mxu0 0.0
        %1485 = vmatprep.mubr.f32.mxu0 0.0
        %1486 = vmatmul.mubr.f32.gmra.mxu0 %v1269
        %v1487 = vpop.f32.mrf.mxu0
        %v1488 = vadd.f32 %v1389, %v1487
        %v1489 = vpop.f32.mrf.mxu0
        %v1490 = vadd.f32 %v1393, %v1489
        %1491 = vdwg.mxu0
        %1492 = vmatprep.subr.mxu0 %v1380
        %1493 = vmatpush1.msra.mxu0 %v1379
        %1494 = vmatprep.subr.mxu0 %v1373
        %1495 = vmatpush1.msra.mxu0 %v1372
        %1496 = vmatprep.subr.mxu0 %v1366
        %1497 = vmatpush1.msra.mxu0 %v1365
        %1498 = vmatprep.subr.mxu0 %v1359
        %1499 = vmatpush1.msra.mxu0 %v1358
        %1500 = vmatprep.subr.mxu0 %v1352
        %1501 = vmatpush1.msra.mxu0 %v1351
        %1502 = vmatprep.subr.mxu0 %v1345
        %1503 = vmatpush1.msra.mxu0 %v1344
        %1504 = vmatprep.subr.mxu0 %v1338
        %1505 = vmatpush1.msra.mxu0 %v1337
        %1506 = vmatprep.subr.mxu0 %v1331
        %1507 = vmatpush1.msra.mxu0 %v1330
        %1508 = vmatprep.subr.mxu0 %v1324
        %1509 = vmatpush1.msra.mxu0 %v1323
        %1510 = vmatprep.subr.mxu0 %v1317
        %1511 = vmatpush1.msra.mxu0 %v1316
        %1512 = vmatprep.subr.mxu0 %v1310
        %1513 = vmatpush1.msra.mxu0 %v1309
        %1514 = vmatprep.subr.mxu0 %v1303
        %1515 = vmatpush1.msra.mxu0 %v1302
        %1516 = vmatprep.subr.mxu0 %v1296
        %1517 = vmatpush1.msra.mxu0 %v1295
        %1518 = vmatprep.subr.mxu0 %v1289
        %1519 = vmatpush1.msra.mxu0 %v1288
        %1520 = vmatprep.subr.mxu0 %v1282
        %1521 = vmatpush1.msra.mxu0 %v1281
        %1522 = vmatprep.subr.mxu0 %v1275
        %1523 = vmatpush1.msra.mxu0 %v1274
        %1524 = vmatprep.subr.mxu0 0.0
        %1525 = vmatpush2.msra.mxu0 0.0
        %1526 = vmatprep.subr.mxu0 0.0
        %1527 = vmatpush2.msra.mxu0 0.0
        %1528 = vmatprep.subr.mxu0 0.0
        %1529 = vmatpush2.msra.mxu0 0.0
        %1530 = vmatprep.subr.mxu0 0.0
        %1531 = vmatpush2.msra.mxu0 0.0
        %1532 = vmatprep.subr.mxu0 0.0
        %1533 = vmatpush2.msra.mxu0 0.0
        %1534 = vmatprep.subr.mxu0 0.0
        %1535 = vmatpush2.msra.mxu0 0.0
        %1536 = vmatprep.subr.mxu0 0.0
        %1537 = vmatpush2.msra.mxu0 0.0
        %1538 = vmatprep.subr.mxu0 0.0
        %1539 = vmatpush2.msra.mxu0 0.0
        %1540 = vmatprep.subr.mxu0 0.0
        %1541 = vmatpush2.msra.mxu0 0.0
        %1542 = vmatprep.subr.mxu0 0.0
        %1543 = vmatpush2.msra.mxu0 0.0
        %1544 = vmatprep.subr.mxu0 0.0
        %1545 = vmatpush2.msra.mxu0 0.0
        %1546 = vmatprep.subr.mxu0 0.0
        %1547 = vmatpush2.msra.mxu0 0.0
        %1548 = vmatprep.subr.mxu0 0.0
        %1549 = vmatpush2.msra.mxu0 0.0
        %1550 = vmatprep.subr.mxu0 0.0
        %1551 = vmatpush2.msra.mxu0 0.0
        %1552 = vmatprep.subr.mxu0 0.0
        %1553 = vmatpush2.msra.mxu0 0.0
        %1554 = vmatprep.subr.mxu0 0.0
        %1555 = vmatpush2.msra.mxu0 0.0
        %1556 = vmatprep.mubr.f32.mxu0 0.0
        %1557 = vmatmul.mubr.f32.gmra.mxu0 %v1269
        %v1558 = vpop.f32.mrf.mxu0
        %v1559 = vadd.f32 %v1397, %v1558
        %v1560 = vpop.f32.mrf.mxu0
        %v1561 = vadd.f32 %v1401, %v1560
        %1562 = vdwg.mxu0
        %1563 = vmatprep.subr.mxu0 %v1382
        %1564 = vmatpush1.msra.mxu0 %v1381
        %1565 = vmatprep.subr.mxu0 %v1375
        %1566 = vmatpush1.msra.mxu0 %v1374
        %1567 = vmatprep.subr.mxu0 %v1368
        %1568 = vmatpush1.msra.mxu0 %v1367
        %1569 = vmatprep.subr.mxu0 %v1361
        %1570 = vmatpush1.msra.mxu0 %v1360
        %1571 = vmatprep.subr.mxu0 %v1354
        %1572 = vmatpush1.msra.mxu0 %v1353
        %1573 = vmatprep.subr.mxu0 %v1347
        %1574 = vmatpush1.msra.mxu0 %v1346
        %1575 = vmatprep.subr.mxu0 %v1340
        %1576 = vmatpush1.msra.mxu0 %v1339
        %1577 = vmatprep.subr.mxu0 %v1333
        %1578 = vmatpush1.msra.mxu0 %v1332
        %1579 = vmatprep.subr.mxu0 %v1326
        %1580 = vmatpush1.msra.mxu0 %v1325
        %1581 = vmatprep.subr.mxu0 %v1319
        %1582 = vmatpush1.msra.mxu0 %v1318
        %1583 = vmatprep.subr.mxu0 %v1312
        %1584 = vmatpush1.msra.mxu0 %v1311
        %1585 = vmatprep.subr.mxu0 %v1305
        %1586 = vmatpush1.msra.mxu0 %v1304
        %1587 = vmatprep.subr.mxu0 %v1298
        %1588 = vmatpush1.msra.mxu0 %v1297
        %1589 = vmatprep.subr.mxu0 %v1291
        %1590 = vmatpush1.msra.mxu0 %v1290
        %1591 = vmatprep.subr.mxu0 %v1284
        %1592 = vmatpush1.msra.mxu0 %v1283
        %1593 = vmatprep.subr.mxu0 %v1277
        %1594 = vmatpush1.msra.mxu0 %v1276
        %1595 = vmatprep.subr.mxu0 0.0
        %1596 = vmatpush2.msra.mxu0 0.0
        %1597 = vmatprep.subr.mxu0 0.0
        %1598 = vmatpush2.msra.mxu0 0.0
        %1599 = vmatprep.subr.mxu0 0.0
        %1600 = vmatpush2.msra.mxu0 0.0
        %1601 = vmatprep.subr.mxu0 0.0
        %1602 = vmatpush2.msra.mxu0 0.0
        %1603 = vmatprep.subr.mxu0 0.0
        %1604 = vmatpush2.msra.mxu0 0.0
        %1605 = vmatprep.subr.mxu0 0.0
        %1606 = vmatpush2.msra.mxu0 0.0
        %1607 = vmatprep.subr.mxu0 0.0
        %1608 = vmatpush2.msra.mxu0 0.0
        %1609 = vmatprep.subr.mxu0 0.0
        %1610 = vmatpush2.msra.mxu0 0.0
        %1611 = vmatprep.subr.mxu0 0.0
        %1612 = vmatpush2.msra.mxu0 0.0
        %1613 = vmatprep.subr.mxu0 0.0
        %1614 = vmatpush2.msra.mxu0 0.0
        %1615 = vmatprep.subr.mxu0 0.0
        %1616 = vmatpush2.msra.mxu0 0.0
        %1617 = vmatprep.subr.mxu0 0.0
        %1618 = vmatpush2.msra.mxu0 0.0
        %1619 = vmatprep.subr.mxu0 0.0
        %1620 = vmatpush2.msra.mxu0 0.0
        %1621 = vmatprep.subr.mxu0 0.0
        %1622 = vmatpush2.msra.mxu0 0.0
        %1623 = vmatprep.subr.mxu0 0.0
        %1624 = vmatpush2.msra.mxu0 0.0
        %1625 = vmatprep.subr.mxu0 0.0
        %1626 = vmatpush2.msra.mxu0 0.0
        %1627 = vmatprep.mubr.f32.mxu0 0.0
        %1628 = vmatmul.mubr.f32.gmra.mxu0 %v1269
        %v1629 = vpop.f32.mrf.mxu0
        %v1630 = vadd.f32 %v1405, %v1629
        %v1631 = vpop.f32.mrf.mxu0
        %v1632 = vadd.f32 %v1409, %v1631
        %1633 = vdwg.mxu0
        %1634 = vmatprep.subr.mxu0 0.0
        %1635 = vmatpush1.msra.mxu0 %v1383
        %1636 = vmatprep.subr.mxu0 0.0
        %1637 = vmatpush1.msra.mxu0 %v1376
        %1638 = vmatprep.subr.mxu0 0.0
        %1639 = vmatpush1.msra.mxu0 %v1369
        %1640 = vmatprep.subr.mxu0 0.0
        %1641 = vmatpush1.msra.mxu0 %v1362
        %1642 = vmatprep.subr.mxu0 0.0
        %1643 = vmatpush1.msra.mxu0 %v1355
        %1644 = vmatprep.subr.mxu0 0.0
        %1645 = vmatpush1.msra.mxu0 %v1348
        %1646 = vmatprep.subr.mxu0 0.0
        %1647 = vmatpush1.msra.mxu0 %v1341
        %1648 = vmatprep.subr.mxu0 0.0
        %1649 = vmatpush1.msra.mxu0 %v1334
        %1650 = vmatprep.subr.mxu0 0.0
        %1651 = vmatpush1.msra.mxu0 %v1327
        %1652 = vmatprep.subr.mxu0 0.0
        %1653 = vmatpush1.msra.mxu0 %v1320
        %1654 = vmatprep.subr.mxu0 0.0
        %1655 = vmatpush1.msra.mxu0 %v1313
        %1656 = vmatprep.subr.mxu0 0.0
        %1657 = vmatpush1.msra.mxu0 %v1306
        %1658 = vmatprep.subr.mxu0 0.0
        %1659 = vmatpush1.msra.mxu0 %v1299
        %1660 = vmatprep.subr.mxu0 0.0
        %1661 = vmatpush1.msra.mxu0 %v1292
        %1662 = vmatprep.subr.mxu0 0.0
        %1663 = vmatpush1.msra.mxu0 %v1285
        %1664 = vmatprep.subr.mxu0 0.0
        %1665 = vmatpush1.msra.mxu0 %v1278
        %1666 = vmatprep.subr.mxu0 0.0
        %1667 = vmatpush2.msra.mxu0 0.0
        %1668 = vmatprep.subr.mxu0 0.0
        %1669 = vmatpush2.msra.mxu0 0.0
        %1670 = vmatprep.subr.mxu0 0.0
        %1671 = vmatpush2.msra.mxu0 0.0
        %1672 = vmatprep.subr.mxu0 0.0
        %1673 = vmatpush2.msra.mxu0 0.0
        %1674 = vmatprep.subr.mxu0 0.0
        %1675 = vmatpush2.msra.mxu0 0.0
        %1676 = vmatprep.subr.mxu0 0.0
        %1677 = vmatpush2.msra.mxu0 0.0
        %1678 = vmatprep.subr.mxu0 0.0
        %1679 = vmatpush2.msra.mxu0 0.0
        %1680 = vmatprep.subr.mxu0 0.0
        %1681 = vmatpush2.msra.mxu0 0.0
        %1682 = vmatprep.subr.mxu0 0.0
        %1683 = vmatpush2.msra.mxu0 0.0
        %1684 = vmatprep.subr.mxu0 0.0
        %1685 = vmatpush2.msra.mxu0 0.0
        %1686 = vmatprep.subr.mxu0 0.0
        %1687 = vmatpush2.msra.mxu0 0.0
        %1688 = vmatprep.subr.mxu0 0.0
        %1689 = vmatpush2.msra.mxu0 0.0
        %1690 = vmatprep.subr.mxu0 0.0
        %1691 = vmatpush2.msra.mxu0 0.0
        %1692 = vmatprep.subr.mxu0 0.0
        %1693 = vmatpush2.msra.mxu0 0.0
        %1694 = vmatprep.subr.mxu0 0.0
        %1695 = vmatpush2.msra.mxu0 0.0
        %1696 = vmatprep.subr.mxu0 0.0
        %1697 = vmatpush2.msra.mxu0 0.0
        %1698 = vmatprep.mubr.f32.mxu0 0.0
        %1699 = vmatmul.mubr.f32.gmra.mxu0 %v1269
        %v1700 = vpop.f32.mrf.mxu0
        %v1701 = vadd.f32 %v1413, %v1700
        %v1702 = vpop.f32.mrf.mxu0
        %1703 = vdwg.mxu0
        %v1704 = vmax.f32 %v1488, 0.0
        %v1705 = vmax.f32 %v1490, 0.0
        %v1706 = vmax.f32 %v1559, 0.0
        %v1707 = vmax.f32 %v1561, 0.0
        %v1708 = vmax.f32 %v1630, 0.0
        %v1709 = vmax.f32 %v1632, 0.0
        %v1710 = vmax.f32 %v1701, 0.0
        %v1718 = vcombine.low %v1704, %v1705
        %v1719 = vcombine.low %v1706, %v1707
        %v1721 = vunpack.c.l.s4 1983009808
        %v1722 = vunpack.c.0.s8 %v1721
        %v1723 = vlaneseq
        %v1724 = vshrl.u32 %v1723, 7
        %v1725 = vsub.s32 %v1722, %v1724
        %v1726 = vrot.slane %v1718, %v1725
        %v1728 = vunpack.c.l.s4 1983009808
        %v1729 = vunpack.c.0.s8 %v1728
        %v1730 = vlaneseq
        %v1731 = vshrl.u32 %v1730, 7
        %v1732 = vsub.s32 %v1729, %v1731
        %v1733 = vrot.slane %v1719, %v1732
        %v1734 = vcombine.low %v1726, %v1733
        %v1735 = vcombine.low %v1708, %v1709
        %v1737 = vunpack.c.l.s4 1983009808
        %v1738 = vunpack.c.0.s8 %v1737
        %v1739 = vlaneseq
        %v1740 = vshrl.u32 %v1739, 7
        %v1741 = vsub.s32 %v1738, %v1740
        %v1742 = vrot.slane %v1735, %v1741
        %v1744 = vunpack.c.l.s4 1983009808
        %v1745 = vunpack.c.0.s8 %v1744
        %v1746 = vlaneseq
        %v1747 = vshrl.u32 %v1746, 7
        %v1748 = vsub.s32 %v1745, %v1747
        %v1749 = vrot.slane %v1710, %v1748
        %v1750 = vcombine.low %v1742, %v1749
        %1753 = vst [vmem:[%s486] sm:$0xff] %v1734
        %1754 = vst [vmem:[%s486 + $0x8] sm:$0x3f] %v1750
        %s1755 = smul.u32 7, %s16
        %p1756 = scmp.lt.s32.totalorder %s1755, 13
        %s1757 = scalar_select %p1756, %s1755, 13
        %s1758 = smul.addr %s1757, 2
        %s1759 = scalar_lea.vmem %s5, %s1758
        // Predicated region
        $region64: #{autoencoder_forward.9} parent=58 // pred_check
          %p1760 = pneg %p149
        $region65: #{autoencoder_forward.9} parent=58 // pred_check_branch
          %1762 = sbr.rel (%p1760) target = $region67
        $region66: #{autoencoder_forward.9} parent=58 // pred_region
          %s1763 = smul.u32 7, %s16
        $region67: #{autoencoder_forward.9} parent=58 // pred_fallthru
          _
      $region59: #{autoencoder_forward.9} parent=5 // pred_fallthru
        _
      %p1764 = scmp.le.s32.totalorder 2, %s11
      // Predicated region
      $region68: #{autoencoder_forward.9} parent=5 // pred_check
        %p1765 = pneg %p1764
      $region69: #{autoencoder_forward.9} parent=5 // pred_check_branch
        %1767 = sbr.rel (%p1765) target = $region71
      $region70: #{autoencoder_forward.9} parent=5 // pred_region
        %s1768 = ssub.s32 %s11, 2
        // Predicated region
        $region72: #{autoencoder_forward.9} parent=70 // pred_check
          %p1769 = pneg %p155
        $region73: #{autoencoder_forward.9} parent=70 // pred_check_branch
          %1771 = sbr.rel (%p1769) target = $region75
        $region74: #{autoencoder_forward.9} parent=70 // pred_region
          %s1772 = smul.u32 7, %s17
          %p1773 = scmp.lt.s32.totalorder %s1772, 13
          %s1774 = scalar_select %p1773, %s1772, 13
          %s1775 = smul.addr %s1774, 2
          %s1776 = scalar_lea.vmem %s5, %s1775
        $region75: #{autoencoder_forward.9} parent=70 // pred_fallthru
          _
      $region71: #{autoencoder_forward.9} parent=5 // pred_fallthru
        _
    $region6: #{autoencoder_forward.9} parent=1 // loop_footer
      %s15 = sadd.s32 1, %s11
    $region7: #{autoencoder_forward.9} parent=1 // loop_footer_branch
      %10 = sbr.rel target = $region3
    $region8: #{autoencoder_forward.9} parent=1 // loop_exit
      _

// kernel: autoencoder_forward.10
$region0: #{autoencoder_forward.10}
  #allocation0 [shape = 'u32[]', space=smem, size = 0x4, offset = 0x4, fixed_abs, tag = 'smem constant byte address 0x4 - core index']
  #allocation1 [shape = 'u32[144,128]{1,0:T(1,128)}', space=vmem, size = 0x12000, scoped, tag = 'internal scratch']
  %s0 = inlined_call_operand.vmem [shape: f32[64,128], index: 0, kind: input, shape index: {}]
  %s1 = inlined_call_operand.vmem [shape: f32[128,128], index: 1, kind: input, shape index: {}]
  %s2 = inlined_call_operand.vmem [shape: f32[64,1], index: 2, kind: input, shape index: {}]
  %s3 = inlined_call_operand.vmem [shape: f32[64,128], index: 3, kind: output, shape index: {}]
  %s4 = sld [smem:[#allocation0]]
  $region22: #{autoencoder_forward.10} parent=0
    _
  %s6 = ssub.s32 1, %s4
  %s7 = scalar_select 0, %s6, %s4
  // Predicated region
  $region2: #{autoencoder_forward.10} parent=0 // pred_check
    _
  $region3: #{autoencoder_forward.10} parent=0 // pred_check_branch
    %9 = sbr.rel (0) target = $region5
  $region4: #{autoencoder_forward.10} parent=0 // pred_region
    _
  $region5: #{autoencoder_forward.10} parent=0 // pred_fallthru
    _
  // Predicated region
  $region6: #{autoencoder_forward.10} parent=0 // pred_check
    _
  $region7: #{autoencoder_forward.10} parent=0 // pred_check_branch
    %11 = sbr.rel (0) target = $region9
  $region8: #{autoencoder_forward.10} parent=0 // pred_region
    _
  $region9: #{autoencoder_forward.10} parent=0 // pred_fallthru
    _
  // Predicated region
  $region10: #{autoencoder_forward.10} parent=0 // pred_check
    _
  $region11: #{autoencoder_forward.10} parent=0 // pred_check_branch
    %13 = sbr.rel (0) target = $region13
  $region12: #{autoencoder_forward.10} parent=0 // pred_region
    _
  $region13: #{autoencoder_forward.10} parent=0 // pred_fallthru
    _
  %v14 = vld [vmem:[%s0] sm:$0xff]
  %v15 = vld [vmem:[%s0 + $0x8] sm:$0xff]
  %v16 = vld [vmem:[%s0 + $0x10] sm:$0xff]
  %v17 = vld [vmem:[%s0 + $0x18] sm:$0xff]
  %v18 = vld [vmem:[%s0 + $0x20] sm:$0xff]
  %v19 = vld [vmem:[%s0 + $0x28] sm:$0xff]
  %v20 = vld [vmem:[%s0 + $0x30] sm:$0xff]
  %v21 = vld [vmem:[%s0 + $0x38] sm:$0xff]
  %v22 = vld [vmem:[%s1] sm:$0xff]
  %v23 = vld [vmem:[%s1 + $0x8] sm:$0xff]
  %v24 = vld [vmem:[%s1 + $0x10] sm:$0xff]
  %v25 = vld [vmem:[%s1 + $0x18] sm:$0xff]
  %v26 = vld [vmem:[%s1 + $0x20] sm:$0xff]
  %v27 = vld [vmem:[%s1 + $0x28] sm:$0xff]
  %v28 = vld [vmem:[%s1 + $0x30] sm:$0xff]
  %v29 = vld [vmem:[%s1 + $0x38] sm:$0xff]
  %v30 = vld [vmem:[%s1 + $0x40] sm:$0xff]
  %v31 = vld [vmem:[%s1 + $0x48] sm:$0xff]
  %v32 = vld [vmem:[%s1 + $0x50] sm:$0xff]
  %v33 = vld [vmem:[%s1 + $0x58] sm:$0xff]
  %v34 = vld [vmem:[%s1 + $0x60] sm:$0xff]
  %v35 = vld [vmem:[%s1 + $0x68] sm:$0xff]
  %v36 = vld [vmem:[%s1 + $0x70] sm:$0xff]
  %v37 = vld [vmem:[%s1 + $0x78] sm:$0xff]
  %v38 = vld [vmem:[%s2] sm:$0xff]
  %v39 = vld [vmem:[%s2 + $0x8] sm:$0xff]
  %v40 = vld [vmem:[%s2 + $0x10] sm:$0xff]
  %v41 = vld [vmem:[%s2 + $0x18] sm:$0xff]
  %v42 = vld [vmem:[%s2 + $0x20] sm:$0xff]
  %v43 = vld [vmem:[%s2 + $0x28] sm:$0xff]
  %v44 = vld [vmem:[%s2 + $0x30] sm:$0xff]
  %v45 = vld [vmem:[%s2 + $0x38] sm:$0xff]
  %47 = vset.pattern.permute.xlu0 0
  %48 = vperm.xlu0 %47, %v38
  %v49 = vpop.permute.xlu0 %48
  %52 = vset.pattern.permute.xlu0 0
  %53 = vperm.xlu0 %52, %v39
  %v54 = vpop.permute.xlu0 %53
  %57 = vset.pattern.permute.xlu0 0
  %58 = vperm.xlu0 %57, %v40
  %v59 = vpop.permute.xlu0 %58
  %62 = vset.pattern.permute.xlu0 0
  %63 = vperm.xlu0 %62, %v41
  %v64 = vpop.permute.xlu0 %63
  %67 = vset.pattern.permute.xlu0 0
  %68 = vperm.xlu0 %67, %v42
  %v69 = vpop.permute.xlu0 %68
  %72 = vset.pattern.permute.xlu0 0
  %73 = vperm.xlu0 %72, %v43
  %v74 = vpop.permute.xlu0 %73
  %77 = vset.pattern.permute.xlu0 0
  %78 = vperm.xlu0 %77, %v44
  %v79 = vpop.permute.xlu0 %78
  %82 = vset.pattern.permute.xlu0 0
  %83 = vperm.xlu0 %82, %v45
  %v84 = vpop.permute.xlu0 %83
  %86 = vmatprep.subr.mxu0 0.0
  %87 = vmatpush1.msra.mxu0 %v37
  %88 = vmatprep.subr.mxu0 0.0
  %89 = vmatpush1.msra.mxu0 %v36
  %90 = vmatprep.subr.mxu0 0.0
  %91 = vmatpush1.msra.mxu0 %v35
  %92 = vmatprep.subr.mxu0 0.0
  %93 = vmatpush1.msra.mxu0 %v34
  %94 = vmatprep.subr.mxu0 0.0
  %95 = vmatpush1.msra.mxu0 %v33
  %96 = vmatprep.subr.mxu0 0.0
  %97 = vmatpush1.msra.mxu0 %v32
  %98 = vmatprep.subr.mxu0 0.0
  %99 = vmatpush1.msra.mxu0 %v31
  %100 = vmatprep.subr.mxu0 0.0
  %101 = vmatpush1.msra.mxu0 %v30
  %102 = vmatprep.subr.mxu0 0.0
  %103 = vmatpush1.msra.mxu0 %v29
  %104 = vmatprep.subr.mxu0 0.0
  %105 = vmatpush1.msra.mxu0 %v28
  %106 = vmatprep.subr.mxu0 0.0
  %107 = vmatpush1.msra.mxu0 %v27
  %108 = vmatprep.subr.mxu0 0.0
  %109 = vmatpush1.msra.mxu0 %v26
  %110 = vmatprep.subr.mxu0 0.0
  %111 = vmatpush1.msra.mxu0 %v25
  %112 = vmatprep.subr.mxu0 0.0
  %113 = vmatpush1.msra.mxu0 %v24
  %114 = vmatprep.subr.mxu0 0.0
  %115 = vmatpush1.msra.mxu0 %v23
  %116 = vmatprep.subr.mxu0 0.0
  %117 = vmatpush1.msra.mxu0 %v22
  %118 = vmatprep.subr.mxu0 0.0
  %119 = vmatpush2.msra.mxu0 0.0
  %120 = vmatprep.subr.mxu0 0.0
  %121 = vmatpush2.msra.mxu0 0.0
  %122 = vmatprep.subr.mxu0 0.0
  %123 = vmatpush2.msra.mxu0 0.0
  %124 = vmatprep.subr.mxu0 0.0
  %125 = vmatpush2.msra.mxu0 0.0
  %126 = vmatprep.subr.mxu0 0.0
  %127 = vmatpush2.msra.mxu0 0.0
  %128 = vmatprep.subr.mxu0 0.0
  %129 = vmatpush2.msra.mxu0 0.0
  %130 = vmatprep.subr.mxu0 0.0
  %131 = vmatpush2.msra.mxu0 0.0
  %132 = vmatprep.subr.mxu0 0.0
  %133 = vmatpush2.msra.mxu0 0.0
  %134 = vmatprep.subr.mxu0 0.0
  %135 = vmatpush2.msra.mxu0 0.0
  %136 = vmatprep.subr.mxu0 0.0
  %137 = vmatpush2.msra.mxu0 0.0
  %138 = vmatprep.subr.mxu0 0.0
  %139 = vmatpush2.msra.mxu0 0.0
  %140 = vmatprep.subr.mxu0 0.0
  %141 = vmatpush2.msra.mxu0 0.0
  %142 = vmatprep.subr.mxu0 0.0
  %143 = vmatpush2.msra.mxu0 0.0
  %144 = vmatprep.subr.mxu0 0.0
  %145 = vmatpush2.msra.mxu0 0.0
  %146 = vmatprep.subr.mxu0 0.0
  %147 = vmatpush2.msra.mxu0 0.0
  %148 = vmatprep.subr.mxu0 0.0
  %149 = vmatpush2.msra.mxu0 0.0
  %150 = vmatprep.mubr.f32.mxu0 0.0
  %151 = vmatmul.mubr.f32.gmra.mxu0 %v14
  %v152 = vpop.f32.mrf.mxu0
  %v153 = vadd.f32 %v49, %v152
  %v154 = vpop.f32.mrf.mxu0
  %155 = vmatprep.mubr.f32.mxu0 0.0
  %156 = vmatmul.mubr.f32.gmra.mxu0 %v15
  %v157 = vpop.f32.mrf.mxu0
  %v158 = vadd.f32 %v54, %v157
  %v159 = vpop.f32.mrf.mxu0
  %160 = vmatprep.mubr.f32.mxu0 0.0
  %161 = vmatmul.mubr.f32.gmra.mxu0 %v16
  %v162 = vpop.f32.mrf.mxu0
  %v163 = vadd.f32 %v59, %v162
  %v164 = vpop.f32.mrf.mxu0
  %165 = vmatprep.mubr.f32.mxu0 0.0
  %166 = vmatmul.mubr.f32.gmra.mxu0 %v17
  %v167 = vpop.f32.mrf.mxu0
  %v168 = vadd.f32 %v64, %v167
  %v169 = vpop.f32.mrf.mxu0
  %170 = vmatprep.mubr.f32.mxu0 0.0
  %171 = vmatmul.mubr.f32.gmra.mxu0 %v18
  %v172 = vpop.f32.mrf.mxu0
  %v173 = vadd.f32 %v69, %v172
  %v174 = vpop.f32.mrf.mxu0
  %175 = vmatprep.mubr.f32.mxu0 0.0
  %176 = vmatmul.mubr.f32.gmra.mxu0 %v19
  %v177 = vpop.f32.mrf.mxu0
  %v178 = vadd.f32 %v74, %v177
  %v179 = vpop.f32.mrf.mxu0
  %180 = vmatprep.mubr.f32.mxu0 0.0
  %181 = vmatmul.mubr.f32.gmra.mxu0 %v20
  %v182 = vpop.f32.mrf.mxu0
  %v183 = vadd.f32 %v79, %v182
  %v184 = vpop.f32.mrf.mxu0
  %185 = vmatprep.mubr.f32.mxu0 0.0
  %186 = vmatmul.mubr.f32.gmra.mxu0 %v21
  %v187 = vpop.f32.mrf.mxu0
  %v188 = vadd.f32 %v84, %v187
  %v189 = vpop.f32.mrf.mxu0
  %190 = vdwg.mxu0
  %v191 = vmax.f32 %v153, 0.0
  %v192 = vmax.f32 %v158, 0.0
  %v193 = vmax.f32 %v163, 0.0
  %v194 = vmax.f32 %v168, 0.0
  %v195 = vmax.f32 %v173, 0.0
  %v196 = vmax.f32 %v178, 0.0
  %v197 = vmax.f32 %v183, 0.0
  %v198 = vmax.f32 %v188, 0.0
  %199 = vst [vmem:[%s3] sm:$0xff] %v191
  %200 = vst [vmem:[%s3 + $0x8] sm:$0xff] %v192
  %201 = vst [vmem:[%s3 + $0x10] sm:$0xff] %v193
  %202 = vst [vmem:[%s3 + $0x18] sm:$0xff] %v194
  %203 = vst [vmem:[%s3 + $0x20] sm:$0xff] %v195
  %204 = vst [vmem:[%s3 + $0x28] sm:$0xff] %v196
  %205 = vst [vmem:[%s3 + $0x30] sm:$0xff] %v197
  %206 = vst [vmem:[%s3 + $0x38] sm:$0xff] %v198
  // Predicated region
  $region14: #{autoencoder_forward.10} parent=0 // pred_check
    _
  $region15: #{autoencoder_forward.10} parent=0 // pred_check_branch
    %208 = sbr.rel (0) target = $region17
  $region16: #{autoencoder_forward.10} parent=0 // pred_region
    _
  $region17: #{autoencoder_forward.10} parent=0 // pred_fallthru
    _
  // Predicated region
  $region18: #{autoencoder_forward.10} parent=0 // pred_check
    _
  $region19: #{autoencoder_forward.10} parent=0 // pred_check_branch
    %210 = sbr.rel (0) target = $region21
  $region20: #{autoencoder_forward.10} parent=0 // pred_region
    _
  $region21: #{autoencoder_forward.10} parent=0 // pred_fallthru
    _

// kernel: tile.17
$region0: #{tile.17}
  #allocation0 [shape = 's32[1]{0}', space=sflag, size = 0x4, scoped, tag = 'scoped memory for tile.17']
  %s0 = inlined_call_operand.<no memory space> [shape: f32[], index: 0, kind: input, shape index: {}]
  %s1 = inlined_call_operand.vmem [shape: f32[4,1], index: 1, kind: output, shape index: {}]
  %v2 = vstv %s0
  %3 = vst [vmem:[%s1] sm:$0xf] %v2

// kernel: autoencoder_forward.11
$region0: #{autoencoder_forward.11}
  #allocation0 [shape = 'u32[]', space=smem, size = 0x4, offset = 0x4, fixed_abs, tag = 'smem constant byte address 0x4 - core index']
  #allocation1 [shape = 'u32[144,128]{1,0:T(1,128)}', space=vmem, size = 0x12000, scoped, tag = 'internal scratch']
  %s0 = inlined_call_operand.vmem [shape: f32[4,128], index: 0, kind: input, shape index: {}]
  %s1 = inlined_call_operand.vmem [shape: f32[128,512], index: 1, kind: input, shape index: {}]
  %s2 = inlined_call_operand.vmem [shape: f32[4,1], index: 2, kind: input, shape index: {}]
  %s3 = inlined_call_operand.vmem [shape: f32[4,512], index: 3, kind: output, shape index: {}]
  %s4 = sld [smem:[#allocation0]]
  $region68: #{autoencoder_forward.11} parent=0
    _
  %s6 = ssub.s32 1, %s4
  %s7 = scalar_select 0, %s6, %s4
  $region1: #{autoencoder_forward.11} parent=0
    #allocation2 [shape = 'u8[262144]{0}', space=vmem, size = 0x40000, scoped, tag = 'input window, operand 1']
    loop: start=0, step=1, limit=4
    $region2: #{autoencoder_forward.11} parent=1 // loop_pre_header
      _
    $region3: #{autoencoder_forward.11} parent=1 // loop_header
      %s9 = sphi 0, %s13
      %p10 = scmp.ge.s32.totalorder %s9, 4
      %s17 = sphi 0, %s17
      %s19 = sphi 0, %s17
      %s20 = sphi 0, %s19
      %s34 = sphi 0, %s20
      %s40 = sphi 0, %s42
      %s43 = sphi 0, %s40
      %s44 = sphi 0, %s43
      %s60 = sphi 0, %s44
      %s64 = sphi 0, %s64
      %s66 = sphi 0, %s64
      %s67 = sphi 0, %s66
      %s81 = sphi 0, %s67
      %s87 = sphi 0, %s89
      %s90 = sphi 0, %s87
      %s91 = sphi 0, %s90
      %s107 = sphi 0, %s91
    $region4: #{autoencoder_forward.11} parent=1 // loop_header_branch
      %12 = sbr.rel (%p10) target = $region8
    $region5: #{autoencoder_forward.11} parent=1 // loop_body
      %s14 = ssub.s32 %s9, 1
      %s15 = ssub.s32 %s9, 2
      %s16 = sadd.s32 %s9, 1
      %s18 = sadd.s32 %s17, 1
      %p21 = scmp.eq.s32.totalorder %s9, 1
      %p22 = scmp.ne.s32.totalorder %s17, %s19
      %p23 = scmp.eq.s32.totalorder %s9, 0
      %p24 = por %p22, %p23
      %p25 = scmp.ne.s32.totalorder %s17, %s19
      %p26 = scmp.eq.s32.totalorder %s14, 1
      %p27 = por %p25, %p26
      %p28 = scmp.ne.s32.totalorder %s19, %s20
      %p29 = scmp.eq.s32.totalorder %s14, 0
      %p30 = por %p28, %p29
      %p31 = scmp.ne.s32.totalorder %s19, %s20
      %p32 = scmp.eq.s32.totalorder %s15, 1
      %p33 = por %p31, %p32
      %p35 = scmp.ne.s32.totalorder %s20, %s34
      %p36 = scmp.eq.s32.totalorder %s15, 0
      %p37 = por %p35, %p36
      %s38 = ssub.s32 %s9, %s16
      %p39 = scmp.eq.s32.totalorder %s38, 0
      %s41 = sadd.s32 %s40, 1
      %s42 = scalar_select %p39, %s40, %s41
      %p45 = pneg %p39
      %p46 = scmp.eq.s32.totalorder %s9, 1
      %p47 = por %p45, %p46
      %p48 = scmp.ne.s32.totalorder %s40, %s43
      %p49 = scmp.eq.s32.totalorder %s9, 0
      %p50 = por %p48, %p49
      %p51 = scmp.ne.s32.totalorder %s40, %s43
      %p52 = scmp.eq.s32.totalorder %s14, 1
      %p53 = por %p51, %p52
      %p54 = scmp.ne.s32.totalorder %s43, %s44
      %p55 = scmp.eq.s32.totalorder %s14, 0
      %p56 = por %p54, %p55
      %p57 = scmp.ne.s32.totalorder %s43, %s44
      %p58 = scmp.eq.s32.totalorder %s15, 1
      %p59 = por %p57, %p58
      %p61 = scmp.ne.s32.totalorder %s44, %s60
      %p62 = scmp.eq.s32.totalorder %s15, 0
      %p63 = por %p61, %p62
      %s65 = sadd.s32 %s64, 1
      %p68 = scmp.eq.s32.totalorder %s9, 1
      %p69 = scmp.ne.s32.totalorder %s64, %s66
      %p70 = scmp.eq.s32.totalorder %s9, 0
      %p71 = por %p69, %p70
      %p72 = scmp.ne.s32.totalorder %s64, %s66
      %p73 = scmp.eq.s32.totalorder %s14, 1
      %p74 = por %p72, %p73
      %p75 = scmp.ne.s32.totalorder %s66, %s67
      %p76 = scmp.eq.s32.totalorder %s14, 0
      %p77 = por %p75, %p76
      %p78 = scmp.ne.s32.totalorder %s66, %s67
      %p79 = scmp.eq.s32.totalorder %s15, 1
      %p80 = por %p78, %p79
      %p82 = scmp.ne.s32.totalorder %s67, %s81
      %p83 = scmp.eq.s32.totalorder %s15, 0
      %p84 = por %p82, %p83
      %s85 = ssub.s32 %s9, %s16
      %p86 = scmp.eq.s32.totalorder %s85, 0
      %s88 = sadd.s32 %s87, 1
      %s89 = scalar_select %p86, %s87, %s88
      %p92 = pneg %p86
      %p93 = scmp.eq.s32.totalorder %s9, 1
      %p94 = por %p92, %p93
      %p95 = scmp.ne.s32.totalorder %s87, %s90
      %p96 = scmp.eq.s32.totalorder %s9, 0
      %p97 = por %p95, %p96
      %p98 = scmp.ne.s32.totalorder %s87, %s90
      %p99 = scmp.eq.s32.totalorder %s14, 1
      %p100 = por %p98, %p99
      %p101 = scmp.ne.s32.totalorder %s90, %s91
      %p102 = scmp.eq.s32.totalorder %s14, 0
      %p103 = por %p101, %p102
      %p104 = scmp.ne.s32.totalorder %s90, %s91
      %p105 = scmp.eq.s32.totalorder %s15, 1
      %p106 = por %p104, %p105
      %p108 = scmp.ne.s32.totalorder %s91, %s107
      %p109 = scmp.eq.s32.totalorder %s15, 0
      %p110 = por %p108, %p109
      %p111 = scmp.le.s32.totalorder 1, %s9
      %p112 = scmp.lt.s32.totalorder %s9, 3
      %p113 = pnand %p111, %p112
      %p114 = pneg %p113
      // Predicated region
      $region9: #{autoencoder_forward.11} parent=5 // pred_check
        _
      $region10: #{autoencoder_forward.11} parent=5 // pred_check_branch
        %116 = sbr.rel (%p113) target = $region12
      $region11: #{autoencoder_forward.11} parent=5 // pred_region
        %s117 = ssub.s32 %s9, 1
        // Predicated region
        $region13: #{autoencoder_forward.11} parent=11 // pred_check
          %p118 = pneg %p30
        $region14: #{autoencoder_forward.11} parent=11 // pred_check_branch
          %120 = sbr.rel (%p118) target = $region16
        $region15: #{autoencoder_forward.11} parent=11 // pred_region
          _
        $region16: #{autoencoder_forward.11} parent=11 // pred_fallthru
          _
        // Predicated region
        $region17: #{autoencoder_forward.11} parent=11 // pred_check
          %p121 = pneg %p77
        $region18: #{autoencoder_forward.11} parent=11 // pred_check_branch
          %123 = sbr.rel (%p121) target = $region20
        $region19: #{autoencoder_forward.11} parent=11 // pred_region
          _
        $region20: #{autoencoder_forward.11} parent=11 // pred_fallthru
          _
      $region12: #{autoencoder_forward.11} parent=5 // pred_fallthru
        _
      %p124 = scmp.lt.s32.totalorder %s9, 2
      // Predicated region
      $region21: #{autoencoder_forward.11} parent=5 // pred_check
        %p125 = pneg %p124
      $region22: #{autoencoder_forward.11} parent=5 // pred_check_branch
        %127 = sbr.rel (%p125) target = $region24
      $region23: #{autoencoder_forward.11} parent=5 // pred_region
        // Predicated region
        $region25: #{autoencoder_forward.11} parent=23 // pred_check
          %p128 = pneg %p50
        $region26: #{autoencoder_forward.11} parent=23 // pred_check_branch
          %130 = sbr.rel (%p128) target = $region28
        $region27: #{autoencoder_forward.11} parent=23 // pred_region
          %s131 = sand.u32 %s40, 1
          %s132 = sand.u32 %s40, 1
          %s133 = smul.addr %s132, 256
          %s134 = scalar_lea.vmem [#allocation2], %s133
          %s135 = smul.u32 2, %s9
          %s136 = smul.addr %s135, 8
          %s137 = scalar_lea.vmem %s1, %s136
          // Predicated region
          $region29: #{autoencoder_forward.11} parent=27 // pred_check
            _
          $region30: #{autoencoder_forward.11} parent=27 // pred_check_branch
            %139 = sbr.rel (0) target = $region32
          $region31: #{autoencoder_forward.11} parent=27 // pred_region
            // Predicated region
            $region33: #{autoencoder_forward.11} parent=31 // pred_check
              _
            $region34: #{autoencoder_forward.11} parent=31 // pred_check_branch
              %141 = sbr.rel (0) target = $region36
            $region35: #{autoencoder_forward.11} parent=31 // pred_region
              loop: start=0, step=1, limit=1
              $region37: #{autoencoder_forward.11} parent=35 // loop_pre_header
                _
              $region38: #{autoencoder_forward.11} parent=35 // loop_header
                %s143 = sphi 0, %s147
                %p144 = scmp.ge.s32.totalorder %s143, 1
                %s148 = sphi %s137, %s137
                %s149 = sphi %s134, %s134
              $region39: #{autoencoder_forward.11} parent=35 // loop_header_branch
                %146 = sbr.rel (%p144) target = $region43
              $region40: #{autoencoder_forward.11} parent=35 // loop_body
                %v150 = vld [vmem:[%s148] sm:$0xff]
                %151 = vst [vmem:[%s149] sm:$0xff] %v150
                %v152 = vld [vmem:[%s148 + $0x8] sm:$0xff]
                %153 = vst [vmem:[%s149 + $0x8] sm:$0xff] %v152
                %v154 = vld [vmem:[%s148 + $0x20] sm:$0xff]
                %155 = vst [vmem:[%s149 + $0x10] sm:$0xff] %v154
                %v156 = vld [vmem:[%s148 + $0x28] sm:$0xff]
                %157 = vst [vmem:[%s149 + $0x18] sm:$0xff] %v156
                %v158 = vld [vmem:[%s148 + $0x40] sm:$0xff]
                %159 = vst [vmem:[%s149 + $0x20] sm:$0xff] %v158
                %v160 = vld [vmem:[%s148 + $0x48] sm:$0xff]
                %161 = vst [vmem:[%s149 + $0x28] sm:$0xff] %v160
                %v162 = vld [vmem:[%s148 + $0x60] sm:$0xff]
                %163 = vst [vmem:[%s149 + $0x30] sm:$0xff] %v162
                %v164 = vld [vmem:[%s148 + $0x68] sm:$0xff]
                %165 = vst [vmem:[%s149 + $0x38] sm:$0xff] %v164
                %v166 = vld [vmem:[%s148 + $0x80] sm:$0xff]
                %167 = vst [vmem:[%s149 + $0x40] sm:$0xff] %v166
                %v168 = vld [vmem:[%s148 + $0x88] sm:$0xff]
                %169 = vst [vmem:[%s149 + $0x48] sm:$0xff] %v168
                %v170 = vld [vmem:[%s148 + $0xa0] sm:$0xff]
                %171 = vst [vmem:[%s149 + $0x50] sm:$0xff] %v170
                %v172 = vld [vmem:[%s148 + $0xa8] sm:$0xff]
                %173 = vst [vmem:[%s149 + $0x58] sm:$0xff] %v172
                %v174 = vld [vmem:[%s148 + $0xc0] sm:$0xff]
                %175 = vst [vmem:[%s149 + $0x60] sm:$0xff] %v174
                %v176 = vld [vmem:[%s148 + $0xc8] sm:$0xff]
                %177 = vst [vmem:[%s149 + $0x68] sm:$0xff] %v176
                %v178 = vld [vmem:[%s148 + $0xe0] sm:$0xff]
                %179 = vst [vmem:[%s149 + $0x70] sm:$0xff] %v178
                %v180 = vld [vmem:[%s148 + $0xe8] sm:$0xff]
                %181 = vst [vmem:[%s149 + $0x78] sm:$0xff] %v180
                %v182 = vld [vmem:[%s148 + $0x100] sm:$0xff]
                %183 = vst [vmem:[%s149 + $0x80] sm:$0xff] %v182
                %v184 = vld [vmem:[%s148 + $0x108] sm:$0xff]
                %185 = vst [vmem:[%s149 + $0x88] sm:$0xff] %v184
                %v186 = vld [vmem:[%s148 + $0x120] sm:$0xff]
                %187 = vst [vmem:[%s149 + $0x90] sm:$0xff] %v186
                %v188 = vld [vmem:[%s148 + $0x128] sm:$0xff]
                %189 = vst [vmem:[%s149 + $0x98] sm:$0xff] %v188
                %v190 = vld [vmem:[%s148 + $0x140] sm:$0xff]
                %191 = vst [vmem:[%s149 + $0xa0] sm:$0xff] %v190
                %v192 = vld [vmem:[%s148 + $0x148] sm:$0xff]
                %193 = vst [vmem:[%s149 + $0xa8] sm:$0xff] %v192
                %v194 = vld [vmem:[%s148 + $0x160] sm:$0xff]
                %195 = vst [vmem:[%s149 + $0xb0] sm:$0xff] %v194
                %v196 = vld [vmem:[%s148 + $0x168] sm:$0xff]
                %197 = vst [vmem:[%s149 + $0xb8] sm:$0xff] %v196
                %v198 = vld [vmem:[%s148 + $0x180] sm:$0xff]
                %199 = vst [vmem:[%s149 + $0xc0] sm:$0xff] %v198
                %v200 = vld [vmem:[%s148 + $0x188] sm:$0xff]
                %201 = vst [vmem:[%s149 + $0xc8] sm:$0xff] %v200
                %v202 = vld [vmem:[%s148 + $0x1a0] sm:$0xff]
                %203 = vst [vmem:[%s149 + $0xd0] sm:$0xff] %v202
                %v204 = vld [vmem:[%s148 + $0x1a8] sm:$0xff]
                %205 = vst [vmem:[%s149 + $0xd8] sm:$0xff] %v204
                %v206 = vld [vmem:[%s148 + $0x1c0] sm:$0xff]
                %207 = vst [vmem:[%s149 + $0xe0] sm:$0xff] %v206
                %v208 = vld [vmem:[%s148 + $0x1c8] sm:$0xff]
                %209 = vst [vmem:[%s149 + $0xe8] sm:$0xff] %v208
                %v210 = vld [vmem:[%s148 + $0x1e0] sm:$0xff]
                %211 = vst [vmem:[%s149 + $0xf0] sm:$0xff] %v210
                %v212 = vld [vmem:[%s148 + $0x1e8] sm:$0xff]
                %213 = vst [vmem:[%s149 + $0xf8] sm:$0xff] %v212
              $region41: #{autoencoder_forward.11} parent=35 // loop_footer
                %s147 = sadd.s32 1, %s143
              $region42: #{autoencoder_forward.11} parent=35 // loop_footer_branch
                %142 = sbr.rel target = $region38
              $region43: #{autoencoder_forward.11} parent=35 // loop_exit
                _
            $region36: #{autoencoder_forward.11} parent=31 // pred_fallthru
              _
            // Predicated region
            $region44: #{autoencoder_forward.11} parent=31 // pred_check
              _
            $region45: #{autoencoder_forward.11} parent=31 // pred_check_branch
              %215 = sbr.rel target = $region47
            $region46: #{autoencoder_forward.11} parent=31 // pred_region
              _
            $region47: #{autoencoder_forward.11} parent=31 // pred_fallthru
              _
          $region32: #{autoencoder_forward.11} parent=27 // pred_fallthru
            _
          %216 = vnop
        $region28: #{autoencoder_forward.11} parent=23 // pred_fallthru
          _
      $region24: #{autoencoder_forward.11} parent=5 // pred_fallthru
        _
      %p217 = scmp.le.s32.totalorder 1, %s9
      %p218 = scmp.lt.s32.totalorder %s9, 3
      %p219 = pnand %p217, %p218
      %p220 = pneg %p219
      // Predicated region
      $region48: #{autoencoder_forward.11} parent=5 // pred_check
        _
      $region49: #{autoencoder_forward.11} parent=5 // pred_check_branch
        %222 = sbr.rel (%p219) target = $region51
      $region50: #{autoencoder_forward.11} parent=5 // pred_region
        %s223 = ssub.s32 %s9, 1
        %s224 = sand.u32 %s43, 1
        %s225 = sand.u32 %s43, 1
        %s226 = smul.addr %s225, 256
        %s227 = scalar_lea.vmem [#allocation2], %s226
        // Predicated region
        $region52: #{autoencoder_forward.11} parent=50 // pred_check
          %p228 = pneg %p56
        $region53: #{autoencoder_forward.11} parent=50 // pred_check_branch
          %230 = sbr.rel (%p228) target = $region55
        $region54: #{autoencoder_forward.11} parent=50 // pred_region
          _
        $region55: #{autoencoder_forward.11} parent=50 // pred_fallthru
          _
        %p231 = pneg %p30
        %p232 = pneg %p27
        %s233 = sand.u32 %s43, 1
        %s234 = sand.u32 %s43, 1
        %s235 = smul.addr %s234, 256
        %s236 = scalar_lea.vmem [#allocation2], %s235
        %p237 = pneg %p56
        %p238 = pneg %p53
        %p239 = pneg %p77
        %p240 = pneg %p74
        %p241 = pneg %p103
        %p242 = pneg %p100
        %s243 = smul.u32 2, %s14
        %p244 = scmp.lt.s32.totalorder %s243, 3
        %s245 = scalar_select %p244, %s243, 3
        %s246 = smul.addr %s245, 4
        %s247 = scalar_lea.vmem %s3, %s246
        %s248 = smul.u32 2, %s14
        %s249 = smul.u32 2, %s14
        %p250 = scmp.lt.s32.totalorder %s249, 3
        %s251 = scalar_select %p250, %s249, 3
        %s252 = smul.addr %s251, 4
        %s253 = scalar_lea.vmem %s3, %s252
        %s254 = smul.u32 2, %s14
        %v255 = vld [vmem:[%s0] sm:$0xf]
        %v256 = vld [vmem:[%s227] sm:$0xff]
        %v257 = vld [vmem:[%s227 + $0x8] sm:$0xff]
        %v258 = vld [vmem:[%s227 + $0x10] sm:$0xff]
        %v259 = vld [vmem:[%s227 + $0x18] sm:$0xff]
        %v260 = vld [vmem:[%s227 + $0x20] sm:$0xff]
        %v261 = vld [vmem:[%s227 + $0x28] sm:$0xff]
        %v262 = vld [vmem:[%s227 + $0x30] sm:$0xff]
        %v263 = vld [vmem:[%s227 + $0x38] sm:$0xff]
        %v264 = vld [vmem:[%s227 + $0x40] sm:$0xff]
        %v265 = vld [vmem:[%s227 + $0x48] sm:$0xff]
        %v266 = vld [vmem:[%s227 + $0x50] sm:$0xff]
        %v267 = vld [vmem:[%s227 + $0x58] sm:$0xff]
        %v268 = vld [vmem:[%s227 + $0x60] sm:$0xff]
        %v269 = vld [vmem:[%s227 + $0x68] sm:$0xff]
        %v270 = vld [vmem:[%s227 + $0x70] sm:$0xff]
        %v271 = vld [vmem:[%s227 + $0x78] sm:$0xff]
        %v272 = vld [vmem:[%s227 + $0x80] sm:$0xff]
        %v273 = vld [vmem:[%s227 + $0x88] sm:$0xff]
        %v274 = vld [vmem:[%s227 + $0x90] sm:$0xff]
        %v275 = vld [vmem:[%s227 + $0x98] sm:$0xff]
        %v276 = vld [vmem:[%s227 + $0xa0] sm:$0xff]
        %v277 = vld [vmem:[%s227 + $0xa8] sm:$0xff]
        %v278 = vld [vmem:[%s227 + $0xb0] sm:$0xff]
        %v279 = vld [vmem:[%s227 + $0xb8] sm:$0xff]
        %v280 = vld [vmem:[%s227 + $0xc0] sm:$0xff]
        %v281 = vld [vmem:[%s227 + $0xc8] sm:$0xff]
        %v282 = vld [vmem:[%s227 + $0xd0] sm:$0xff]
        %v283 = vld [vmem:[%s227 + $0xd8] sm:$0xff]
        %v284 = vld [vmem:[%s227 + $0xe0] sm:$0xff]
        %v285 = vld [vmem:[%s227 + $0xe8] sm:$0xff]
        %v286 = vld [vmem:[%s227 + $0xf0] sm:$0xff]
        %v287 = vld [vmem:[%s227 + $0xf8] sm:$0xff]
        %v288 = vld [vmem:[%s2] sm:$0xf]
        %290 = vset.pattern.permute.xlu0 0
        %291 = vperm.xlu0 %290, %v288
        %v292 = vpop.permute.xlu0 %291
        %294 = vmatprep.subr.mxu0 %v287
        %295 = vmatpush1.msra.mxu0 %v286
        %296 = vmatprep.subr.mxu0 %v285
        %297 = vmatpush1.msra.mxu0 %v284
        %298 = vmatprep.subr.mxu0 %v283
        %299 = vmatpush1.msra.mxu0 %v282
        %300 = vmatprep.subr.mxu0 %v281
        %301 = vmatpush1.msra.mxu0 %v280
        %302 = vmatprep.subr.mxu0 %v279
        %303 = vmatpush1.msra.mxu0 %v278
        %304 = vmatprep.subr.mxu0 %v277
        %305 = vmatpush1.msra.mxu0 %v276
        %306 = vmatprep.subr.mxu0 %v275
        %307 = vmatpush1.msra.mxu0 %v274
        %308 = vmatprep.subr.mxu0 %v273
        %309 = vmatpush1.msra.mxu0 %v272
        %310 = vmatprep.subr.mxu0 %v271
        %311 = vmatpush1.msra.mxu0 %v270
        %312 = vmatprep.subr.mxu0 %v269
        %313 = vmatpush1.msra.mxu0 %v268
        %314 = vmatprep.subr.mxu0 %v267
        %315 = vmatpush1.msra.mxu0 %v266
        %316 = vmatprep.subr.mxu0 %v265
        %317 = vmatpush1.msra.mxu0 %v264
        %318 = vmatprep.subr.mxu0 %v263
        %319 = vmatpush1.msra.mxu0 %v262
        %320 = vmatprep.subr.mxu0 %v261
        %321 = vmatpush1.msra.mxu0 %v260
        %322 = vmatprep.subr.mxu0 %v259
        %323 = vmatpush1.msra.mxu0 %v258
        %324 = vmatprep.subr.mxu0 %v257
        %325 = vmatpush1.msra.mxu0 %v256
        %326 = vmatprep.subr.mxu0 0.0
        %327 = vmatpush2.msra.mxu0 0.0
        %328 = vmatprep.subr.mxu0 0.0
        %329 = vmatpush2.msra.mxu0 0.0
        %330 = vmatprep.subr.mxu0 0.0
        %331 = vmatpush2.msra.mxu0 0.0
        %332 = vmatprep.subr.mxu0 0.0
        %333 = vmatpush2.msra.mxu0 0.0
        %334 = vmatprep.subr.mxu0 0.0
        %335 = vmatpush2.msra.mxu0 0.0
        %336 = vmatprep.subr.mxu0 0.0
        %337 = vmatpush2.msra.mxu0 0.0
        %338 = vmatprep.subr.mxu0 0.0
        %339 = vmatpush2.msra.mxu0 0.0
        %340 = vmatprep.subr.mxu0 0.0
        %341 = vmatpush2.msra.mxu0 0.0
        %342 = vmatprep.subr.mxu0 0.0
        %343 = vmatpush2.msra.mxu0 0.0
        %344 = vmatprep.subr.mxu0 0.0
        %345 = vmatpush2.msra.mxu0 0.0
        %346 = vmatprep.subr.mxu0 0.0
        %347 = vmatpush2.msra.mxu0 0.0
        %348 = vmatprep.subr.mxu0 0.0
        %349 = vmatpush2.msra.mxu0 0.0
        %350 = vmatprep.subr.mxu0 0.0
        %351 = vmatpush2.msra.mxu0 0.0
        %352 = vmatprep.subr.mxu0 0.0
        %353 = vmatpush2.msra.mxu0 0.0
        %354 = vmatprep.subr.mxu0 0.0
        %355 = vmatpush2.msra.mxu0 0.0
        %356 = vmatprep.subr.mxu0 0.0
        %357 = vmatpush2.msra.mxu0 0.0
        %358 = vmatprep.mubr.f32.mxu0 0.0
        %359 = vmatmul.mubr.f32.gmra.mxu0 %v255
        %v360 = vpop.f32.mrf.mxu0
        %v361 = vadd.f32 %v292, %v360
        %v362 = vpop.f32.mrf.mxu0
        %v363 = vadd.f32 %v292, %v362
        %364 = vdwg.mxu0
        %v365 = vand.u32 2147483647, %v361
        %v366 = vand.u32 2147483647, %v363
        %v367 = vsub.f32 0.0, %v365
        %v368 = vsub.f32 0.0, %v366
        %v369 = vmul.f32 %v367, 1.442695
        %v370 = vpow.pop %v369
        %v371 = vmul.f32 %v368, 1.442695
        %v372 = vpow.pop %v371
        %v373 = vadd.f32 %v370, 1.0
        %v374 = vadd.f32 %v372, 1.0
        %v375 = vrcp.pop %v373
        %v376 = vmul.f32 1.0, %v375
        %v377 = vrcp.pop %v374
        %v378 = vmul.f32 1.0, %v377
        %vm379 = vcmp.ge.f32.partialorder %v361, 0.0
        %vm380 = vcmp.ge.f32.partialorder %v363, 0.0
        %v381 = vmul.f32 %v370, %v376
        %v382 = vmul.f32 %v372, %v378
        %v383 = vsel %vm379, %v376, %v381
        %v384 = vsel %vm380, %v378, %v382
        %v387 = vcombine.low %v383, %v384
        %389 = vst [vmem:[%s253] sm:$0xff] %v387
        %s390 = smul.u32 2, %s14
        %p391 = scmp.lt.s32.totalorder %s390, 3
        %s392 = scalar_select %p391, %s390, 3
        %s393 = smul.addr %s392, 4
        %s394 = scalar_lea.vmem %s3, %s393
        // Predicated region
        $region56: #{autoencoder_forward.11} parent=50 // pred_check
          %p395 = pneg %p100
        $region57: #{autoencoder_forward.11} parent=50 // pred_check_branch
          %397 = sbr.rel (%p395) target = $region59
        $region58: #{autoencoder_forward.11} parent=50 // pred_region
          %s398 = smul.u32 2, %s14
        $region59: #{autoencoder_forward.11} parent=50 // pred_fallthru
          _
      $region51: #{autoencoder_forward.11} parent=5 // pred_fallthru
        _
      %p399 = scmp.le.s32.totalorder 2, %s9
      // Predicated region
      $region60: #{autoencoder_forward.11} parent=5 // pred_check
        %p400 = pneg %p399
      $region61: #{autoencoder_forward.11} parent=5 // pred_check_branch
        %402 = sbr.rel (%p400) target = $region63
      $region62: #{autoencoder_forward.11} parent=5 // pred_region
        %s403 = ssub.s32 %s9, 2
        // Predicated region
        $region64: #{autoencoder_forward.11} parent=62 // pred_check
          %p404 = pneg %p106
        $region65: #{autoencoder_forward.11} parent=62 // pred_check_branch
          %406 = sbr.rel (%p404) target = $region67
        $region66: #{autoencoder_forward.11} parent=62 // pred_region
          %s407 = smul.u32 2, %s15
          %p408 = scmp.lt.s32.totalorder %s407, 3
          %s409 = scalar_select %p408, %s407, 3
          %s410 = smul.addr %s409, 4
          %s411 = scalar_lea.vmem %s3, %s410
        $region67: #{autoencoder_forward.11} parent=62 // pred_fallthru
          _
      $region63: #{autoencoder_forward.11} parent=5 // pred_fallthru
        _
    $region6: #{autoencoder_forward.11} parent=1 // loop_footer
      %s13 = sadd.s32 1, %s9
    $region7: #{autoencoder_forward.11} parent=1 // loop_footer_branch
      %8 = sbr.rel target = $region3
    $region8: #{autoencoder_forward.11} parent=1 // loop_exit
      _

</llo_original>
